<compile_context>
chip_gen: v7x
topology: tpu7x:2x2x1
jax: 0.10.0
libtpu: 0.0.40
codegen_flags: <defaults>
</compile_context>

<pallas_src>
import functools

import numpy as np
import jax
import jax.numpy as jnp
from jax import lax
from jax.experimental import pallas as pl
from jax.experimental.pallas import tpu as pltpu


def _round_up(x, m):
    return (x + m - 1) // m * m


# --------------------------------------------------------------------------- #
# Pallas kernel 1: grouped GEMM  out[g] = act(X[g] @ W[g|0] + bias[g|0])
# --------------------------------------------------------------------------- #
def _gemm_bias_act_kernel(x_ref, w_ref, b_ref, o_ref, *, act):
    # x: (1, TM, K) bf16 | w: (1, K, TN) bf16 | b: (1, 1, TN) f32
    y = jnp.dot(x_ref[0], w_ref[0], preferred_element_type=jnp.float32) + b_ref[0]
    if act == "relu":
        y = jnp.maximum(y, 0.0)
    o_ref[0] = y.astype(o_ref.dtype)


def gemm_bias_act(x, w, b, *, act="relu", out_dtype=jnp.bfloat16):
    """x: (G, M, K); w: (GW, K, N) bf16 with GW in {1, G}; b: (GW, 1, N) f32.

    Returns (G, M, N) = act(x @ w + b).  K and N must already be multiples of
    128 (weights are pre-padded at parameter-preprocessing time); M is padded
    to a 16-row multiple here (tiny, activation-side only).
    """
    G, M, K = x.shape
    GW, Kw, N = w.shape
    assert Kw == K and GW in (1, G) and K % 128 == 0 and N % 128 == 0
    TN = 256 if N % 256 == 0 else 128      # fill 256x256 MXU; weight loop-invariant
    Mp = _round_up(M, 16)                  # bf16 sublane packing
    TM = Mp if Mp <= 256 else 256
    Mp = _round_up(Mp, TM)

    xq = x.astype(jnp.bfloat16)
    if Mp != M:
        xq = jnp.pad(xq, ((0, 0), (0, Mp - M), (0, 0)))

    w_idx = (lambda g, i, j: (g, 0, j)) if GW > 1 else (lambda g, i, j: (0, 0, j))
    out = pl.pallas_call(
        functools.partial(_gemm_bias_act_kernel, act=act),
        out_shape=jax.ShapeDtypeStruct((G, Mp, N), out_dtype),
        grid=(G, Mp // TM, N // TN),
        in_specs=[
            pl.BlockSpec((1, TM, K), lambda g, i, j: (g, i, 0)),
            pl.BlockSpec((1, K, TN), w_idx),
            pl.BlockSpec((1, 1, TN), w_idx),
        ],
        out_specs=pl.BlockSpec((1, TM, TN), lambda g, i, j: (g, i, j)),
        compiler_params=pltpu.CompilerParams(
            dimension_semantics=("parallel", "parallel", "parallel")),
    )(xq, w, b)
    return out[:, :M] if Mp != M else out


# --------------------------------------------------------------------------- #
# Pallas kernel 2: fused deconv2 (4-phase) + ReLU + 1x1 head + bilinear x2
#                  upsample (align_corners, separable) + sigmoid
# --------------------------------------------------------------------------- #
def _deconv2_head_kernel(x_ref, w2_ref, b2_ref, whw_ref, ra_ref, bc_ref, bh_ref,
                         o_ref, *, hw, n_phase):
    # x  : (1, n_phase*hw, K) bf16  phase-major 2x2 patch rows of one image
    # w2 : (n_phase, K, OCp) bf16   deconv2 phase weights (OC padded to 128)
    # b2 : (1, OCp)          f32    deconv2 bias
    # whw: (OCp, OW2)        bf16   head 1x1 weight broadcast over OW2 columns
    # ra : (n_phase, OH2, hw) bf16  row-upsample (x row-unflatten), per phase
    # bc : (n_phase, hw, OW2) f32   col-upsample selection, per phase
    # bh : (1,) f32 in SMEM         head bias
    # o  : (1, OH2, OW2) f32        sigmoid(heat upsampled)
    oh2, ow2 = o_ref.shape[1], o_ref.shape[2]
    xall = x_ref[0]                                            # (n_phase*hw, K)
    acc = jnp.zeros((oh2, ow2), jnp.float32)
    for g in range(n_phase):
        xg = xall[g * hw:(g + 1) * hw, :]                      # static, tile-aligned
        y = jnp.dot(xg, w2_ref[g], preferred_element_type=jnp.float32) + b2_ref[...]
        y = jnp.maximum(y, 0.0).astype(jnp.bfloat16)           # deconv2 + ReLU
        v = jnp.dot(y, whw_ref[...], preferred_element_type=jnp.float32)  # 1x1 head
        t = (v * bc_ref[g]).astype(jnp.bfloat16)               # column upsample
        acc = acc + jnp.dot(ra_ref[g], t, preferred_element_type=jnp.float32)
    z = acc + bh_ref[0]
    # numerically stable sigmoid; reciprocal routed to the EUP slot
    e = jnp.exp(-jnp.abs(z))
    r = pl.reciprocal(1.0 + e, approx=True)
    o_ref[0] = jnp.where(z >= 0.0, r, 1.0 - r)


def deconv2_head(x, hp):
    """x: (N, H, W, Cp) = deconv1 output (ReLU'd, Cp=128). Returns (N, 4H, 4W) f32."""
    N, H, W, C = x.shape
    HW, OH2, OW2 = H * W, 4 * H, 4 * W
    K = 4 * C
    xp = jnp.pad(x, ((0, 0), (1, 1), (1, 1), (0, 0)))
    pats = []
    for dy in (0, 1):
        for dx in (0, 1):
            win = xp[:, 1 - dy:H + 2 - dy, 1 - dx:W + 2 - dx, :]
            p = _extract_patches(win, 2, 2, stride=1, pad=0)   # (N, H, W, 4C)
            pats.append(p.reshape(N, HW, K))
    X = jnp.stack(pats, axis=1).reshape(N, 4 * HW, K)          # phase-major rows
    OCp = hp["w2"].shape[-1]

    out = pl.pallas_call(
        functools.partial(_deconv2_head_kernel, hw=HW, n_phase=4),
        out_shape=jax.ShapeDtypeStruct((N, OH2, OW2), jnp.float32),
        grid=(N,),
        in_specs=[
            pl.BlockSpec((1, 4 * HW, K), lambda n: (n, 0, 0)),
            pl.BlockSpec((4, K, OCp), lambda n: (0, 0, 0)),
            pl.BlockSpec((1, OCp), lambda n: (0, 0)),
            pl.BlockSpec((OCp, OW2), lambda n: (0, 0)),
            pl.BlockSpec((4, OH2, HW), lambda n: (0, 0, 0)),
            pl.BlockSpec((4, HW, OW2), lambda n: (0, 0, 0)),
            pl.BlockSpec(memory_space=pltpu.MemorySpace.SMEM),
        ],
        out_specs=pl.BlockSpec((1, OH2, OW2), lambda n: (n, 0, 0)),
        compiler_params=pltpu.CompilerParams(dimension_semantics=("parallel",)),
    )(X.astype(jnp.bfloat16), hp["w2"], hp["b2"], hp["whw"], hp["ra"],
      hp["bc"], hp["bh"])
    return out


# --------------------------------------------------------------------------- #
# Wrapper-side activation glue (inside the jit)
# --------------------------------------------------------------------------- #
def _extract_patches(x, kh, kw, stride, pad):
    """x: (N,H,W,C) -> (N, OH, OW, kh*kw*C), tap-major / C innermost."""
    N, H, W, C = x.shape
    if pad:
        x = jnp.pad(x, ((0, 0), (pad, pad), (pad, pad), (0, 0)))
    OH = (H + 2 * pad - kh) // stride + 1
    OW = (W + 2 * pad - kw) // stride + 1
    cols = [x[:, i:i + stride * OH:stride, j:j + stride * OW:stride, :]
            for i in range(kh) for j in range(kw)]
    p = jnp.stack(cols, axis=3)                      # (N, OH, OW, kh*kw, C)
    return p.reshape(N, OH, OW, kh * kw * C)


def conv_layer(x, lp, *, k, stride, pad):
    """Conv2d + folded-BN affine + ReLU via the grouped GEMM kernel."""
    N = x.shape[0]
    pats = _extract_patches(x, k, k, stride, pad)
    _, OH, OW, K = pats.shape
    pats = pats.reshape(N, OH * OW, K)
    Kp = lp["wmat"].shape[1]
    if Kp != K:                                      # only conv1 (49 -> 128)
        pats = jnp.pad(pats, ((0, 0), (0, 0), (0, Kp - K)))
    y = gemm_bias_act(pats, lp["wmat"], lp["bias"], act="relu")
    return y.reshape(N, OH, OW, y.shape[-1])         # padded channels kept


def deconv_layer(x, lp):
    """ConvTranspose2d(k=4, s=2, p=1) + ReLU via 4-phase grouped GEMM.

    out[:, 2p+dy, 2q+dx] is a stride-1 2x2 conv of the input (phase (dy,dx)):
    no zero-dilated rows ever reach the MXU; 4 phases = 4 parallel grid blocks.
    """
    N, H, W, C = x.shape
    xp = jnp.pad(x, ((0, 0), (1, 1), (1, 1), (0, 0)))
    pats = []
    for dy in (0, 1):
        for dx in (0, 1):
            win = xp[:, 1 - dy:H + 2 - dy, 1 - dx:W + 2 - dx, :]
            p = _extract_patches(win, 2, 2, stride=1, pad=0)   # (N, H, W, 4C)
            pats.append(p.reshape(N * H * W, 4 * C))
    X = jnp.stack(pats)                                        # (4, N*H*W, 4C)
    y = gemm_bias_act(X, lp["wmat"], lp["bias"], act="relu")   # (4, N*H*W, OCp)
    OCp = y.shape[-1]
    y = y.reshape(2, 2, N, H, W, OCp)
    y = jnp.transpose(y, (2, 3, 0, 4, 1, 5)).reshape(N, 2 * H, 2 * W, OCp)
    return y


# --------------------------------------------------------------------------- #
# One-time parameter preprocessing (hoisted out of the per-forward path)
# --------------------------------------------------------------------------- #
def _bilinear_matrix_align_corners(out_size, in_size):
    """Interpolation matrix matching nn.UpsamplingBilinear2d (align_corners=True)."""
    A = np.zeros((out_size, in_size), dtype=np.float32)
    if out_size == 1 or in_size == 1:
        A[:, 0] = 1.0
        return A
    for i in range(out_size):
        pos = i * (in_size - 1) / (out_size - 1)
        j0 = int(np.floor(pos))
        j1 = min(j0 + 1, in_size - 1)
        f = pos - j0
        A[i, j0] += 1.0 - f
        A[i, j1] += f
    return A


def preprocess_params(p, in_channels=1, input_hw=(16, 16), eps=1e-5):
    """Build GEMM-ready padded bf16 weights / f32 biases and head constants once."""

    def conv_pack(w_oihw, b, bn, icp, ocp):
        g, be, m, v = bn
        s = g / jnp.sqrt(v + eps)
        OC, IC, KH, KW = w_oihw.shape
        wm = jnp.transpose(w_oihw, (2, 3, 1, 0)) * s            # (KH,KW,IC,OC) * BN scale
        wm = jnp.pad(wm, ((0, 0), (0, 0), (0, icp - IC), (0, ocp - OC)))
        wm = wm.reshape(KH * KW * icp, ocp)
        kp = _round_up(wm.shape[0], 128)
        wm = jnp.pad(wm, ((0, kp - wm.shape[0]), (0, 0)))
        bias = jnp.pad((b - m) * s + be, (0, ocp - OC))
        return dict(wmat=wm.astype(jnp.bfloat16)[None],          # (1, Kp, OCp)
                    bias=bias.astype(jnp.float32)[None, None])   # (1, 1, OCp)

    def deconv_phase_wmats(w_iohw, icp, ocp):
        IC, OC, KH, KW = w_iohw.shape
        assert KH == 4 and KW == 4
        ws = []
        for dy in (0, 1):
            for dx in (0, 1):
                # out[2p+dy, 2q+dx] = sum_{r,s} in[p-1+dy+r, q-1+dx+s] * wt[ky, kx]
                # with ky = 3 - dy - 2r, kx = 3 - dx - 2s.
                sub = w_iohw[:, :, [3 - dy, 1 - dy], :][:, :, :, [3 - dx, 1 - dx]]
                sub = jnp.transpose(sub, (2, 3, 0, 1))           # (2,2,IC,OC)
                sub = jnp.pad(sub, ((0, 0), (0, 0), (0, icp - IC), (0, ocp - OC)))
                ws.append(sub.reshape(4 * icp, ocp))
        return jnp.stack(ws).astype(jnp.bfloat16)                # (4, 4*icp, ocp)

    pp = {}
    pp["conv1"] = conv_pack(p["w1"], p["b1"], p["bn1"], in_channels, 128)
    pp["conv2"] = conv_pack(p["w2"], p["b2"], p["bn2"], 128, 128)
    pp["conv3"] = conv_pack(p["w3"], p["b3"], p["bn3"], 128, 256)
    pp["deconv1"] = dict(
        wmat=deconv_phase_wmats(p["wd1"], 256, 128),
        bias=jnp.broadcast_to(p["bd1"].astype(jnp.float32)[None, None], (4, 1, 128)))

    # ---- fused deconv2 + head constants ---------------------------------- #
    def down(h):
        h1 = (h + 6 - 7) // 2 + 1
        h2 = (h1 + 2 - 3) // 2 + 1
        h3 = (h2 + 2 - 3) // 2 + 1
        return h3
    H, W = 2 * down(input_hw[0]), 2 * down(input_hw[1])   # deconv2 input spatial
    H2, W2 = 2 * H, 2 * W                                  # deconv2 output spatial
    OH2, OW2 = 2 * H2, 2 * W2                              # final heat-map spatial
    Rm = _bilinear_matrix_align_corners(OH2, H2)
    Cm = _bilinear_matrix_align_corners(OW2, W2)
    m = np.arange(H * W)
    # phase (dy,dx): full-res row = 2p+dy, col = 2q+dx ->
    #   out = sum_g RA_g @ ((y_g @ WhW) * BC_g) + bh ;  RA/BC separable, no kron.
    RA = np.stack([Rm[:, dy::2][:, m // W] for dy in (0, 1) for dx in (0, 1)])
    BC = np.stack([Cm[:, dx::2][:, m % W].T for dy in (0, 1) for dx in (0, 1)])
    wh = p["wh"].reshape(-1)
    OCp = 128
    whw = jnp.zeros((OCp, OW2), jnp.float32).at[:wh.shape[0], :].set(
        jnp.broadcast_to(wh[:, None], (wh.shape[0], OW2)))
    pp["head"] = dict(
        w2=deconv_phase_wmats(p["wd2"], 128, OCp),
        b2=jnp.pad(p["bd2"].astype(jnp.float32), (0, OCp - p["bd2"].shape[0]))[None],
        whw=whw.astype(jnp.bfloat16),
        ra=jnp.asarray(RA, jnp.bfloat16),
        bc=jnp.asarray(BC, jnp.float32),
        bh=p["bh"].reshape(1).astype(jnp.float32))
    return pp


# --------------------------------------------------------------------------- #
# Full forward pass (CenterNetBackbone)
# --------------------------------------------------------------------------- #
def centernet_forward(x_nchw, pp):
    x = jnp.transpose(x_nchw, (0, 2, 3, 1)).astype(jnp.bfloat16)   # NHWC bf16
    x = conv_layer(x, pp["conv1"], k=7, stride=2, pad=3)
    x = conv_layer(x, pp["conv2"], k=3, stride=2, pad=1)
    x = conv_layer(x, pp["conv3"], k=3, stride=2, pad=1)
    x = deconv_layer(x, pp["deconv1"])
    heat = deconv2_head(x, pp["head"])                              # (N, OH, OW)
    return heat[:, None]                                            # NCHW (N,1,OH,OW)


# --------------------------------------------------------------------------- #
# Deterministic parameter init (shapes follow the PyTorch __init__)
# --------------------------------------------------------------------------- #
def init_params(key, in_channels=1):
    ks = jax.random.split(key, 16)

    def conv_w(k, oc, ic, kh, kw):
        return jax.random.normal(k, (oc, ic, kh, kw), jnp.float32) / np.sqrt(ic * kh * kw)

    def bn_params(k, c):
        k1, k2, k3, k4 = jax.random.split(k, 4)
        g = 1.0 + 0.1 * jax.random.normal(k1, (c,), jnp.float32)
        be = 0.1 * jax.random.normal(k2, (c,), jnp.float32)
        m = 0.1 * jax.random.normal(k3, (c,), jnp.float32)
        v = 1.0 + 0.1 * jnp.abs(jax.random.normal(k4, (c,), jnp.float32))
        return (g, be, m, v)

    p = {}
    p["w1"] = conv_w(ks[0], 64, in_channels, 7, 7)
    p["b1"] = 0.1 * jax.random.normal(ks[1], (64,), jnp.float32)
    p["bn1"] = bn_params(ks[2], 64)
    p["w2"] = conv_w(ks[3], 128, 64, 3, 3)
    p["b2"] = 0.1 * jax.random.normal(ks[4], (128,), jnp.float32)
    p["bn2"] = bn_params(ks[5], 128)
    p["w3"] = conv_w(ks[6], 256, 128, 3, 3)
    p["b3"] = 0.1 * jax.random.normal(ks[7], (256,), jnp.float32)
    p["bn3"] = bn_params(ks[8], 256)
    # ConvTranspose2d weights have layout (in_channels, out_channels, kh, kw)
    p["wd1"] = jax.random.normal(ks[9], (256, 128, 4, 4), jnp.float32) / np.sqrt(256 * 16)
    p["bd1"] = 0.1 * jax.random.normal(ks[10], (128,), jnp.float32)
    p["wd2"] = jax.random.normal(ks[11], (128, 64, 4, 4), jnp.float32) / np.sqrt(128 * 16)
    p["bd2"] = 0.1 * jax.random.normal(ks[12], (64,), jnp.float32)
    p["wh"] = conv_w(ks[13], 1, 64, 1, 1)
    p["bh"] = 0.1 * jax.random.normal(ks[14], (1,), jnp.float32)
    return p


# --------------------------------------------------------------------------- #
# Pure-JAX reference (XLA convolutions) for a correctness sanity check
# --------------------------------------------------------------------------- #
def reference_forward(x, p):
    eps = 1e-5
    dn = ("NCHW", "OIHW", "NCHW")

    def conv(x, w, b, s, pad):
        y = lax.conv_general_dilated(x, w, (s, s), [(pad, pad)] * 2, dimension_numbers=dn)
        return y + b[None, :, None, None]

    def bn(x, bnp):
        g, be, m, v = bnp
        return ((x - m[None, :, None, None])
                * (g / jnp.sqrt(v + eps))[None, :, None, None]
                + be[None, :, None, None])

    def deconv(x, wt, b, s, pad):
        K = wt.shape[2]
        w = jnp.transpose(wt, (1, 0, 2, 3))[:, :, ::-1, ::-1]
        y = lax.conv_general_dilated(x, w, (1, 1), [(K - 1 - pad, K - 1 - pad)] * 2,
                                     lhs_dilation=(s, s), dimension_numbers=dn)
        return y + b[None, :, None, None]

    x = jax.nn.relu(bn(conv(x, p["w1"], p["b1"], 2, 3), p["bn1"]))
    x = jax.nn.relu(bn(conv(x, p["w2"], p["b2"], 2, 1), p["bn2"]))
    x = jax.nn.relu(bn(conv(x, p["w3"], p["b3"], 2, 1), p["bn3"]))
    x = jax.nn.relu(deconv(x, p["wd1"], p["bd1"], 2, 1))
    x = jax.nn.relu(deconv(x, p["wd2"], p["bd2"], 2, 1))
    h = conv(x, p["wh"], p["bh"], 1, 0)
    N, C, H, W = h.shape
    up = jnp.asarray(np.kron(_bilinear_matrix_align_corners(2 * H, H),
                             _bilinear_matrix_align_corners(2 * W, W)))
    hf = h.reshape(N * C, H * W) @ up.T
    return jax.nn.sigmoid(hf.reshape(N, C, 2 * H, 2 * W))


# --------------------------------------------------------------------------- #
if __name__ == "__main__":
    key = jax.random.PRNGKey(0)
    kp, kx = jax.random.split(key)
    params = init_params(kp, in_channels=1)
    x = jax.random.normal(kx, (2, 1, 16, 16), jnp.float32)  # NCHW, like PyTorch input

    # One-time weight preprocessing (BN fold, pad, bf16 cast, head constants).
    pp = preprocess_params(params, in_channels=1, input_hw=(16, 16))

    fwd = jax.jit(centernet_forward)
    out = jax.block_until_ready(fwd(x, pp))
    assert out.shape == (2, 1, 16, 16), out.shape
    assert bool(jnp.all(jnp.isfinite(out)))

    ref = jax.block_until_ready(jax.jit(reference_forward)(x, params))
    # Tolerance covers bf16 MXU operands (f32 accumulation) + approx reciprocal.
    if not np.allclose(np.asarray(out), np.asarray(ref), atol=4e-2, rtol=4e-2):
        raise AssertionError(
            "mismatch vs reference: max abs diff = %g"
            % float(np.max(np.abs(np.asarray(out) - np.asarray(ref)))))

    print("KERNEL_OK")
</pallas_src>

<mosaic_0001>
module attributes {stable_mosaic.version = 11 : i64} {
  func.func @_gemm_bias_act_kernel(%arg0: i32, %arg1: i32, %arg2: i32, %arg3: memref<1x64x128xbf16, #tpu.memory_space<vmem>>, %arg4: memref<1x128x128xbf16, #tpu.memory_space<vmem>>, %arg5: memref<1x1x128xf32, #tpu.memory_space<vmem>>, %arg6: memref<1x64x128xbf16, #tpu.memory_space<vmem>>) attributes {dimension_semantics = [#tpu.dimension_semantics<parallel>, #tpu.dimension_semantics<parallel>, #tpu.dimension_semantics<parallel>], iteration_bounds = array<i64: 2, 1, 1>, scalar_prefetch = 0 : i64, scratch_operands = 0 : i64, tpu.core_type = #tpu.core_type<tc>, window_params = [{transform_indices = @transform_0, window_bounds = array<i64: 1, 64, 128>}, {transform_indices = @transform_1, window_bounds = array<i64: 1, 128, 128>}, {transform_indices = @transform_2, window_bounds = array<i64: 1, 1, 128>}, {transform_indices = @transform_3, window_bounds = array<i64: 1, 64, 128>}]} {
    %c0 = arith.constant 0 : index
    %c0_0 = arith.constant 0 : index
    %c0_1 = arith.constant 0 : index
    %0 = vector.load %arg3[%c0, %c0_0, %c0_1] : memref<1x64x128xbf16, #tpu.memory_space<vmem>>, vector<1x64x128xbf16>
    %1 = vector.shape_cast %0 : vector<1x64x128xbf16> to vector<64x128xbf16>
    %c0_2 = arith.constant 0 : index
    %c0_3 = arith.constant 0 : index
    %c0_4 = arith.constant 0 : index
    %2 = vector.load %arg4[%c0_2, %c0_3, %c0_4] : memref<1x128x128xbf16, #tpu.memory_space<vmem>>, vector<1x128x128xbf16>
    %3 = vector.shape_cast %2 : vector<1x128x128xbf16> to vector<128x128xbf16>
    %cst = arith.constant dense<0.000000e+00> : vector<64x128xf32>
    %4 = tpu.matmul %1, %3, %cst {dimension_numbers = #tpu.dot_dimension_numbers<[1], [0], [0], [1], [0, 0, 1, 1], [], []>} : vector<64x128xbf16>, vector<128x128xbf16>, vector<64x128xf32> -> vector<64x128xf32>
    %c0_5 = arith.constant 0 : index
    %c0_6 = arith.constant 0 : index
    %c0_7 = arith.constant 0 : index
    %5 = vector.load %arg5[%c0_5, %c0_6, %c0_7] : memref<1x1x128xf32, #tpu.memory_space<vmem>>, vector<1x1x128xf32>
    %6 = vector.shape_cast %5 : vector<1x1x128xf32> to vector<1x128xf32>
    %7 = vector.broadcast %6 : vector<1x128xf32> to vector<64x128xf32>
    %8 = arith.addf %4, %7 : vector<64x128xf32>
    %cst_8 = arith.constant 0.000000e+00 : f32
    %9 = vector.broadcast %cst_8 : f32 to vector<64x128xf32>
    %10 = arith.maximumf %8, %9 : vector<64x128xf32>
    %11 = arith.truncf %10 : vector<64x128xf32> to vector<64x128xbf16>
    %c0_9 = arith.constant 0 : index
    %c0_10 = arith.constant 0 : index
    %c0_11 = arith.constant 0 : index
    %12 = vector.load %arg6[%c0_9, %c0_10, %c0_11] : memref<1x64x128xbf16, #tpu.memory_space<vmem>>, vector<1x64x128xbf16>
    %13 = vector.shape_cast %12 : vector<1x64x128xbf16> to vector<64x128xbf16>
    %14 = vector.shape_cast %11 : vector<64x128xbf16> to vector<1x64x128xbf16>
    tpu.vector_store %arg6[%c0_9, %c0_10, %c0_11], %14 {strides = array<i32>} : memref<1x64x128xbf16, #tpu.memory_space<vmem>>, vector<1x64x128xbf16>,
    return
  }
  func.func @transform_0(%arg0: i32, %arg1: i32, %arg2: i32) -> (i32, i32, i32) {
    %c0_i32 = arith.constant 0 : i32
    %c0_i32_0 = arith.constant 0 : i32
    return %arg0, %arg1, %c0_i32 : i32, i32, i32
  }
  func.func @transform_1(%arg0: i32, %arg1: i32, %arg2: i32) -> (i32, i32, i32) {
    %c0_i32 = arith.constant 0 : i32
    %c0_i32_0 = arith.constant 0 : i32
    %c0_i32_1 = arith.constant 0 : i32
    return %c0_i32, %c0_i32_0, %arg2 : i32, i32, i32
  }
  func.func @transform_2(%arg0: i32, %arg1: i32, %arg2: i32) -> (i32, i32, i32) {
    %c0_i32 = arith.constant 0 : i32
    %c0_i32_0 = arith.constant 0 : i32
    %c0_i32_1 = arith.constant 0 : i32
    return %c0_i32, %c0_i32_0, %arg2 : i32, i32, i32
  }
  func.func @transform_3(%arg0: i32, %arg1: i32, %arg2: i32) -> (i32, i32, i32) {
    %c0_i32 = arith.constant 0 : i32
    return %arg0, %arg1, %arg2 : i32, i32, i32
  }
}

module attributes {stable_mosaic.version = 11 : i64} {
  func.func @_gemm_bias_act_kernel(%arg0: i32, %arg1: i32, %arg2: i32, %arg3: memref<1x16x1152xbf16, #tpu.memory_space<vmem>>, %arg4: memref<1x1152x128xbf16, #tpu.memory_space<vmem>>, %arg5: memref<1x1x128xf32, #tpu.memory_space<vmem>>, %arg6: memref<1x16x128xbf16, #tpu.memory_space<vmem>>) attributes {dimension_semantics = [#tpu.dimension_semantics<parallel>, #tpu.dimension_semantics<parallel>, #tpu.dimension_semantics<parallel>], iteration_bounds = array<i64: 2, 1, 1>, scalar_prefetch = 0 : i64, scratch_operands = 0 : i64, tpu.core_type = #tpu.core_type<tc>, window_params = [{transform_indices = @transform_0, window_bounds = array<i64: 1, 16, 1152>}, {transform_indices = @transform_1, window_bounds = array<i64: 1, 1152, 128>}, {transform_indices = @transform_2, window_bounds = array<i64: 1, 1, 128>}, {transform_indices = @transform_3, window_bounds = array<i64: 1, 16, 128>}]} {
    %c0 = arith.constant 0 : index
    %c0_0 = arith.constant 0 : index
    %c0_1 = arith.constant 0 : index
    %0 = vector.load %arg3[%c0, %c0_0, %c0_1] : memref<1x16x1152xbf16, #tpu.memory_space<vmem>>, vector<1x16x1152xbf16>
    %1 = vector.shape_cast %0 : vector<1x16x1152xbf16> to vector<16x1152xbf16>
    %c0_2 = arith.constant 0 : index
    %c0_3 = arith.constant 0 : index
    %c0_4 = arith.constant 0 : index
    %2 = vector.load %arg4[%c0_2, %c0_3, %c0_4] : memref<1x1152x128xbf16, #tpu.memory_space<vmem>>, vector<1x1152x128xbf16>
    %3 = vector.shape_cast %2 : vector<1x1152x128xbf16> to vector<1152x128xbf16>
    %cst = arith.constant dense<0.000000e+00> : vector<16x128xf32>
    %4 = tpu.matmul %1, %3, %cst {dimension_numbers = #tpu.dot_dimension_numbers<[1], [0], [0], [1], [0, 0, 1, 1], [], []>} : vector<16x1152xbf16>, vector<1152x128xbf16>, vector<16x128xf32> -> vector<16x128xf32>
    %c0_5 = arith.constant 0 : index
    %c0_6 = arith.constant 0 : index
    %c0_7 = arith.constant 0 : index
    %5 = vector.load %arg5[%c0_5, %c0_6, %c0_7] : memref<1x1x128xf32, #tpu.memory_space<vmem>>, vector<1x1x128xf32>
    %6 = vector.shape_cast %5 : vector<1x1x128xf32> to vector<1x128xf32>
    %7 = vector.broadcast %6 : vector<1x128xf32> to vector<16x128xf32>
    %8 = arith.addf %4, %7 : vector<16x128xf32>
    %cst_8 = arith.constant 0.000000e+00 : f32
    %9 = vector.broadcast %cst_8 : f32 to vector<16x128xf32>
    %10 = arith.maximumf %8, %9 : vector<16x128xf32>
    %11 = arith.truncf %10 : vector<16x128xf32> to vector<16x128xbf16>
    %c0_9 = arith.constant 0 : index
    %c0_10 = arith.constant 0 : index
    %c0_11 = arith.constant 0 : index
    %12 = vector.load %arg6[%c0_9, %c0_10, %c0_11] : memref<1x16x128xbf16, #tpu.memory_space<vmem>>, vector<1x16x128xbf16>
    %13 = vector.shape_cast %12 : vector<1x16x128xbf16> to vector<16x128xbf16>
    %14 = vector.shape_cast %11 : vector<16x128xbf16> to vector<1x16x128xbf16>
    tpu.vector_store %arg6[%c0_9, %c0_10, %c0_11], %14 {strides = array<i32>} : memref<1x16x128xbf16, #tpu.memory_space<vmem>>, vector<1x16x128xbf16>,
    return
  }
  func.func @transform_0(%arg0: i32, %arg1: i32, %arg2: i32) -> (i32, i32, i32) {
    %c0_i32 = arith.constant 0 : i32
    %c0_i32_0 = arith.constant 0 : i32
    return %arg0, %arg1, %c0_i32 : i32, i32, i32
  }
  func.func @transform_1(%arg0: i32, %arg1: i32, %arg2: i32) -> (i32, i32, i32) {
    %c0_i32 = arith.constant 0 : i32
    %c0_i32_0 = arith.constant 0 : i32
    %c0_i32_1 = arith.constant 0 : i32
    return %c0_i32, %c0_i32_0, %arg2 : i32, i32, i32
  }
  func.func @transform_2(%arg0: i32, %arg1: i32, %arg2: i32) -> (i32, i32, i32) {
    %c0_i32 = arith.constant 0 : i32
    %c0_i32_0 = arith.constant 0 : i32
    %c0_i32_1 = arith.constant 0 : i32
    return %c0_i32, %c0_i32_0, %arg2 : i32, i32, i32
  }
  func.func @transform_3(%arg0: i32, %arg1: i32, %arg2: i32) -> (i32, i32, i32) {
    %c0_i32 = arith.constant 0 : i32
    return %arg0, %arg1, %arg2 : i32, i32, i32
  }
}

module attributes {stable_mosaic.version = 11 : i64} {
  func.func @_gemm_bias_act_kernel(%arg0: i32, %arg1: i32, %arg2: i32, %arg3: memref<1x16x1152xbf16, #tpu.memory_space<vmem>>, %arg4: memref<1x1152x256xbf16, #tpu.memory_space<vmem>>, %arg5: memref<1x1x256xf32, #tpu.memory_space<vmem>>, %arg6: memref<1x16x256xbf16, #tpu.memory_space<vmem>>) attributes {dimension_semantics = [#tpu.dimension_semantics<parallel>, #tpu.dimension_semantics<parallel>, #tpu.dimension_semantics<parallel>], iteration_bounds = array<i64: 2, 1, 1>, scalar_prefetch = 0 : i64, scratch_operands = 0 : i64, tpu.core_type = #tpu.core_type<tc>, window_params = [{transform_indices = @transform_0, window_bounds = array<i64: 1, 16, 1152>}, {transform_indices = @transform_1, window_bounds = array<i64: 1, 1152, 256>}, {transform_indices = @transform_2, window_bounds = array<i64: 1, 1, 256>}, {transform_indices = @transform_3, window_bounds = array<i64: 1, 16, 256>}]} {
    %c0 = arith.constant 0 : index
    %c0_0 = arith.constant 0 : index
    %c0_1 = arith.constant 0 : index
    %0 = vector.load %arg3[%c0, %c0_0, %c0_1] : memref<1x16x1152xbf16, #tpu.memory_space<vmem>>, vector<1x16x1152xbf16>
    %1 = vector.shape_cast %0 : vector<1x16x1152xbf16> to vector<16x1152xbf16>
    %c0_2 = arith.constant 0 : index
    %c0_3 = arith.constant 0 : index
    %c0_4 = arith.constant 0 : index
    %2 = vector.load %arg4[%c0_2, %c0_3, %c0_4] : memref<1x1152x256xbf16, #tpu.memory_space<vmem>>, vector<1x1152x256xbf16>
    %3 = vector.shape_cast %2 : vector<1x1152x256xbf16> to vector<1152x256xbf16>
    %cst = arith.constant dense<0.000000e+00> : vector<16x256xf32>
    %4 = tpu.matmul %1, %3, %cst {dimension_numbers = #tpu.dot_dimension_numbers<[1], [0], [0], [1], [0, 0, 1, 1], [], []>} : vector<16x1152xbf16>, vector<1152x256xbf16>, vector<16x256xf32> -> vector<16x256xf32>
    %c0_5 = arith.constant 0 : index
    %c0_6 = arith.constant 0 : index
    %c0_7 = arith.constant 0 : index
    %5 = vector.load %arg5[%c0_5, %c0_6, %c0_7] : memref<1x1x256xf32, #tpu.memory_space<vmem>>, vector<1x1x256xf32>
    %6 = vector.shape_cast %5 : vector<1x1x256xf32> to vector<1x256xf32>
    %7 = vector.broadcast %6 : vector<1x256xf32> to vector<16x256xf32>
    %8 = arith.addf %4, %7 : vector<16x256xf32>
    %cst_8 = arith.constant 0.000000e+00 : f32
    %9 = vector.broadcast %cst_8 : f32 to vector<16x256xf32>
    %10 = arith.maximumf %8, %9 : vector<16x256xf32>
    %11 = arith.truncf %10 : vector<16x256xf32> to vector<16x256xbf16>
    %c0_9 = arith.constant 0 : index
    %c0_10 = arith.constant 0 : index
    %c0_11 = arith.constant 0 : index
    %12 = vector.load %arg6[%c0_9, %c0_10, %c0_11] : memref<1x16x256xbf16, #tpu.memory_space<vmem>>, vector<1x16x256xbf16>
    %13 = vector.shape_cast %12 : vector<1x16x256xbf16> to vector<16x256xbf16>
    %14 = vector.shape_cast %11 : vector<16x256xbf16> to vector<1x16x256xbf16>
    tpu.vector_store %arg6[%c0_9, %c0_10, %c0_11], %14 {strides = array<i32>} : memref<1x16x256xbf16, #tpu.memory_space<vmem>>, vector<1x16x256xbf16>,
    return
  }
  func.func @transform_0(%arg0: i32, %arg1: i32, %arg2: i32) -> (i32, i32, i32) {
    %c0_i32 = arith.constant 0 : i32
    %c0_i32_0 = arith.constant 0 : i32
    return %arg0, %arg1, %c0_i32 : i32, i32, i32
  }
  func.func @transform_1(%arg0: i32, %arg1: i32, %arg2: i32) -> (i32, i32, i32) {
    %c0_i32 = arith.constant 0 : i32
    %c0_i32_0 = arith.constant 0 : i32
    %c0_i32_1 = arith.constant 0 : i32
    return %c0_i32, %c0_i32_0, %arg2 : i32, i32, i32
  }
  func.func @transform_2(%arg0: i32, %arg1: i32, %arg2: i32) -> (i32, i32, i32) {
    %c0_i32 = arith.constant 0 : i32
    %c0_i32_0 = arith.constant 0 : i32
    %c0_i32_1 = arith.constant 0 : i32
    return %c0_i32, %c0_i32_0, %arg2 : i32, i32, i32
  }
  func.func @transform_3(%arg0: i32, %arg1: i32, %arg2: i32) -> (i32, i32, i32) {
    %c0_i32 = arith.constant 0 : i32
    return %arg0, %arg1, %arg2 : i32, i32, i32
  }
}

module attributes {stable_mosaic.version = 11 : i64} {
  func.func @_gemm_bias_act_kernel(%arg0: i32, %arg1: i32, %arg2: i32, %arg3: memref<1x16x1024xbf16, #tpu.memory_space<vmem>>, %arg4: memref<1x1024x128xbf16, #tpu.memory_space<vmem>>, %arg5: memref<1x1x128xf32, #tpu.memory_space<vmem>>, %arg6: memref<1x16x128xbf16, #tpu.memory_space<vmem>>) attributes {dimension_semantics = [#tpu.dimension_semantics<parallel>, #tpu.dimension_semantics<parallel>, #tpu.dimension_semantics<parallel>], iteration_bounds = array<i64: 4, 1, 1>, scalar_prefetch = 0 : i64, scratch_operands = 0 : i64, tpu.core_type = #tpu.core_type<tc>, window_params = [{transform_indices = @transform_0, window_bounds = array<i64: 1, 16, 1024>}, {transform_indices = @transform_1, window_bounds = array<i64: 1, 1024, 128>}, {transform_indices = @transform_2, window_bounds = array<i64: 1, 1, 128>}, {transform_indices = @transform_3, window_bounds = array<i64: 1, 16, 128>}]} {
    %c0 = arith.constant 0 : index
    %c0_0 = arith.constant 0 : index
    %c0_1 = arith.constant 0 : index
    %0 = vector.load %arg3[%c0, %c0_0, %c0_1] : memref<1x16x1024xbf16, #tpu.memory_space<vmem>>, vector<1x16x1024xbf16>
    %1 = vector.shape_cast %0 : vector<1x16x1024xbf16> to vector<16x1024xbf16>
    %c0_2 = arith.constant 0 : index
    %c0_3 = arith.constant 0 : index
    %c0_4 = arith.constant 0 : index
    %2 = vector.load %arg4[%c0_2, %c0_3, %c0_4] : memref<1x1024x128xbf16, #tpu.memory_space<vmem>>, vector<1x1024x128xbf16>
    %3 = vector.shape_cast %2 : vector<1x1024x128xbf16> to vector<1024x128xbf16>
    %cst = arith.constant dense<0.000000e+00> : vector<16x128xf32>
    %4 = tpu.matmul %1, %3, %cst {dimension_numbers = #tpu.dot_dimension_numbers<[1], [0], [0], [1], [0, 0, 1, 1], [], []>} : vector<16x1024xbf16>, vector<1024x128xbf16>, vector<16x128xf32> -> vector<16x128xf32>
    %c0_5 = arith.constant 0 : index
    %c0_6 = arith.constant 0 : index
    %c0_7 = arith.constant 0 : index
    %5 = vector.load %arg5[%c0_5, %c0_6, %c0_7] : memref<1x1x128xf32, #tpu.memory_space<vmem>>, vector<1x1x128xf32>
    %6 = vector.shape_cast %5 : vector<1x1x128xf32> to vector<1x128xf32>
    %7 = vector.broadcast %6 : vector<1x128xf32> to vector<16x128xf32>
    %8 = arith.addf %4, %7 : vector<16x128xf32>
    %cst_8 = arith.constant 0.000000e+00 : f32
    %9 = vector.broadcast %cst_8 : f32 to vector<16x128xf32>
    %10 = arith.maximumf %8, %9 : vector<16x128xf32>
    %11 = arith.truncf %10 : vector<16x128xf32> to vector<16x128xbf16>
    %c0_9 = arith.constant 0 : index
    %c0_10 = arith.constant 0 : index
    %c0_11 = arith.constant 0 : index
    %12 = vector.load %arg6[%c0_9, %c0_10, %c0_11] : memref<1x16x128xbf16, #tpu.memory_space<vmem>>, vector<1x16x128xbf16>
    %13 = vector.shape_cast %12 : vector<1x16x128xbf16> to vector<16x128xbf16>
    %14 = vector.shape_cast %11 : vector<16x128xbf16> to vector<1x16x128xbf16>
    tpu.vector_store %arg6[%c0_9, %c0_10, %c0_11], %14 {strides = array<i32>} : memref<1x16x128xbf16, #tpu.memory_space<vmem>>, vector<1x16x128xbf16>,
    return
  }
  func.func @transform_0(%arg0: i32, %arg1: i32, %arg2: i32) -> (i32, i32, i32) {
    %c0_i32 = arith.constant 0 : i32
    %c0_i32_0 = arith.constant 0 : i32
    return %arg0, %arg1, %c0_i32 : i32, i32, i32
  }
  func.func @transform_1(%arg0: i32, %arg1: i32, %arg2: i32) -> (i32, i32, i32) {
    %c0_i32 = arith.constant 0 : i32
    %c0_i32_0 = arith.constant 0 : i32
    return %arg0, %c0_i32, %arg2 : i32, i32, i32
  }
  func.func @transform_2(%arg0: i32, %arg1: i32, %arg2: i32) -> (i32, i32, i32) {
    %c0_i32 = arith.constant 0 : i32
    %c0_i32_0 = arith.constant 0 : i32
    return %arg0, %c0_i32, %arg2 : i32, i32, i32
  }
  func.func @transform_3(%arg0: i32, %arg1: i32, %arg2: i32) -> (i32, i32, i32) {
    %c0_i32 = arith.constant 0 : i32
    return %arg0, %arg1, %arg2 : i32, i32, i32
  }
}

module attributes {stable_mosaic.version = 11 : i64} {
  func.func @_deconv2_head_kernel(%arg0: i32, %arg1: memref<1x64x512xbf16, #tpu.memory_space<vmem>>, %arg2: memref<4x512x128xbf16, #tpu.memory_space<vmem>>, %arg3: memref<1x128xf32, #tpu.memory_space<vmem>>, %arg4: memref<128x16xbf16, #tpu.memory_space<vmem>>, %arg5: memref<4x16x16xbf16, #tpu.memory_space<vmem>>, %arg6: memref<4x16x16xf32, #tpu.memory_space<vmem>>, %arg7: memref<1xf32, #tpu.memory_space<smem>>, %arg8: memref<1x16x16xf32, #tpu.memory_space<vmem>>) attributes {dimension_semantics = [#tpu.dimension_semantics<parallel>], iteration_bounds = array<i64: 2>, scalar_prefetch = 0 : i64, scratch_operands = 0 : i64, tpu.core_type = #tpu.core_type<tc>, window_params = [{transform_indices = @transform_0, window_bounds = array<i64: 1, 64, 512>}, {pipeline_mode = #tpu.pipeline_mode<synchronous>, transform_indices = @transform_1, window_bounds = array<i64: 4, 512, 128>}, {pipeline_mode = #tpu.pipeline_mode<synchronous>, transform_indices = @transform_2, window_bounds = array<i64: 1, 128>}, {pipeline_mode = #tpu.pipeline_mode<synchronous>, transform_indices = @transform_3, window_bounds = array<i64: 128, 16>}, {pipeline_mode = #tpu.pipeline_mode<synchronous>, transform_indices = @transform_4, window_bounds = array<i64: 4, 16, 16>}, {pipeline_mode = #tpu.pipeline_mode<synchronous>, transform_indices = @transform_5, window_bounds = array<i64: 4, 16, 16>}, {transform_indices = @transform_6, window_bounds = array<i64: 1>}, {transform_indices = @transform_7, window_bounds = array<i64: 1, 16, 16>}]} {
    %c0 = arith.constant 0 : index
    %c0_0 = arith.constant 0 : index
    %c0_1 = arith.constant 0 : index
    %0 = vector.load %arg1[%c0, %c0_0, %c0_1] : memref<1x64x512xbf16, #tpu.memory_space<vmem>>, vector<1x64x512xbf16>
    %1 = vector.shape_cast %0 : vector<1x64x512xbf16> to vector<64x512xbf16>
    %cst = arith.constant 0.000000e+00 : f32
    %2 = vector.broadcast %cst : f32 to vector<16x16xf32>
    %3 = vector.extract_strided_slice %1 {offsets = [0, 0], sizes = [16, 512], strides = [1, 1]} : vector<64x512xbf16> to vector<16x512xbf16>
    %c0_2 = arith.constant 0 : index
    %c0_3 = arith.constant 0 : index
    %c0_4 = arith.constant 0 : index
    %4 = vector.load %arg2[%c0_2, %c0_3, %c0_4] : memref<4x512x128xbf16, #tpu.memory_space<vmem>>, vector<1x512x128xbf16>
    %5 = vector.shape_cast %4 : vector<1x512x128xbf16> to vector<512x128xbf16>
    %cst_5 = arith.constant dense<0.000000e+00> : vector<16x128xf32>
    %6 = tpu.matmul %3, %5, %cst_5 {dimension_numbers = #tpu.dot_dimension_numbers<[1], [0], [0], [1], [0, 0, 1, 1], [], []>} : vector<16x512xbf16>, vector<512x128xbf16>, vector<16x128xf32> -> vector<16x128xf32>
    %c0_6 = arith.constant 0 : index
    %c0_7 = arith.constant 0 : index
    %7 = vector.load %arg3[%c0_6, %c0_7] : memref<1x128xf32, #tpu.memory_space<vmem>>, vector<1x128xf32>
    %8 = vector.broadcast %7 : vector<1x128xf32> to vector<16x128xf32>
    %9 = arith.addf %6, %8 : vector<16x128xf32>
    %cst_8 = arith.constant 0.000000e+00 : f32
    %10 = vector.broadcast %cst_8 : f32 to vector<16x128xf32>
    %11 = arith.maximumf %9, %10 : vector<16x128xf32>
    %12 = arith.truncf %11 : vector<16x128xf32> to vector<16x128xbf16>
    %c0_9 = arith.constant 0 : index
    %c0_10 = arith.constant 0 : index
    %13 = vector.load %arg4[%c0_9, %c0_10] : memref<128x16xbf16, #tpu.memory_space<vmem>>, vector<128x16xbf16>
    %cst_11 = arith.constant dense<0.000000e+00> : vector<16x16xf32>
    %14 = tpu.matmul %12, %13, %cst_11 {dimension_numbers = #tpu.dot_dimension_numbers<[1], [0], [0], [1], [0, 0, 1, 1], [], []>} : vector<16x128xbf16>, vector<128x16xbf16>, vector<16x16xf32> -> vector<16x16xf32>
    %c0_12 = arith.constant 0 : index
    %c0_13 = arith.constant 0 : index
    %c0_14 = arith.constant 0 : index
    %15 = vector.load %arg6[%c0_12, %c0_13, %c0_14] : memref<4x16x16xf32, #tpu.memory_space<vmem>>, vector<1x16x16xf32>
    %16 = vector.shape_cast %15 : vector<1x16x16xf32> to vector<16x16xf32>
    %17 = arith.mulf %14, %16 : vector<16x16xf32>
    %18 = arith.truncf %17 : vector<16x16xf32> to vector<16x16xbf16>
    %c0_15 = arith.constant 0 : index
    %c0_16 = arith.constant 0 : index
    %c0_17 = arith.constant 0 : index
    %19 = vector.load %arg5[%c0_15, %c0_16, %c0_17] : memref<4x16x16xbf16, #tpu.memory_space<vmem>>, vector<1x16x16xbf16>
    %20 = vector.shape_cast %19 : vector<1x16x16xbf16> to vector<16x16xbf16>
    %cst_18 = arith.constant dense<0.000000e+00> : vector<16x16xf32>
    %21 = tpu.matmul %20, %18, %cst_18 {dimension_numbers = #tpu.dot_dimension_numbers<[1], [0], [0], [1], [0, 0, 1, 1], [], []>} : vector<16x16xbf16>, vector<16x16xbf16>, vector<16x16xf32> -> vector<16x16xf32>
    %22 = arith.addf %2, %21 : vector<16x16xf32>
    %23 = vector.extract_strided_slice %1 {offsets = [16, 0], sizes = [16, 512], strides = [1, 1]} : vector<64x512xbf16> to vector<16x512xbf16>
    %c1 = arith.constant 1 : index
    %c0_19 = arith.constant 0 : index
    %c0_20 = arith.constant 0 : index
    %24 = vector.load %arg2[%c1, %c0_19, %c0_20] : memref<4x512x128xbf16, #tpu.memory_space<vmem>>, vector<1x512x128xbf16>
    %25 = vector.shape_cast %24 : vector<1x512x128xbf16> to vector<512x128xbf16>
    %cst_21 = arith.constant dense<0.000000e+00> : vector<16x128xf32>
    %26 = tpu.matmul %23, %25, %cst_21 {dimension_numbers = #tpu.dot_dimension_numbers<[1], [0], [0], [1], [0, 0, 1, 1], [], []>} : vector<16x512xbf16>, vector<512x128xbf16>, vector<16x128xf32> -> vector<16x128xf32>
    %c0_22 = arith.constant 0 : index
    %c0_23 = arith.constant 0 : index
    %27 = vector.load %arg3[%c0_22, %c0_23] : memref<1x128xf32, #tpu.memory_space<vmem>>, vector<1x128xf32>
    %28 = vector.broadcast %27 : vector<1x128xf32> to vector<16x128xf32>
    %29 = arith.addf %26, %28 : vector<16x128xf32>
    %cst_24 = arith.constant 0.000000e+00 : f32
    %30 = vector.broadcast %cst_24 : f32 to vector<16x128xf32>
    %31 = arith.maximumf %29, %30 : vector<16x128xf32>
    %32 = arith.truncf %31 : vector<16x128xf32> to vector<16x128xbf16>
    %c0_25 = arith.constant 0 : index
    %c0_26 = arith.constant 0 : index
    %33 = vector.load %arg4[%c0_25, %c0_26] : memref<128x16xbf16, #tpu.memory_space<vmem>>, vector<128x16xbf16>
    %cst_27 = arith.constant dense<0.000000e+00> : vector<16x16xf32>
    %34 = tpu.matmul %32, %33, %cst_27 {dimension_numbers = #tpu.dot_dimension_numbers<[1], [0], [0], [1], [0, 0, 1, 1], [], []>} : vector<16x128xbf16>, vector<128x16xbf16>, vector<16x16xf32> -> vector<16x16xf32>
    %c1_28 = arith.constant 1 : index
    %c0_29 = arith.constant 0 : index
    %c0_30 = arith.constant 0 : index
    %35 = vector.load %arg6[%c1_28, %c0_29, %c0_30] : memref<4x16x16xf32, #tpu.memory_space<vmem>>, vector<1x16x16xf32>
    %36 = vector.shape_cast %35 : vector<1x16x16xf32> to vector<16x16xf32>
    %37 = arith.mulf %34, %36 : vector<16x16xf32>
    %38 = arith.truncf %37 : vector<16x16xf32> to vector<16x16xbf16>
    %c1_31 = arith.constant 1 : index
    %c0_32 = arith.constant 0 : index
    %c0_33 = arith.constant 0 : index
    %39 = vector.load %arg5[%c1_31, %c0_32, %c0_33] : memref<4x16x16xbf16, #tpu.memory_space<vmem>>, vector<1x16x16xbf16>
    %40 = vector.shape_cast %39 : vector<1x16x16xbf16> to vector<16x16xbf16>
    %cst_34 = arith.constant dense<0.000000e+00> : vector<16x16xf32>
    %41 = tpu.matmul %40, %38, %cst_34 {dimension_numbers = #tpu.dot_dimension_numbers<[1], [0], [0], [1], [0, 0, 1, 1], [], []>} : vector<16x16xbf16>, vector<16x16xbf16>, vector<16x16xf32> -> vector<16x16xf32>
    %42 = arith.addf %22, %41 : vector<16x16xf32>
    %43 = vector.extract_strided_slice %1 {offsets = [32, 0], sizes = [16, 512], strides = [1, 1]} : vector<64x512xbf16> to vector<16x512xbf16>
    %c2 = arith.constant 2 : index
    %c0_35 = arith.constant 0 : index
    %c0_36 = arith.constant 0 : index
    %44 = vector.load %arg2[%c2, %c0_35, %c0_36] : memref<4x512x128xbf16, #tpu.memory_space<vmem>>, vector<1x512x128xbf16>
    %45 = vector.shape_cast %44 : vector<1x512x128xbf16> to vector<512x128xbf16>
    %cst_37 = arith.constant dense<0.000000e+00> : vector<16x128xf32>
    %46 = tpu.matmul %43, %45, %cst_37 {dimension_numbers = #tpu.dot_dimension_numbers<[1], [0], [0], [1], [0, 0, 1, 1], [], []>} : vector<16x512xbf16>, vector<512x128xbf16>, vector<16x128xf32> -> vector<16x128xf32>
    %c0_38 = arith.constant 0 : index
    %c0_39 = arith.constant 0 : index
    %47 = vector.load %arg3[%c0_38, %c0_39] : memref<1x128xf32, #tpu.memory_space<vmem>>, vector<1x128xf32>
    %48 = vector.broadcast %47 : vector<1x128xf32> to vector<16x128xf32>
    %49 = arith.addf %46, %48 : vector<16x128xf32>
    %cst_40 = arith.constant 0.000000e+00 : f32
    %50 = vector.broadcast %cst_40 : f32 to vector<16x128xf32>
    %51 = arith.maximumf %49, %50 : vector<16x128xf32>
    %52 = arith.truncf %51 : vector<16x128xf32> to vector<16x128xbf16>
    %c0_41 = arith.constant 0 : index
    %c0_42 = arith.constant 0 : index
    %53 = vector.load %arg4[%c0_41, %c0_42] : memref<128x16xbf16, #tpu.memory_space<vmem>>, vector<128x16xbf16>
    %cst_43 = arith.constant dense<0.000000e+00> : vector<16x16xf32>
    %54 = tpu.matmul %52, %53, %cst_43 {dimension_numbers = #tpu.dot_dimension_numbers<[1], [0], [0], [1], [0, 0, 1, 1], [], []>} : vector<16x128xbf16>, vector<128x16xbf16>, vector<16x16xf32> -> vector<16x16xf32>
    %c2_44 = arith.constant 2 : index
    %c0_45 = arith.constant 0 : index
    %c0_46 = arith.constant 0 : index
    %55 = vector.load %arg6[%c2_44, %c0_45, %c0_46] : memref<4x16x16xf32, #tpu.memory_space<vmem>>, vector<1x16x16xf32>
    %56 = vector.shape_cast %55 : vector<1x16x16xf32> to vector<16x16xf32>
    %57 = arith.mulf %54, %56 : vector<16x16xf32>
    %58 = arith.truncf %57 : vector<16x16xf32> to vector<16x16xbf16>
    %c2_47 = arith.constant 2 : index
    %c0_48 = arith.constant 0 : index
    %c0_49 = arith.constant 0 : index
    %59 = vector.load %arg5[%c2_47, %c0_48, %c0_49] : memref<4x16x16xbf16, #tpu.memory_space<vmem>>, vector<1x16x16xbf16>
    %60 = vector.shape_cast %59 : vector<1x16x16xbf16> to vector<16x16xbf16>
    %cst_50 = arith.constant dense<0.000000e+00> : vector<16x16xf32>
    %61 = tpu.matmul %60, %58, %cst_50 {dimension_numbers = #tpu.dot_dimension_numbers<[1], [0], [0], [1], [0, 0, 1, 1], [], []>} : vector<16x16xbf16>, vector<16x16xbf16>, vector<16x16xf32> -> vector<16x16xf32>
    %62 = arith.addf %42, %61 : vector<16x16xf32>
    %63 = vector.extract_strided_slice %1 {offsets = [48, 0], sizes = [16, 512], strides = [1, 1]} : vector<64x512xbf16> to vector<16x512xbf16>
    %c3 = arith.constant 3 : index
    %c0_51 = arith.constant 0 : index
    %c0_52 = arith.constant 0 : index
    %64 = vector.load %arg2[%c3, %c0_51, %c0_52] : memref<4x512x128xbf16, #tpu.memory_space<vmem>>, vector<1x512x128xbf16>
    %65 = vector.shape_cast %64 : vector<1x512x128xbf16> to vector<512x128xbf16>
    %cst_53 = arith.constant dense<0.000000e+00> : vector<16x128xf32>
    %66 = tpu.matmul %63, %65, %cst_53 {dimension_numbers = #tpu.dot_dimension_numbers<[1], [0], [0], [1], [0, 0, 1, 1], [], []>} : vector<16x512xbf16>, vector<512x128xbf16>, vector<16x128xf32> -> vector<16x128xf32>
    %c0_54 = arith.constant 0 : index
    %c0_55 = arith.constant 0 : index
    %67 = vector.load %arg3[%c0_54, %c0_55] : memref<1x128xf32, #tpu.memory_space<vmem>>, vector<1x128xf32>
    %68 = vector.broadcast %67 : vector<1x128xf32> to vector<16x128xf32>
    %69 = arith.addf %66, %68 : vector<16x128xf32>
    %cst_56 = arith.constant 0.000000e+00 : f32
    %70 = vector.broadcast %cst_56 : f32 to vector<16x128xf32>
    %71 = arith.maximumf %69, %70 : vector<16x128xf32>
    %72 = arith.truncf %71 : vector<16x128xf32> to vector<16x128xbf16>
    %c0_57 = arith.constant 0 : index
    %c0_58 = arith.constant 0 : index
    %73 = vector.load %arg4[%c0_57, %c0_58] : memref<128x16xbf16, #tpu.memory_space<vmem>>, vector<128x16xbf16>
    %cst_59 = arith.constant dense<0.000000e+00> : vector<16x16xf32>
    %74 = tpu.matmul %72, %73, %cst_59 {dimension_numbers = #tpu.dot_dimension_numbers<[1], [0], [0], [1], [0, 0, 1, 1], [], []>} : vector<16x128xbf16>, vector<128x16xbf16>, vector<16x16xf32> -> vector<16x16xf32>
    %c3_60 = arith.constant 3 : index
    %c0_61 = arith.constant 0 : index
    %c0_62 = arith.constant 0 : index
    %75 = vector.load %arg6[%c3_60, %c0_61, %c0_62] : memref<4x16x16xf32, #tpu.memory_space<vmem>>, vector<1x16x16xf32>
    %76 = vector.shape_cast %75 : vector<1x16x16xf32> to vector<16x16xf32>
    %77 = arith.mulf %74, %76 : vector<16x16xf32>
    %78 = arith.truncf %77 : vector<16x16xf32> to vector<16x16xbf16>
    %c3_63 = arith.constant 3 : index
    %c0_64 = arith.constant 0 : index
    %c0_65 = arith.constant 0 : index
    %79 = vector.load %arg5[%c3_63, %c0_64, %c0_65] : memref<4x16x16xbf16, #tpu.memory_space<vmem>>, vector<1x16x16xbf16>
    %80 = vector.shape_cast %79 : vector<1x16x16xbf16> to vector<16x16xbf16>
    %cst_66 = arith.constant dense<0.000000e+00> : vector<16x16xf32>
    %81 = tpu.matmul %80, %78, %cst_66 {dimension_numbers = #tpu.dot_dimension_numbers<[1], [0], [0], [1], [0, 0, 1, 1], [], []>} : vector<16x16xbf16>, vector<16x16xbf16>, vector<16x16xf32> -> vector<16x16xf32>
    %82 = arith.addf %62, %81 : vector<16x16xf32>
    %c0_67 = arith.constant 0 : index
    %83 = memref.load %arg7[%c0_67] : memref<1xf32, #tpu.memory_space<smem>>
    %84 = vector.broadcast %83 : f32 to vector<16x16xf32>
    %85 = arith.addf %82, %84 : vector<16x16xf32>
    %86 = math.absf %85 : vector<16x16xf32>
    %cst_68 = arith.constant 0.000000e+00 : f32
    %87 = vector.broadcast %cst_68 : f32 to vector<16x16xf32>
    %88 = arith.subf %87, %86 : vector<16x16xf32>
    %89 = math.exp %88 : vector<16x16xf32>
    %cst_69 = arith.constant 1.000000e+00 : f32
    %90 = vector.broadcast %cst_69 : f32 to vector<16x16xf32>
    %91 = arith.addf %90, %89 : vector<16x16xf32>
    %92 = tpu.reciprocal %91 {approx = true} : vector<16x16xf32> -> vector<16x16xf32>
    %cst_70 = arith.constant 0.000000e+00 : f32
    %93 = vector.broadcast %cst_70 : f32 to vector<16x16xf32>
    %94 = arith.cmpf oge, %85, %93 : vector<16x16xf32>
    %cst_71 = arith.constant 1.000000e+00 : f32
    %95 = vector.broadcast %cst_71 : f32 to vector<16x16xf32>
    %96 = arith.subf %95, %92 : vector<16x16xf32>
    %97 = arith.select %94, %92, %96 : vector<16x16xi1>, vector<16x16xf32>
    %c0_72 = arith.constant 0 : index
    %c0_73 = arith.constant 0 : index
    %c0_74 = arith.constant 0 : index
    %98 = vector.load %arg8[%c0_72, %c0_73, %c0_74] : memref<1x16x16xf32, #tpu.memory_space<vmem>>, vector<1x16x16xf32>
    %99 = vector.shape_cast %98 : vector<1x16x16xf32> to vector<16x16xf32>
    %100 = vector.shape_cast %97 : vector<16x16xf32> to vector<1x16x16xf32>
    tpu.vector_store %arg8[%c0_72, %c0_73, %c0_74], %100 {strides = array<i32>} : memref<1x16x16xf32, #tpu.memory_space<vmem>>, vector<1x16x16xf32>,
    return
  }
  func.func @transform_0(%arg0: i32) -> (i32, i32, i32) {
    %c0_i32 = arith.constant 0 : i32
    %c0_i32_0 = arith.constant 0 : i32
    %c0_i32_1 = arith.constant 0 : i32
    return %arg0, %c0_i32, %c0_i32_0 : i32, i32, i32
  }
  func.func @transform_1(%arg0: i32) -> (i32, i32, i32) {
    %c0_i32 = arith.constant 0 : i32
    %c0_i32_0 = arith.constant 0 : i32
    %c0_i32_1 = arith.constant 0 : i32
    %c0_i32_2 = arith.constant 0 : i32
    return %c0_i32, %c0_i32_0, %c0_i32_1 : i32, i32, i32
  }
  func.func @transform_2(%arg0: i32) -> (i32, i32) {
    %c0_i32 = arith.constant 0 : i32
    %c0_i32_0 = arith.constant 0 : i32
    %c0_i32_1 = arith.constant 0 : i32
    return %c0_i32, %c0_i32_0 : i32, i32
  }
  func.func @transform_3(%arg0: i32) -> (i32, i32) {
    %c0_i32 = arith.constant 0 : i32
    %c0_i32_0 = arith.constant 0 : i32
    %c0_i32_1 = arith.constant 0 : i32
    return %c0_i32, %c0_i32_0 : i32, i32
  }
  func.func @transform_4(%arg0: i32) -> (i32, i32, i32) {
    %c0_i32 = arith.constant 0 : i32
    %c0_i32_0 = arith.constant 0 : i32
    %c0_i32_1 = arith.constant 0 : i32
    %c0_i32_2 = arith.constant 0 : i32
    return %c0_i32, %c0_i32_0, %c0_i32_1 : i32, i32, i32
  }
  func.func @transform_5(%arg0: i32) -> (i32, i32, i32) {
    %c0_i32 = arith.constant 0 : i32
    %c0_i32_0 = arith.constant 0 : i32
    %c0_i32_1 = arith.constant 0 : i32
    %c0_i32_2 = arith.constant 0 : i32
    return %c0_i32, %c0_i32_0, %c0_i32_1 : i32, i32, i32
  }
  func.func @transform_6(%arg0: i32) -> i32 {
    %c0_i32 = arith.constant 0 : i32
    %c0_i32_0 = arith.constant 0 : i32
    return %c0_i32 : i32
  }
  func.func @transform_7(%arg0: i32) -> (i32, i32, i32) {
    %c0_i32 = arith.constant 0 : i32
    %c0_i32_0 = arith.constant 0 : i32
    %c0_i32_1 = arith.constant 0 : i32
    return %arg0, %c0_i32, %c0_i32_0 : i32, i32, i32
  }
}

</mosaic_0001>

<llo_original>
// kernel: centernet_forward.5
$region0: #{centernet_forward.5}
  #allocation0 [shape = 'u32[]', space=smem, size = 0x4, offset = 0x4, fixed_abs, tag = 'smem constant byte address 0x4 - core index']
  #allocation1 [shape = 'u32[144,128]{1,0:T(1,128)}', space=vmem, size = 0x12000, scoped, tag = 'internal scratch']
  %s0 = inlined_call_operand.vmem [shape: bf16[2,64,128], index: 0, kind: input, shape index: {}]
  %s1 = inlined_call_operand.vmem [shape: bf16[1,128,128], index: 1, kind: input, shape index: {}]
  %s2 = inlined_call_operand.vmem [shape: f32[1,1,128], index: 2, kind: input, shape index: {}]
  %s3 = inlined_call_operand.vmem [shape: bf16[2,64,128], index: 3, kind: output, shape index: {}]
  %s4 = sld [smem:[#allocation0]]
  $region45: #{centernet_forward.5} parent=0
    _
  %s6 = ssub.s32 1, %s4
  %s7 = scalar_select 0, %s6, %s4
  loop: start=0, step=1, limit=4
  $region2: #{centernet_forward.5} parent=0 // loop_pre_header
    _
  $region3: #{centernet_forward.5} parent=0 // loop_header
    %s9 = sphi 0, %s13
    %p10 = scmp.ge.s32.totalorder %s9, 4
    %s16 = sphi 0, %s35
    %s17 = sphi 0, %s31
    %s18 = sphi 0, %s27
    %s19 = sphi 0, %s16
    %s20 = sphi 0, %s17
    %s21 = sphi 0, %s18
    %s22 = sphi 0, %s19
    %s23 = sphi 0, %s20
    %s24 = sphi 0, %s21
    %s40 = sphi 0, %s42
    %s43 = sphi 0, %s40
    %s44 = sphi 0, %s43
    %s60 = sphi 0, %s44
    %s66 = sphi 0, %s68
    %s69 = sphi 0, %s66
    %s70 = sphi 0, %s69
    %s86 = sphi 0, %s70
    %s92 = sphi 0, %s94
    %s95 = sphi 0, %s92
    %s96 = sphi 0, %s95
    %s112 = sphi 0, %s96
    %s122 = sphi 0, %s124
    %s125 = sphi 0, %s122
    %s126 = sphi 0, %s125
    %s142 = sphi 0, %s126
  $region4: #{centernet_forward.5} parent=0 // loop_header_branch
    %12 = sbr.rel (%p10) target = $region8
  $region5: #{centernet_forward.5} parent=0 // loop_body
    %s14 = ssub.s32 %s9, 1
    %s15 = ssub.s32 %s9, 2
    %s25 = sadd.s32 1, %s18
    %p26 = scmp.ge.s32.totalorder %s25, 1
    %s27 = scalar_select %p26, 0, %s25
    %s28 = sadd.s32 1, %s17
    %s29 = scalar_select %p26, %s28, %s17
    %p30 = scmp.ge.s32.totalorder %s29, 1
    %s31 = scalar_select %p30, 0, %s29
    %s32 = sadd.s32 1, %s16
    %s33 = scalar_select %p30, %s32, %s16
    %p34 = scmp.ge.s32.totalorder %s33, 2
    %s35 = scalar_select %p34, 0, %s33
    %s36 = ssub.s32 %s16, %s35
    %s37 = ssub.s32 %s17, %s31
    %s38 = sor.u32 %s36, %s37
    %p39 = scmp.eq.s32.totalorder %s38, 0
    %s41 = sadd.s32 %s40, 1
    %s42 = scalar_select %p39, %s40, %s41
    %p45 = pneg %p39
    %p46 = scmp.eq.s32.totalorder %s9, 1
    %p47 = por %p45, %p46
    %p48 = scmp.ne.s32.totalorder %s40, %s43
    %p49 = scmp.eq.s32.totalorder %s9, 0
    %p50 = por %p48, %p49
    %p51 = scmp.ne.s32.totalorder %s40, %s43
    %p52 = scmp.eq.s32.totalorder %s14, 1
    %p53 = por %p51, %p52
    %p54 = scmp.ne.s32.totalorder %s43, %s44
    %p55 = scmp.eq.s32.totalorder %s14, 0
    %p56 = por %p54, %p55
    %p57 = scmp.ne.s32.totalorder %s43, %s44
    %p58 = scmp.eq.s32.totalorder %s15, 1
    %p59 = por %p57, %p58
    %p61 = scmp.ne.s32.totalorder %s44, %s60
    %p62 = scmp.eq.s32.totalorder %s15, 0
    %p63 = por %p61, %p62
    %s64 = ssub.s32 %s18, %s27
    %p65 = scmp.eq.s32.totalorder %s64, 0
    %s67 = sadd.s32 %s66, 1
    %s68 = scalar_select %p65, %s66, %s67
    %p71 = pneg %p65
    %p72 = scmp.eq.s32.totalorder %s9, 1
    %p73 = por %p71, %p72
    %p74 = scmp.ne.s32.totalorder %s66, %s69
    %p75 = scmp.eq.s32.totalorder %s9, 0
    %p76 = por %p74, %p75
    %p77 = scmp.ne.s32.totalorder %s66, %s69
    %p78 = scmp.eq.s32.totalorder %s14, 1
    %p79 = por %p77, %p78
    %p80 = scmp.ne.s32.totalorder %s69, %s70
    %p81 = scmp.eq.s32.totalorder %s14, 0
    %p82 = por %p80, %p81
    %p83 = scmp.ne.s32.totalorder %s69, %s70
    %p84 = scmp.eq.s32.totalorder %s15, 1
    %p85 = por %p83, %p84
    %p87 = scmp.ne.s32.totalorder %s70, %s86
    %p88 = scmp.eq.s32.totalorder %s15, 0
    %p89 = por %p87, %p88
    %s90 = ssub.s32 %s18, %s27
    %p91 = scmp.eq.s32.totalorder %s90, 0
    %s93 = sadd.s32 %s92, 1
    %s94 = scalar_select %p91, %s92, %s93
    %p97 = pneg %p91
    %p98 = scmp.eq.s32.totalorder %s9, 1
    %p99 = por %p97, %p98
    %p100 = scmp.ne.s32.totalorder %s92, %s95
    %p101 = scmp.eq.s32.totalorder %s9, 0
    %p102 = por %p100, %p101
    %p103 = scmp.ne.s32.totalorder %s92, %s95
    %p104 = scmp.eq.s32.totalorder %s14, 1
    %p105 = por %p103, %p104
    %p106 = scmp.ne.s32.totalorder %s95, %s96
    %p107 = scmp.eq.s32.totalorder %s14, 0
    %p108 = por %p106, %p107
    %p109 = scmp.ne.s32.totalorder %s95, %s96
    %p110 = scmp.eq.s32.totalorder %s15, 1
    %p111 = por %p109, %p110
    %p113 = scmp.ne.s32.totalorder %s96, %s112
    %p114 = scmp.eq.s32.totalorder %s15, 0
    %p115 = por %p113, %p114
    %s116 = ssub.s32 %s16, %s35
    %s117 = ssub.s32 %s17, %s31
    %s118 = sor.u32 %s116, %s117
    %s119 = ssub.s32 %s18, %s27
    %s120 = sor.u32 %s118, %s119
    %p121 = scmp.eq.s32.totalorder %s120, 0
    %s123 = sadd.s32 %s122, 1
    %s124 = scalar_select %p121, %s122, %s123
    %p127 = pneg %p121
    %p128 = scmp.eq.s32.totalorder %s9, 1
    %p129 = por %p127, %p128
    %p130 = scmp.ne.s32.totalorder %s122, %s125
    %p131 = scmp.eq.s32.totalorder %s9, 0
    %p132 = por %p130, %p131
    %p133 = scmp.ne.s32.totalorder %s122, %s125
    %p134 = scmp.eq.s32.totalorder %s14, 1
    %p135 = por %p133, %p134
    %p136 = scmp.ne.s32.totalorder %s125, %s126
    %p137 = scmp.eq.s32.totalorder %s14, 0
    %p138 = por %p136, %p137
    %p139 = scmp.ne.s32.totalorder %s125, %s126
    %p140 = scmp.eq.s32.totalorder %s15, 1
    %p141 = por %p139, %p140
    %p143 = scmp.ne.s32.totalorder %s126, %s142
    %p144 = scmp.eq.s32.totalorder %s15, 0
    %p145 = por %p143, %p144
    %p146 = scmp.le.s32.totalorder 1, %s9
    %p147 = scmp.lt.s32.totalorder %s9, 3
    %p148 = pnand %p146, %p147
    %p149 = pneg %p148
    // Predicated region
    $region9: #{centernet_forward.5} parent=5 // pred_check
      _
    $region10: #{centernet_forward.5} parent=5 // pred_check_branch
      %151 = sbr.rel (%p148) target = $region12
    $region11: #{centernet_forward.5} parent=5 // pred_region
      %s152 = ssub.s32 %s9, 1
      // Predicated region
      $region13: #{centernet_forward.5} parent=11 // pred_check
        %p153 = pneg %p82
      $region14: #{centernet_forward.5} parent=11 // pred_check_branch
        %155 = sbr.rel (%p153) target = $region16
      $region15: #{centernet_forward.5} parent=11 // pred_region
        %p156 = scmp.lt.s32.totalorder %s21, 0
        %s157 = scalar_select %p156, %s21, 0
        %s158 = smul.addr %s157, 4
        %s159 = scalar_lea.vmem %s1, %s158
      $region16: #{centernet_forward.5} parent=11 // pred_fallthru
        _
      // Predicated region
      $region17: #{centernet_forward.5} parent=11 // pred_check
        %p160 = pneg %p108
      $region18: #{centernet_forward.5} parent=11 // pred_check_branch
        %162 = sbr.rel (%p160) target = $region20
      $region19: #{centernet_forward.5} parent=11 // pred_region
        %p163 = scmp.lt.s32.totalorder %s21, 0
        %s164 = scalar_select %p163, %s21, 0
        %s165 = scalar_lea.vmem %s2, %s164
      $region20: #{centernet_forward.5} parent=11 // pred_fallthru
        _
    $region12: #{centernet_forward.5} parent=5 // pred_fallthru
      _
    %p166 = scmp.lt.s32.totalorder %s9, 2
    // Predicated region
    $region21: #{centernet_forward.5} parent=5 // pred_check
      %p167 = pneg %p166
    $region22: #{centernet_forward.5} parent=5 // pred_check_branch
      %169 = sbr.rel (%p167) target = $region24
    $region23: #{centernet_forward.5} parent=5 // pred_region
      // Predicated region
      $region25: #{centernet_forward.5} parent=23 // pred_check
        %p170 = pneg %p50
      $region26: #{centernet_forward.5} parent=23 // pred_check_branch
        %172 = sbr.rel (%p170) target = $region28
      $region27: #{centernet_forward.5} parent=23 // pred_region
        %s173 = smul.u32 8, %s17
        %p174 = scmp.lt.s32.totalorder %s16, 1
        %s175 = scalar_select %p174, %s16, 1
        %p176 = scmp.lt.s32.totalorder %s173, 7
        %s177 = scalar_select %p176, %s173, 7
        %s178 = smul.addr %s175, 8
        %s179 = sadd.s32 %s177, %s178
        %s180 = smul.addr %s179, 4
        %s181 = scalar_lea.vmem %s0, %s180
        %s182 = smul.u32 8, %s17
      $region28: #{centernet_forward.5} parent=23 // pred_fallthru
        _
    $region24: #{centernet_forward.5} parent=5 // pred_fallthru
      _
    %p183 = scmp.le.s32.totalorder 1, %s9
    %p184 = scmp.lt.s32.totalorder %s9, 3
    %p185 = pnand %p183, %p184
    %p186 = pneg %p185
    // Predicated region
    $region29: #{centernet_forward.5} parent=5 // pred_check
      _
    $region30: #{centernet_forward.5} parent=5 // pred_check_branch
      %188 = sbr.rel (%p185) target = $region32
    $region31: #{centernet_forward.5} parent=5 // pred_region
      %s189 = ssub.s32 %s9, 1
      %s190 = smul.u32 8, %s20
      %p191 = scmp.lt.s32.totalorder %s19, 1
      %s192 = scalar_select %p191, %s19, 1
      %p193 = scmp.lt.s32.totalorder %s190, 7
      %s194 = scalar_select %p193, %s190, 7
      %s195 = smul.addr %s192, 8
      %s196 = sadd.s32 %s194, %s195
      %s197 = smul.addr %s196, 4
      %s198 = scalar_lea.vmem %s0, %s197
      %p199 = pneg %p56
      %p200 = pneg %p53
      %p201 = scmp.lt.s32.totalorder %s21, 0
      %s202 = scalar_select %p201, %s21, 0
      %s203 = smul.addr %s202, 4
      %s204 = scalar_lea.vmem %s1, %s203
      %p205 = pneg %p82
      %p206 = pneg %p79
      %p207 = scmp.lt.s32.totalorder %s21, 0
      %s208 = scalar_select %p207, %s21, 0
      %s209 = scalar_lea.vmem %s2, %s208
      %p210 = pneg %p108
      %p211 = pneg %p105
      %p212 = pneg %p138
      %p213 = pneg %p135
      %s214 = smul.u32 8, %s20
      %p215 = scmp.lt.s32.totalorder %s19, 1
      %s216 = scalar_select %p215, %s19, 1
      %p217 = scmp.lt.s32.totalorder %s214, 7
      %s218 = scalar_select %p217, %s214, 7
      %p219 = scmp.lt.s32.totalorder %s21, 0
      %s220 = scalar_select %p219, %s21, 0
      %s221 = sadd.s32 %s220, %s218
      %s222 = smul.addr %s216, 8
      %s223 = sadd.s32 %s221, %s222
      %s224 = smul.addr %s223, 4
      %s225 = scalar_lea.vmem %s3, %s224
      %s226 = smul.u32 8, %s20
      %p227 = scmp.lt.s32.totalorder %s19, 1
      %s228 = scalar_select %p227, %s19, 1
      %p229 = scmp.lt.s32.totalorder %s226, 7
      %s230 = scalar_select %p229, %s226, 7
      %s231 = smul.addr %s228, 8
      %s232 = sadd.s32 %s230, %s231
      %s233 = smul.addr %s232, 4
      %s234 = scalar_lea.vmem %s0, %s233
      %s235 = smul.u32 8, %s20
      %p236 = scmp.lt.s32.totalorder %s21, 0
      %s237 = scalar_select %p236, %s21, 0
      %s238 = smul.addr %s237, 4
      %s239 = scalar_lea.vmem %s1, %s238
      %p240 = scmp.lt.s32.totalorder %s21, 0
      %s241 = scalar_select %p240, %s21, 0
      %s242 = scalar_lea.vmem %s2, %s241
      %s243 = smul.u32 8, %s20
      %p244 = scmp.lt.s32.totalorder %s19, 1
      %s245 = scalar_select %p244, %s19, 1
      %p246 = scmp.lt.s32.totalorder %s243, 7
      %s247 = scalar_select %p246, %s243, 7
      %p248 = scmp.lt.s32.totalorder %s21, 0
      %s249 = scalar_select %p248, %s21, 0
      %s250 = sadd.s32 %s249, %s247
      %s251 = smul.addr %s245, 8
      %s252 = sadd.s32 %s250, %s251
      %s253 = smul.addr %s252, 4
      %s254 = scalar_lea.vmem %s3, %s253
      %s255 = smul.u32 8, %s20
      %v257 = vld [vmem:[%s234] sm:$0xf]
      %v258 = vld [vmem:[%s234 + $0x4] sm:$0xf]
      %v259 = vld [vmem:[%s234 + $0x8] sm:$0xf]
      %v260 = vld [vmem:[%s234 + $0xc] sm:$0xf]
      %v261 = vld [vmem:[%s234 + $0x10] sm:$0xf]
      %v262 = vld [vmem:[%s234 + $0x14] sm:$0xf]
      %v263 = vld [vmem:[%s234 + $0x18] sm:$0xf]
      %v264 = vld [vmem:[%s234 + $0x1c] sm:$0xf]
      %v265 = vld [vmem:[%s239] sm:$0xf]
      %v266 = vld [vmem:[%s239 + $0x4] sm:$0xf]
      %v267 = vld [vmem:[%s239 + $0x8] sm:$0xf]
      %v268 = vld [vmem:[%s239 + $0xc] sm:$0xf]
      %v269 = vld [vmem:[%s239 + $0x10] sm:$0xf]
      %v270 = vld [vmem:[%s239 + $0x14] sm:$0xf]
      %v271 = vld [vmem:[%s239 + $0x18] sm:$0xf]
      %v272 = vld [vmem:[%s239 + $0x1c] sm:$0xf]
      %v273 = vld [vmem:[%s239 + $0x20] sm:$0xf]
      %v274 = vld [vmem:[%s239 + $0x24] sm:$0xf]
      %v275 = vld [vmem:[%s239 + $0x28] sm:$0xf]
      %v276 = vld [vmem:[%s239 + $0x2c] sm:$0xf]
      %v277 = vld [vmem:[%s239 + $0x30] sm:$0xf]
      %v278 = vld [vmem:[%s239 + $0x34] sm:$0xf]
      %v279 = vld [vmem:[%s239 + $0x38] sm:$0xf]
      %v280 = vld [vmem:[%s239 + $0x3c] sm:$0xf]
      %v281 = vld [vmem:[%s242] sm:$0x1]
      %v283 = vlaneseq
      %v284 = vshrl.u32 %v283, 7
      %v285 = vsub.s32 0, %v284
      %v286 = vrot.slane %v281, %v285
      %v296 = vunpack.c.l.b16 %v257
      %v297 = vunpack.c.l.b16 %v258
      %v298 = vunpack.c.l.b16 %v259
      %v299 = vunpack.c.l.b16 %v260
      %v300 = vunpack.c.l.b16 %v261
      %v301 = vunpack.c.l.b16 %v262
      %v302 = vunpack.c.l.b16 %v263
      %v303 = vunpack.c.l.b16 %v264
      %v304 = vpack.c.b16 %v297, %v296
      %v305 = vpack.c.b16 %v299, %v298
      %v306 = vpack.c.b16 %v301, %v300
      %v307 = vpack.c.b16 %v303, %v302
      %v328 = vunpack.c.l.b16 %v265
      %v329 = vunpack.c.l.b16 %v266
      %v330 = vunpack.c.l.b16 %v267
      %v331 = vunpack.c.l.b16 %v268
      %v332 = vunpack.c.l.b16 %v269
      %v333 = vunpack.c.l.b16 %v270
      %v334 = vunpack.c.l.b16 %v271
      %v335 = vunpack.c.l.b16 %v272
      %v336 = vunpack.c.l.b16 %v273
      %v337 = vunpack.c.l.b16 %v274
      %v338 = vunpack.c.l.b16 %v275
      %v339 = vunpack.c.l.b16 %v276
      %v340 = vunpack.c.l.b16 %v277
      %v341 = vunpack.c.l.b16 %v278
      %v342 = vunpack.c.l.b16 %v279
      %v343 = vunpack.c.l.b16 %v280
      %v344 = vpack.c.b16 %v329, %v328
      %v345 = vpack.c.b16 %v331, %v330
      %v346 = vpack.c.b16 %v333, %v332
      %v347 = vpack.c.b16 %v335, %v334
      %v348 = vpack.c.b16 %v337, %v336
      %v349 = vpack.c.b16 %v339, %v338
      %v350 = vpack.c.b16 %v341, %v340
      %v351 = vpack.c.b16 %v343, %v342
      %360 = vmatprep.subr.bf16.mxu0 0
      %361 = vmatpush1.bf16.msra.mxu0 %v344
      %362 = vmatprep.subr.bf16.mxu0 0
      %363 = vmatpush1.bf16.msra.mxu0 %v345
      %364 = vmatprep.subr.bf16.mxu0 0
      %365 = vmatpush1.bf16.msra.mxu0 %v346
      %366 = vmatprep.subr.bf16.mxu0 0
      %367 = vmatpush1.bf16.msra.mxu0 %v347
      %368 = vmatprep.subr.bf16.mxu0 0
      %369 = vmatpush1.bf16.msra.mxu0 %v348
      %370 = vmatprep.subr.bf16.mxu0 0
      %371 = vmatpush1.bf16.msra.mxu0 %v349
      %372 = vmatprep.subr.bf16.mxu0 0
      %373 = vmatpush1.bf16.msra.mxu0 %v350
      %374 = vmatprep.subr.bf16.mxu0 0
      %375 = vmatpush1.bf16.msra.mxu0 %v351
      %376 = vmatprep.subr.bf16.mxu0 0
      %377 = vmatpush1.bf16.msra.mxu0 0
      %378 = vmatprep.subr.bf16.mxu0 0
      %379 = vmatpush1.bf16.msra.mxu0 0
      %380 = vmatprep.subr.bf16.mxu0 0
      %381 = vmatpush1.bf16.msra.mxu0 0
      %382 = vmatprep.subr.bf16.mxu0 0
      %383 = vmatpush1.bf16.msra.mxu0 0
      %384 = vmatprep.subr.bf16.mxu0 0
      %385 = vmatpush1.bf16.msra.mxu0 0
      %386 = vmatprep.subr.bf16.mxu0 0
      %387 = vmatpush1.bf16.msra.mxu0 0
      %388 = vmatprep.subr.bf16.mxu0 0
      %389 = vmatpush1.bf16.msra.mxu0 0
      %390 = vmatprep.subr.bf16.mxu0 0
      %391 = vmatpush1.bf16.msra.mxu0 0
      %392 = vmatprep.mubr.bf16.mxu0 0
      %393 = vmatmul.mubr.bf16.gmra.mrb[0].mxu0 %v304
      %v394 = vpop.f32.mrb[0].mxu0
      %v395 = vadd.f32 %v286, %v394
      %v396 = vpop.f32.mrb[0].mxu0
      %v397 = vpop.f32.mrb[0].mxu0
      %v398 = vadd.f32 %v286, %v397
      %v399 = vpop.f32.mrb[0].mxu0
      %400 = vmatprep.mubr.bf16.mxu0 0
      %401 = vmatmul.mubr.bf16.gmra.mrb[0].mxu0 %v305
      %v402 = vpop.f32.mrb[0].mxu0
      %v403 = vadd.f32 %v286, %v402
      %v404 = vpop.f32.mrb[0].mxu0
      %v405 = vpop.f32.mrb[0].mxu0
      %v406 = vadd.f32 %v286, %v405
      %v407 = vpop.f32.mrb[0].mxu0
      %408 = vmatprep.mubr.bf16.mxu0 0
      %409 = vmatmul.mubr.bf16.gmra.mrb[0].mxu0 %v306
      %v410 = vpop.f32.mrb[0].mxu0
      %v411 = vadd.f32 %v286, %v410
      %v412 = vpop.f32.mrb[0].mxu0
      %v413 = vpop.f32.mrb[0].mxu0
      %v414 = vadd.f32 %v286, %v413
      %v415 = vpop.f32.mrb[0].mxu0
      %416 = vmatprep.mubr.bf16.mxu0 0
      %417 = vmatmul.mubr.bf16.gmra.mrb[0].mxu0 %v307
      %v418 = vpop.f32.mrb[0].mxu0
      %v419 = vadd.f32 %v286, %v418
      %v420 = vpop.f32.mrb[0].mxu0
      %v421 = vpop.f32.mrb[0].mxu0
      %v422 = vadd.f32 %v286, %v421
      %v423 = vpop.f32.mrb[0].mxu0
      %424 = vdwg.mxu0
      %v425 = vmax.f32 %v395, 0.0
      %v426 = vmax.f32 %v398, 0.0
      %v427 = vmax.f32 %v403, 0.0
      %v428 = vmax.f32 %v406, 0.0
      %v429 = vmax.f32 %v411, 0.0
      %v430 = vmax.f32 %v414, 0.0
      %v431 = vmax.f32 %v419, 0.0
      %v432 = vmax.f32 %v422, 0.0
      %v433 = vpack.c.bf16 %v426, %v425
      %v434 = vpack.c.bf16 %v428, %v427
      %v435 = vpack.c.bf16 %v430, %v429
      %v436 = vpack.c.bf16 %v432, %v431
      %v441 = vunpack.c.l.b16 %v433
      %v442 = vunpack.c.h.b16 %v433
      %v443 = vunpack.c.l.b16 %v434
      %v444 = vunpack.c.h.b16 %v434
      %v445 = vunpack.c.l.b16 %v435
      %v446 = vunpack.c.h.b16 %v435
      %v447 = vunpack.c.l.b16 %v436
      %v448 = vunpack.c.h.b16 %v436
      %v449 = vpack.c.b16 %v441, %v441
      %v450 = vpack.c.b16 %v442, %v442
      %v451 = vpack.c.b16 %v443, %v443
      %v452 = vpack.c.b16 %v444, %v444
      %v453 = vpack.c.b16 %v445, %v445
      %v454 = vpack.c.b16 %v446, %v446
      %v455 = vpack.c.b16 %v447, %v447
      %v456 = vpack.c.b16 %v448, %v448
      %465 = vst [vmem:[%s254] sm:$0xf] %v449
      %466 = vst [vmem:[%s254 + $0x4] sm:$0xf] %v450
      %467 = vst [vmem:[%s254 + $0x8] sm:$0xf] %v451
      %468 = vst [vmem:[%s254 + $0xc] sm:$0xf] %v452
      %469 = vst [vmem:[%s254 + $0x10] sm:$0xf] %v453
      %470 = vst [vmem:[%s254 + $0x14] sm:$0xf] %v454
      %471 = vst [vmem:[%s254 + $0x18] sm:$0xf] %v455
      %472 = vst [vmem:[%s254 + $0x1c] sm:$0xf] %v456
      %s473 = smul.u32 8, %s20
      %p474 = scmp.lt.s32.totalorder %s19, 1
      %s475 = scalar_select %p474, %s19, 1
      %p476 = scmp.lt.s32.totalorder %s473, 7
      %s477 = scalar_select %p476, %s473, 7
      %p478 = scmp.lt.s32.totalorder %s21, 0
      %s479 = scalar_select %p478, %s21, 0
      %s480 = sadd.s32 %s479, %s477
      %s481 = smul.addr %s475, 8
      %s482 = sadd.s32 %s480, %s481
      %s483 = smul.addr %s482, 4
      %s484 = scalar_lea.vmem %s3, %s483
      // Predicated region
      $region33: #{centernet_forward.5} parent=31 // pred_check
        %p485 = pneg %p135
      $region34: #{centernet_forward.5} parent=31 // pred_check_branch
        %487 = sbr.rel (%p485) target = $region36
      $region35: #{centernet_forward.5} parent=31 // pred_region
        %s488 = smul.u32 8, %s20
      $region36: #{centernet_forward.5} parent=31 // pred_fallthru
        _
    $region32: #{centernet_forward.5} parent=5 // pred_fallthru
      _
    %p489 = scmp.le.s32.totalorder 2, %s9
    // Predicated region
    $region37: #{centernet_forward.5} parent=5 // pred_check
      %p490 = pneg %p489
    $region38: #{centernet_forward.5} parent=5 // pred_check_branch
      %492 = sbr.rel (%p490) target = $region40
    $region39: #{centernet_forward.5} parent=5 // pred_region
      %s493 = ssub.s32 %s9, 2
      // Predicated region
      $region41: #{centernet_forward.5} parent=39 // pred_check
        %p494 = pneg %p141
      $region42: #{centernet_forward.5} parent=39 // pred_check_branch
        %496 = sbr.rel (%p494) target = $region44
      $region43: #{centernet_forward.5} parent=39 // pred_region
        %s497 = smul.u32 8, %s23
        %p498 = scmp.lt.s32.totalorder %s22, 1
        %s499 = scalar_select %p498, %s22, 1
        %p500 = scmp.lt.s32.totalorder %s497, 7
        %s501 = scalar_select %p500, %s497, 7
        %p502 = scmp.lt.s32.totalorder %s24, 0
        %s503 = scalar_select %p502, %s24, 0
        %s504 = sadd.s32 %s503, %s501
        %s505 = smul.addr %s499, 8
        %s506 = sadd.s32 %s504, %s505
        %s507 = smul.addr %s506, 4
        %s508 = scalar_lea.vmem %s3, %s507
      $region44: #{centernet_forward.5} parent=39 // pred_fallthru
        _
    $region40: #{centernet_forward.5} parent=5 // pred_fallthru
      _
  $region6: #{centernet_forward.5} parent=0 // loop_footer
    %s13 = sadd.s32 1, %s9
  $region7: #{centernet_forward.5} parent=0 // loop_footer_branch
    %8 = sbr.rel target = $region3
  $region8: #{centernet_forward.5} parent=0 // loop_exit
    _

// kernel: centernet_forward.6
$region0: #{centernet_forward.6}
  #allocation0 [shape = 'u32[]', space=smem, size = 0x4, offset = 0x4, fixed_abs, tag = 'smem constant byte address 0x4 - core index']
  #allocation1 [shape = 'u32[144,128]{1,0:T(1,128)}', space=vmem, size = 0x12000, scoped, tag = 'internal scratch']
  %s0 = inlined_call_operand.vmem [shape: bf16[2,16,1152], index: 0, kind: input, shape index: {}]
  %s1 = inlined_call_operand.vmem [shape: bf16[1,1152,128], index: 1, kind: input, shape index: {}]
  %s2 = inlined_call_operand.vmem [shape: f32[1,1,128], index: 2, kind: input, shape index: {}]
  %s3 = inlined_call_operand.vmem [shape: bf16[2,16,128], index: 3, kind: output, shape index: {}]
  %s4 = sld [smem:[#allocation0]]
  $region45: #{centernet_forward.6} parent=0
    _
  %s6 = ssub.s32 1, %s4
  %s7 = scalar_select 0, %s6, %s4
  loop: start=0, step=1, limit=4
  $region2: #{centernet_forward.6} parent=0 // loop_pre_header
    _
  $region3: #{centernet_forward.6} parent=0 // loop_header
    %s9 = sphi 0, %s13
    %p10 = scmp.ge.s32.totalorder %s9, 4
    %s16 = sphi 0, %s35
    %s17 = sphi 0, %s31
    %s18 = sphi 0, %s27
    %s19 = sphi 0, %s16
    %s20 = sphi 0, %s17
    %s21 = sphi 0, %s18
    %s22 = sphi 0, %s19
    %s23 = sphi 0, %s20
    %s24 = sphi 0, %s21
    %s40 = sphi 0, %s42
    %s43 = sphi 0, %s40
    %s44 = sphi 0, %s43
    %s60 = sphi 0, %s44
    %s66 = sphi 0, %s68
    %s69 = sphi 0, %s66
    %s70 = sphi 0, %s69
    %s86 = sphi 0, %s70
    %s92 = sphi 0, %s94
    %s95 = sphi 0, %s92
    %s96 = sphi 0, %s95
    %s112 = sphi 0, %s96
    %s122 = sphi 0, %s124
    %s125 = sphi 0, %s122
    %s126 = sphi 0, %s125
    %s142 = sphi 0, %s126
  $region4: #{centernet_forward.6} parent=0 // loop_header_branch
    %12 = sbr.rel (%p10) target = $region8
  $region5: #{centernet_forward.6} parent=0 // loop_body
    %s14 = ssub.s32 %s9, 1
    %s15 = ssub.s32 %s9, 2
    %s25 = sadd.s32 1, %s18
    %p26 = scmp.ge.s32.totalorder %s25, 1
    %s27 = scalar_select %p26, 0, %s25
    %s28 = sadd.s32 1, %s17
    %s29 = scalar_select %p26, %s28, %s17
    %p30 = scmp.ge.s32.totalorder %s29, 1
    %s31 = scalar_select %p30, 0, %s29
    %s32 = sadd.s32 1, %s16
    %s33 = scalar_select %p30, %s32, %s16
    %p34 = scmp.ge.s32.totalorder %s33, 2
    %s35 = scalar_select %p34, 0, %s33
    %s36 = ssub.s32 %s16, %s35
    %s37 = ssub.s32 %s17, %s31
    %s38 = sor.u32 %s36, %s37
    %p39 = scmp.eq.s32.totalorder %s38, 0
    %s41 = sadd.s32 %s40, 1
    %s42 = scalar_select %p39, %s40, %s41
    %p45 = pneg %p39
    %p46 = scmp.eq.s32.totalorder %s9, 1
    %p47 = por %p45, %p46
    %p48 = scmp.ne.s32.totalorder %s40, %s43
    %p49 = scmp.eq.s32.totalorder %s9, 0
    %p50 = por %p48, %p49
    %p51 = scmp.ne.s32.totalorder %s40, %s43
    %p52 = scmp.eq.s32.totalorder %s14, 1
    %p53 = por %p51, %p52
    %p54 = scmp.ne.s32.totalorder %s43, %s44
    %p55 = scmp.eq.s32.totalorder %s14, 0
    %p56 = por %p54, %p55
    %p57 = scmp.ne.s32.totalorder %s43, %s44
    %p58 = scmp.eq.s32.totalorder %s15, 1
    %p59 = por %p57, %p58
    %p61 = scmp.ne.s32.totalorder %s44, %s60
    %p62 = scmp.eq.s32.totalorder %s15, 0
    %p63 = por %p61, %p62
    %s64 = ssub.s32 %s18, %s27
    %p65 = scmp.eq.s32.totalorder %s64, 0
    %s67 = sadd.s32 %s66, 1
    %s68 = scalar_select %p65, %s66, %s67
    %p71 = pneg %p65
    %p72 = scmp.eq.s32.totalorder %s9, 1
    %p73 = por %p71, %p72
    %p74 = scmp.ne.s32.totalorder %s66, %s69
    %p75 = scmp.eq.s32.totalorder %s9, 0
    %p76 = por %p74, %p75
    %p77 = scmp.ne.s32.totalorder %s66, %s69
    %p78 = scmp.eq.s32.totalorder %s14, 1
    %p79 = por %p77, %p78
    %p80 = scmp.ne.s32.totalorder %s69, %s70
    %p81 = scmp.eq.s32.totalorder %s14, 0
    %p82 = por %p80, %p81
    %p83 = scmp.ne.s32.totalorder %s69, %s70
    %p84 = scmp.eq.s32.totalorder %s15, 1
    %p85 = por %p83, %p84
    %p87 = scmp.ne.s32.totalorder %s70, %s86
    %p88 = scmp.eq.s32.totalorder %s15, 0
    %p89 = por %p87, %p88
    %s90 = ssub.s32 %s18, %s27
    %p91 = scmp.eq.s32.totalorder %s90, 0
    %s93 = sadd.s32 %s92, 1
    %s94 = scalar_select %p91, %s92, %s93
    %p97 = pneg %p91
    %p98 = scmp.eq.s32.totalorder %s9, 1
    %p99 = por %p97, %p98
    %p100 = scmp.ne.s32.totalorder %s92, %s95
    %p101 = scmp.eq.s32.totalorder %s9, 0
    %p102 = por %p100, %p101
    %p103 = scmp.ne.s32.totalorder %s92, %s95
    %p104 = scmp.eq.s32.totalorder %s14, 1
    %p105 = por %p103, %p104
    %p106 = scmp.ne.s32.totalorder %s95, %s96
    %p107 = scmp.eq.s32.totalorder %s14, 0
    %p108 = por %p106, %p107
    %p109 = scmp.ne.s32.totalorder %s95, %s96
    %p110 = scmp.eq.s32.totalorder %s15, 1
    %p111 = por %p109, %p110
    %p113 = scmp.ne.s32.totalorder %s96, %s112
    %p114 = scmp.eq.s32.totalorder %s15, 0
    %p115 = por %p113, %p114
    %s116 = ssub.s32 %s16, %s35
    %s117 = ssub.s32 %s17, %s31
    %s118 = sor.u32 %s116, %s117
    %s119 = ssub.s32 %s18, %s27
    %s120 = sor.u32 %s118, %s119
    %p121 = scmp.eq.s32.totalorder %s120, 0
    %s123 = sadd.s32 %s122, 1
    %s124 = scalar_select %p121, %s122, %s123
    %p127 = pneg %p121
    %p128 = scmp.eq.s32.totalorder %s9, 1
    %p129 = por %p127, %p128
    %p130 = scmp.ne.s32.totalorder %s122, %s125
    %p131 = scmp.eq.s32.totalorder %s9, 0
    %p132 = por %p130, %p131
    %p133 = scmp.ne.s32.totalorder %s122, %s125
    %p134 = scmp.eq.s32.totalorder %s14, 1
    %p135 = por %p133, %p134
    %p136 = scmp.ne.s32.totalorder %s125, %s126
    %p137 = scmp.eq.s32.totalorder %s14, 0
    %p138 = por %p136, %p137
    %p139 = scmp.ne.s32.totalorder %s125, %s126
    %p140 = scmp.eq.s32.totalorder %s15, 1
    %p141 = por %p139, %p140
    %p143 = scmp.ne.s32.totalorder %s126, %s142
    %p144 = scmp.eq.s32.totalorder %s15, 0
    %p145 = por %p143, %p144
    %p146 = scmp.le.s32.totalorder 1, %s9
    %p147 = scmp.lt.s32.totalorder %s9, 3
    %p148 = pnand %p146, %p147
    %p149 = pneg %p148
    // Predicated region
    $region9: #{centernet_forward.6} parent=5 // pred_check
      _
    $region10: #{centernet_forward.6} parent=5 // pred_check_branch
      %151 = sbr.rel (%p148) target = $region12
    $region11: #{centernet_forward.6} parent=5 // pred_region
      %s152 = ssub.s32 %s9, 1
      // Predicated region
      $region13: #{centernet_forward.6} parent=11 // pred_check
        %p153 = pneg %p82
      $region14: #{centernet_forward.6} parent=11 // pred_check_branch
        %155 = sbr.rel (%p153) target = $region16
      $region15: #{centernet_forward.6} parent=11 // pred_region
        %p156 = scmp.lt.s32.totalorder %s21, 0
        %s157 = scalar_select %p156, %s21, 0
        %s158 = smul.addr %s157, 4
        %s159 = scalar_lea.vmem %s1, %s158
      $region16: #{centernet_forward.6} parent=11 // pred_fallthru
        _
      // Predicated region
      $region17: #{centernet_forward.6} parent=11 // pred_check
        %p160 = pneg %p108
      $region18: #{centernet_forward.6} parent=11 // pred_check_branch
        %162 = sbr.rel (%p160) target = $region20
      $region19: #{centernet_forward.6} parent=11 // pred_region
        %p163 = scmp.lt.s32.totalorder %s21, 0
        %s164 = scalar_select %p163, %s21, 0
        %s165 = scalar_lea.vmem %s2, %s164
      $region20: #{centernet_forward.6} parent=11 // pred_fallthru
        _
    $region12: #{centernet_forward.6} parent=5 // pred_fallthru
      _
    %p166 = scmp.lt.s32.totalorder %s9, 2
    // Predicated region
    $region21: #{centernet_forward.6} parent=5 // pred_check
      %p167 = pneg %p166
    $region22: #{centernet_forward.6} parent=5 // pred_check_branch
      %169 = sbr.rel (%p167) target = $region24
    $region23: #{centernet_forward.6} parent=5 // pred_region
      // Predicated region
      $region25: #{centernet_forward.6} parent=23 // pred_check
        %p170 = pneg %p50
      $region26: #{centernet_forward.6} parent=23 // pred_check_branch
        %172 = sbr.rel (%p170) target = $region28
      $region27: #{centernet_forward.6} parent=23 // pred_region
        %s173 = smul.u32 2, %s17
        %p174 = scmp.lt.s32.totalorder %s16, 1
        %s175 = scalar_select %p174, %s16, 1
        %p176 = scmp.lt.s32.totalorder %s173, 1
        %s177 = scalar_select %p176, %s173, 1
        %s178 = smul.addr %s177, 9
        %s179 = smul.addr %s175, 18
        %s180 = sadd.s32 %s178, %s179
        %s181 = smul.addr %s180, 4
        %s182 = scalar_lea.vmem %s0, %s181
        %s183 = smul.u32 2, %s17
      $region28: #{centernet_forward.6} parent=23 // pred_fallthru
        _
    $region24: #{centernet_forward.6} parent=5 // pred_fallthru
      _
    %p184 = scmp.le.s32.totalorder 1, %s9
    %p185 = scmp.lt.s32.totalorder %s9, 3
    %p186 = pnand %p184, %p185
    %p187 = pneg %p186
    // Predicated region
    $region29: #{centernet_forward.6} parent=5 // pred_check
      _
    $region30: #{centernet_forward.6} parent=5 // pred_check_branch
      %189 = sbr.rel (%p186) target = $region32
    $region31: #{centernet_forward.6} parent=5 // pred_region
      %s190 = ssub.s32 %s9, 1
      %s191 = smul.u32 2, %s20
      %p192 = scmp.lt.s32.totalorder %s19, 1
      %s193 = scalar_select %p192, %s19, 1
      %p194 = scmp.lt.s32.totalorder %s191, 1
      %s195 = scalar_select %p194, %s191, 1
      %s196 = smul.addr %s195, 9
      %s197 = smul.addr %s193, 18
      %s198 = sadd.s32 %s196, %s197
      %s199 = smul.addr %s198, 4
      %s200 = scalar_lea.vmem %s0, %s199
      %p201 = pneg %p56
      %p202 = pneg %p53
      %p203 = scmp.lt.s32.totalorder %s21, 0
      %s204 = scalar_select %p203, %s21, 0
      %s205 = smul.addr %s204, 4
      %s206 = scalar_lea.vmem %s1, %s205
      %p207 = pneg %p82
      %p208 = pneg %p79
      %p209 = scmp.lt.s32.totalorder %s21, 0
      %s210 = scalar_select %p209, %s21, 0
      %s211 = scalar_lea.vmem %s2, %s210
      %p212 = pneg %p108
      %p213 = pneg %p105
      %p214 = pneg %p138
      %p215 = pneg %p135
      %s216 = smul.u32 2, %s20
      %p217 = scmp.lt.s32.totalorder %s19, 1
      %s218 = scalar_select %p217, %s19, 1
      %p219 = scmp.lt.s32.totalorder %s216, 1
      %s220 = scalar_select %p219, %s216, 1
      %p221 = scmp.lt.s32.totalorder %s21, 0
      %s222 = scalar_select %p221, %s21, 0
      %s223 = sadd.s32 %s222, %s220
      %s224 = smul.addr %s218, 2
      %s225 = sadd.s32 %s223, %s224
      %s226 = smul.addr %s225, 4
      %s227 = scalar_lea.vmem %s3, %s226
      %s228 = smul.u32 2, %s20
      %p229 = scmp.lt.s32.totalorder %s19, 1
      %s230 = scalar_select %p229, %s19, 1
      %p231 = scmp.lt.s32.totalorder %s228, 1
      %s232 = scalar_select %p231, %s228, 1
      %s233 = smul.addr %s232, 9
      %s234 = smul.addr %s230, 18
      %s235 = sadd.s32 %s233, %s234
      %s236 = smul.addr %s235, 4
      %s237 = scalar_lea.vmem %s0, %s236
      %s238 = smul.u32 2, %s20
      %p239 = scmp.lt.s32.totalorder %s21, 0
      %s240 = scalar_select %p239, %s21, 0
      %s241 = smul.addr %s240, 4
      %s242 = scalar_lea.vmem %s1, %s241
      %p243 = scmp.lt.s32.totalorder %s21, 0
      %s244 = scalar_select %p243, %s21, 0
      %s245 = scalar_lea.vmem %s2, %s244
      %s246 = smul.u32 2, %s20
      %p247 = scmp.lt.s32.totalorder %s19, 1
      %s248 = scalar_select %p247, %s19, 1
      %p249 = scmp.lt.s32.totalorder %s246, 1
      %s250 = scalar_select %p249, %s246, 1
      %p251 = scmp.lt.s32.totalorder %s21, 0
      %s252 = scalar_select %p251, %s21, 0
      %s253 = sadd.s32 %s252, %s250
      %s254 = smul.addr %s248, 2
      %s255 = sadd.s32 %s253, %s254
      %s256 = smul.addr %s255, 4
      %s257 = scalar_lea.vmem %s3, %s256
      %s258 = smul.u32 2, %s20
      %v260 = vld [vmem:[%s237] sm:$0xff]
      %v261 = vld [vmem:[%s237 + $0x8] sm:$0xff]
      %v262 = vld [vmem:[%s237 + $0x10] sm:$0xff]
      %v263 = vld [vmem:[%s237 + $0x18] sm:$0xff]
      %v264 = vld [vmem:[%s237 + $0x20] sm:$0xf]
      %v265 = vld [vmem:[%s237 + $0x24] sm:$0xff]
      %v266 = vld [vmem:[%s237 + $0x2c] sm:$0xff]
      %v267 = vld [vmem:[%s237 + $0x34] sm:$0xff]
      %v268 = vld [vmem:[%s237 + $0x3c] sm:$0xff]
      %v269 = vld [vmem:[%s237 + $0x44] sm:$0xf]
      %v270 = vld [vmem:[%s242] sm:$0xf]
      %v271 = vld [vmem:[%s242 + $0x4] sm:$0xf]
      %v272 = vld [vmem:[%s242 + $0x8] sm:$0xf]
      %v273 = vld [vmem:[%s242 + $0xc] sm:$0xf]
      %v274 = vld [vmem:[%s242 + $0x10] sm:$0xf]
      %v275 = vld [vmem:[%s242 + $0x14] sm:$0xf]
      %v276 = vld [vmem:[%s242 + $0x18] sm:$0xf]
      %v277 = vld [vmem:[%s242 + $0x1c] sm:$0xf]
      %v278 = vld [vmem:[%s242 + $0x20] sm:$0xf]
      %v279 = vld [vmem:[%s242 + $0x24] sm:$0xf]
      %v280 = vld [vmem:[%s242 + $0x28] sm:$0xf]
      %v281 = vld [vmem:[%s242 + $0x2c] sm:$0xf]
      %v282 = vld [vmem:[%s242 + $0x30] sm:$0xf]
      %v283 = vld [vmem:[%s242 + $0x34] sm:$0xf]
      %v284 = vld [vmem:[%s242 + $0x38] sm:$0xf]
      %v285 = vld [vmem:[%s242 + $0x3c] sm:$0xf]
      %v286 = vld [vmem:[%s242 + $0x40] sm:$0xf]
      %v287 = vld [vmem:[%s242 + $0x44] sm:$0xf]
      %v288 = vld [vmem:[%s242 + $0x48] sm:$0xf]
      %v289 = vld [vmem:[%s242 + $0x4c] sm:$0xf]
      %v290 = vld [vmem:[%s242 + $0x50] sm:$0xf]
      %v291 = vld [vmem:[%s242 + $0x54] sm:$0xf]
      %v292 = vld [vmem:[%s242 + $0x58] sm:$0xf]
      %v293 = vld [vmem:[%s242 + $0x5c] sm:$0xf]
      %v294 = vld [vmem:[%s242 + $0x60] sm:$0xf]
      %v295 = vld [vmem:[%s242 + $0x64] sm:$0xf]
      %v296 = vld [vmem:[%s242 + $0x68] sm:$0xf]
      %v297 = vld [vmem:[%s242 + $0x6c] sm:$0xf]
      %v298 = vld [vmem:[%s242 + $0x70] sm:$0xf]
      %v299 = vld [vmem:[%s242 + $0x74] sm:$0xf]
      %v300 = vld [vmem:[%s242 + $0x78] sm:$0xf]
      %v301 = vld [vmem:[%s242 + $0x7c] sm:$0xf]
      %v302 = vld [vmem:[%s242 + $0x80] sm:$0xf]
      %v303 = vld [vmem:[%s242 + $0x84] sm:$0xf]
      %v304 = vld [vmem:[%s242 + $0x88] sm:$0xf]
      %v305 = vld [vmem:[%s242 + $0x8c] sm:$0xf]
      %v306 = vld [vmem:[%s242 + $0x90] sm:$0xf]
      %v307 = vld [vmem:[%s242 + $0x94] sm:$0xf]
      %v308 = vld [vmem:[%s242 + $0x98] sm:$0xf]
      %v309 = vld [vmem:[%s242 + $0x9c] sm:$0xf]
      %v310 = vld [vmem:[%s242 + $0xa0] sm:$0xf]
      %v311 = vld [vmem:[%s242 + $0xa4] sm:$0xf]
      %v312 = vld [vmem:[%s242 + $0xa8] sm:$0xf]
      %v313 = vld [vmem:[%s242 + $0xac] sm:$0xf]
      %v314 = vld [vmem:[%s242 + $0xb0] sm:$0xf]
      %v315 = vld [vmem:[%s242 + $0xb4] sm:$0xf]
      %v316 = vld [vmem:[%s242 + $0xb8] sm:$0xf]
      %v317 = vld [vmem:[%s242 + $0xbc] sm:$0xf]
      %v318 = vld [vmem:[%s242 + $0xc0] sm:$0xf]
      %v319 = vld [vmem:[%s242 + $0xc4] sm:$0xf]
      %v320 = vld [vmem:[%s242 + $0xc8] sm:$0xf]
      %v321 = vld [vmem:[%s242 + $0xcc] sm:$0xf]
      %v322 = vld [vmem:[%s242 + $0xd0] sm:$0xf]
      %v323 = vld [vmem:[%s242 + $0xd4] sm:$0xf]
      %v324 = vld [vmem:[%s242 + $0xd8] sm:$0xf]
      %v325 = vld [vmem:[%s242 + $0xdc] sm:$0xf]
      %v326 = vld [vmem:[%s242 + $0xe0] sm:$0xf]
      %v327 = vld [vmem:[%s242 + $0xe4] sm:$0xf]
      %v328 = vld [vmem:[%s242 + $0xe8] sm:$0xf]
      %v329 = vld [vmem:[%s242 + $0xec] sm:$0xf]
      %v330 = vld [vmem:[%s242 + $0xf0] sm:$0xf]
      %v331 = vld [vmem:[%s242 + $0xf4] sm:$0xf]
      %v332 = vld [vmem:[%s242 + $0xf8] sm:$0xf]
      %v333 = vld [vmem:[%s242 + $0xfc] sm:$0xf]
      %v334 = vld [vmem:[%s242 + $0x100] sm:$0xf]
      %v335 = vld [vmem:[%s242 + $0x104] sm:$0xf]
      %v336 = vld [vmem:[%s242 + $0x108] sm:$0xf]
      %v337 = vld [vmem:[%s242 + $0x10c] sm:$0xf]
      %v338 = vld [vmem:[%s242 + $0x110] sm:$0xf]
      %v339 = vld [vmem:[%s242 + $0x114] sm:$0xf]
      %v340 = vld [vmem:[%s242 + $0x118] sm:$0xf]
      %v341 = vld [vmem:[%s242 + $0x11c] sm:$0xf]
      %v342 = vld [vmem:[%s242 + $0x120] sm:$0xf]
      %v343 = vld [vmem:[%s242 + $0x124] sm:$0xf]
      %v344 = vld [vmem:[%s242 + $0x128] sm:$0xf]
      %v345 = vld [vmem:[%s242 + $0x12c] sm:$0xf]
      %v346 = vld [vmem:[%s242 + $0x130] sm:$0xf]
      %v347 = vld [vmem:[%s242 + $0x134] sm:$0xf]
      %v348 = vld [vmem:[%s242 + $0x138] sm:$0xf]
      %v349 = vld [vmem:[%s242 + $0x13c] sm:$0xf]
      %v350 = vld [vmem:[%s242 + $0x140] sm:$0xf]
      %v351 = vld [vmem:[%s242 + $0x144] sm:$0xf]
      %v352 = vld [vmem:[%s242 + $0x148] sm:$0xf]
      %v353 = vld [vmem:[%s242 + $0x14c] sm:$0xf]
      %v354 = vld [vmem:[%s242 + $0x150] sm:$0xf]
      %v355 = vld [vmem:[%s242 + $0x154] sm:$0xf]
      %v356 = vld [vmem:[%s242 + $0x158] sm:$0xf]
      %v357 = vld [vmem:[%s242 + $0x15c] sm:$0xf]
      %v358 = vld [vmem:[%s242 + $0x160] sm:$0xf]
      %v359 = vld [vmem:[%s242 + $0x164] sm:$0xf]
      %v360 = vld [vmem:[%s242 + $0x168] sm:$0xf]
      %v361 = vld [vmem:[%s242 + $0x16c] sm:$0xf]
      %v362 = vld [vmem:[%s242 + $0x170] sm:$0xf]
      %v363 = vld [vmem:[%s242 + $0x174] sm:$0xf]
      %v364 = vld [vmem:[%s242 + $0x178] sm:$0xf]
      %v365 = vld [vmem:[%s242 + $0x17c] sm:$0xf]
      %v366 = vld [vmem:[%s242 + $0x180] sm:$0xf]
      %v367 = vld [vmem:[%s242 + $0x184] sm:$0xf]
      %v368 = vld [vmem:[%s242 + $0x188] sm:$0xf]
      %v369 = vld [vmem:[%s242 + $0x18c] sm:$0xf]
      %v370 = vld [vmem:[%s242 + $0x190] sm:$0xf]
      %v371 = vld [vmem:[%s242 + $0x194] sm:$0xf]
      %v372 = vld [vmem:[%s242 + $0x198] sm:$0xf]
      %v373 = vld [vmem:[%s242 + $0x19c] sm:$0xf]
      %v374 = vld [vmem:[%s242 + $0x1a0] sm:$0xf]
      %v375 = vld [vmem:[%s242 + $0x1a4] sm:$0xf]
      %v376 = vld [vmem:[%s242 + $0x1a8] sm:$0xf]
      %v377 = vld [vmem:[%s242 + $0x1ac] sm:$0xf]
      %v378 = vld [vmem:[%s242 + $0x1b0] sm:$0xf]
      %v379 = vld [vmem:[%s242 + $0x1b4] sm:$0xf]
      %v380 = vld [vmem:[%s242 + $0x1b8] sm:$0xf]
      %v381 = vld [vmem:[%s242 + $0x1bc] sm:$0xf]
      %v382 = vld [vmem:[%s242 + $0x1c0] sm:$0xf]
      %v383 = vld [vmem:[%s242 + $0x1c4] sm:$0xf]
      %v384 = vld [vmem:[%s242 + $0x1c8] sm:$0xf]
      %v385 = vld [vmem:[%s242 + $0x1cc] sm:$0xf]
      %v386 = vld [vmem:[%s242 + $0x1d0] sm:$0xf]
      %v387 = vld [vmem:[%s242 + $0x1d4] sm:$0xf]
      %v388 = vld [vmem:[%s242 + $0x1d8] sm:$0xf]
      %v389 = vld [vmem:[%s242 + $0x1dc] sm:$0xf]
      %v390 = vld [vmem:[%s242 + $0x1e0] sm:$0xf]
      %v391 = vld [vmem:[%s242 + $0x1e4] sm:$0xf]
      %v392 = vld [vmem:[%s242 + $0x1e8] sm:$0xf]
      %v393 = vld [vmem:[%s242 + $0x1ec] sm:$0xf]
      %v394 = vld [vmem:[%s242 + $0x1f0] sm:$0xf]
      %v395 = vld [vmem:[%s242 + $0x1f4] sm:$0xf]
      %v396 = vld [vmem:[%s242 + $0x1f8] sm:$0xf]
      %v397 = vld [vmem:[%s242 + $0x1fc] sm:$0xf]
      %v398 = vld [vmem:[%s242 + $0x200] sm:$0xf]
      %v399 = vld [vmem:[%s242 + $0x204] sm:$0xf]
      %v400 = vld [vmem:[%s242 + $0x208] sm:$0xf]
      %v401 = vld [vmem:[%s242 + $0x20c] sm:$0xf]
      %v402 = vld [vmem:[%s242 + $0x210] sm:$0xf]
      %v403 = vld [vmem:[%s242 + $0x214] sm:$0xf]
      %v404 = vld [vmem:[%s242 + $0x218] sm:$0xf]
      %v405 = vld [vmem:[%s242 + $0x21c] sm:$0xf]
      %v406 = vld [vmem:[%s242 + $0x220] sm:$0xf]
      %v407 = vld [vmem:[%s242 + $0x224] sm:$0xf]
      %v408 = vld [vmem:[%s242 + $0x228] sm:$0xf]
      %v409 = vld [vmem:[%s242 + $0x22c] sm:$0xf]
      %v410 = vld [vmem:[%s242 + $0x230] sm:$0xf]
      %v411 = vld [vmem:[%s242 + $0x234] sm:$0xf]
      %v412 = vld [vmem:[%s242 + $0x238] sm:$0xf]
      %v413 = vld [vmem:[%s242 + $0x23c] sm:$0xf]
      %v414 = vld [vmem:[%s245] sm:$0x1]
      %v416 = vlaneseq
      %v417 = vshrl.u32 %v416, 7
      %v418 = vsub.s32 0, %v417
      %v419 = vrot.slane %v414, %v418
      %v431 = vunpack.c.l.b16 %v260
      %v432 = vunpack.c.h.b16 %v260
      %v433 = vunpack.c.l.b16 %v261
      %v434 = vunpack.c.h.b16 %v261
      %v435 = vunpack.c.l.b16 %v262
      %v436 = vunpack.c.h.b16 %v262
      %v437 = vunpack.c.l.b16 %v263
      %v438 = vunpack.c.h.b16 %v263
      %v439 = vunpack.c.l.b16 %v264
      %v440 = vunpack.c.l.b16 %v265
      %v441 = vunpack.c.h.b16 %v265
      %v442 = vunpack.c.l.b16 %v266
      %v443 = vunpack.c.h.b16 %v266
      %v444 = vunpack.c.l.b16 %v267
      %v445 = vunpack.c.h.b16 %v267
      %v446 = vunpack.c.l.b16 %v268
      %v447 = vunpack.c.h.b16 %v268
      %v448 = vunpack.c.l.b16 %v269
      %v449 = vpack.c.b16 %v440, %v431
      %v450 = vpack.c.b16 %v441, %v432
      %v451 = vpack.c.b16 %v442, %v433
      %v452 = vpack.c.b16 %v443, %v434
      %v453 = vpack.c.b16 %v444, %v435
      %v454 = vpack.c.b16 %v445, %v436
      %v455 = vpack.c.b16 %v446, %v437
      %v456 = vpack.c.b16 %v447, %v438
      %v457 = vpack.c.b16 %v448, %v439
      %v611 = vunpack.c.l.b16 %v270
      %v612 = vunpack.c.l.b16 %v271
      %v613 = vunpack.c.l.b16 %v272
      %v614 = vunpack.c.l.b16 %v273
      %v615 = vunpack.c.l.b16 %v274
      %v616 = vunpack.c.l.b16 %v275
      %v617 = vunpack.c.l.b16 %v276
      %v618 = vunpack.c.l.b16 %v277
      %v619 = vunpack.c.l.b16 %v278
      %v620 = vunpack.c.l.b16 %v279
      %v621 = vunpack.c.l.b16 %v280
      %v622 = vunpack.c.l.b16 %v281
      %v623 = vunpack.c.l.b16 %v282
      %v624 = vunpack.c.l.b16 %v283
      %v625 = vunpack.c.l.b16 %v284
      %v626 = vunpack.c.l.b16 %v285
      %v627 = vunpack.c.l.b16 %v286
      %v628 = vunpack.c.l.b16 %v287
      %v629 = vunpack.c.l.b16 %v288
      %v630 = vunpack.c.l.b16 %v289
      %v631 = vunpack.c.l.b16 %v290
      %v632 = vunpack.c.l.b16 %v291
      %v633 = vunpack.c.l.b16 %v292
      %v634 = vunpack.c.l.b16 %v293
      %v635 = vunpack.c.l.b16 %v294
      %v636 = vunpack.c.l.b16 %v295
      %v637 = vunpack.c.l.b16 %v296
      %v638 = vunpack.c.l.b16 %v297
      %v639 = vunpack.c.l.b16 %v298
      %v640 = vunpack.c.l.b16 %v299
      %v641 = vunpack.c.l.b16 %v300
      %v642 = vunpack.c.l.b16 %v301
      %v643 = vunpack.c.l.b16 %v302
      %v644 = vunpack.c.l.b16 %v303
      %v645 = vunpack.c.l.b16 %v304
      %v646 = vunpack.c.l.b16 %v305
      %v647 = vunpack.c.l.b16 %v306
      %v648 = vunpack.c.l.b16 %v307
      %v649 = vunpack.c.l.b16 %v308
      %v650 = vunpack.c.l.b16 %v309
      %v651 = vunpack.c.l.b16 %v310
      %v652 = vunpack.c.l.b16 %v311
      %v653 = vunpack.c.l.b16 %v312
      %v654 = vunpack.c.l.b16 %v313
      %v655 = vunpack.c.l.b16 %v314
      %v656 = vunpack.c.l.b16 %v315
      %v657 = vunpack.c.l.b16 %v316
      %v658 = vunpack.c.l.b16 %v317
      %v659 = vunpack.c.l.b16 %v318
      %v660 = vunpack.c.l.b16 %v319
      %v661 = vunpack.c.l.b16 %v320
      %v662 = vunpack.c.l.b16 %v321
      %v663 = vunpack.c.l.b16 %v322
      %v664 = vunpack.c.l.b16 %v323
      %v665 = vunpack.c.l.b16 %v324
      %v666 = vunpack.c.l.b16 %v325
      %v667 = vunpack.c.l.b16 %v326
      %v668 = vunpack.c.l.b16 %v327
      %v669 = vunpack.c.l.b16 %v328
      %v670 = vunpack.c.l.b16 %v329
      %v671 = vunpack.c.l.b16 %v330
      %v672 = vunpack.c.l.b16 %v331
      %v673 = vunpack.c.l.b16 %v332
      %v674 = vunpack.c.l.b16 %v333
      %v675 = vunpack.c.l.b16 %v334
      %v676 = vunpack.c.l.b16 %v335
      %v677 = vunpack.c.l.b16 %v336
      %v678 = vunpack.c.l.b16 %v337
      %v679 = vunpack.c.l.b16 %v338
      %v680 = vunpack.c.l.b16 %v339
      %v681 = vunpack.c.l.b16 %v340
      %v682 = vunpack.c.l.b16 %v341
      %v683 = vunpack.c.l.b16 %v342
      %v684 = vunpack.c.l.b16 %v343
      %v685 = vunpack.c.l.b16 %v344
      %v686 = vunpack.c.l.b16 %v345
      %v687 = vunpack.c.l.b16 %v346
      %v688 = vunpack.c.l.b16 %v347
      %v689 = vunpack.c.l.b16 %v348
      %v690 = vunpack.c.l.b16 %v349
      %v691 = vunpack.c.l.b16 %v350
      %v692 = vunpack.c.l.b16 %v351
      %v693 = vunpack.c.l.b16 %v352
      %v694 = vunpack.c.l.b16 %v353
      %v695 = vunpack.c.l.b16 %v354
      %v696 = vunpack.c.l.b16 %v355
      %v697 = vunpack.c.l.b16 %v356
      %v698 = vunpack.c.l.b16 %v357
      %v699 = vunpack.c.l.b16 %v358
      %v700 = vunpack.c.l.b16 %v359
      %v701 = vunpack.c.l.b16 %v360
      %v702 = vunpack.c.l.b16 %v361
      %v703 = vunpack.c.l.b16 %v362
      %v704 = vunpack.c.l.b16 %v363
      %v705 = vunpack.c.l.b16 %v364
      %v706 = vunpack.c.l.b16 %v365
      %v707 = vunpack.c.l.b16 %v366
      %v708 = vunpack.c.l.b16 %v367
      %v709 = vunpack.c.l.b16 %v368
      %v710 = vunpack.c.l.b16 %v369
      %v711 = vunpack.c.l.b16 %v370
      %v712 = vunpack.c.l.b16 %v371
      %v713 = vunpack.c.l.b16 %v372
      %v714 = vunpack.c.l.b16 %v373
      %v715 = vunpack.c.l.b16 %v374
      %v716 = vunpack.c.l.b16 %v375
      %v717 = vunpack.c.l.b16 %v376
      %v718 = vunpack.c.l.b16 %v377
      %v719 = vunpack.c.l.b16 %v378
      %v720 = vunpack.c.l.b16 %v379
      %v721 = vunpack.c.l.b16 %v380
      %v722 = vunpack.c.l.b16 %v381
      %v723 = vunpack.c.l.b16 %v382
      %v724 = vunpack.c.l.b16 %v383
      %v725 = vunpack.c.l.b16 %v384
      %v726 = vunpack.c.l.b16 %v385
      %v727 = vunpack.c.l.b16 %v386
      %v728 = vunpack.c.l.b16 %v387
      %v729 = vunpack.c.l.b16 %v388
      %v730 = vunpack.c.l.b16 %v389
      %v731 = vunpack.c.l.b16 %v390
      %v732 = vunpack.c.l.b16 %v391
      %v733 = vunpack.c.l.b16 %v392
      %v734 = vunpack.c.l.b16 %v393
      %v735 = vunpack.c.l.b16 %v394
      %v736 = vunpack.c.l.b16 %v395
      %v737 = vunpack.c.l.b16 %v396
      %v738 = vunpack.c.l.b16 %v397
      %v739 = vunpack.c.l.b16 %v398
      %v740 = vunpack.c.l.b16 %v399
      %v741 = vunpack.c.l.b16 %v400
      %v742 = vunpack.c.l.b16 %v401
      %v743 = vunpack.c.l.b16 %v402
      %v744 = vunpack.c.l.b16 %v403
      %v745 = vunpack.c.l.b16 %v404
      %v746 = vunpack.c.l.b16 %v405
      %v747 = vunpack.c.l.b16 %v406
      %v748 = vunpack.c.l.b16 %v407
      %v749 = vunpack.c.l.b16 %v408
      %v750 = vunpack.c.l.b16 %v409
      %v751 = vunpack.c.l.b16 %v410
      %v752 = vunpack.c.l.b16 %v411
      %v753 = vunpack.c.l.b16 %v412
      %v754 = vunpack.c.l.b16 %v413
      %v755 = vpack.c.b16 %v612, %v611
      %v756 = vpack.c.b16 %v614, %v613
      %v757 = vpack.c.b16 %v616, %v615
      %v758 = vpack.c.b16 %v618, %v617
      %v759 = vpack.c.b16 %v620, %v619
      %v760 = vpack.c.b16 %v622, %v621
      %v761 = vpack.c.b16 %v624, %v623
      %v762 = vpack.c.b16 %v626, %v625
      %v763 = vpack.c.b16 %v628, %v627
      %v764 = vpack.c.b16 %v630, %v629
      %v765 = vpack.c.b16 %v632, %v631
      %v766 = vpack.c.b16 %v634, %v633
      %v767 = vpack.c.b16 %v636, %v635
      %v768 = vpack.c.b16 %v638, %v637
      %v769 = vpack.c.b16 %v640, %v639
      %v770 = vpack.c.b16 %v642, %v641
      %v771 = vpack.c.b16 %v644, %v643
      %v772 = vpack.c.b16 %v646, %v645
      %v773 = vpack.c.b16 %v648, %v647
      %v774 = vpack.c.b16 %v650, %v649
      %v775 = vpack.c.b16 %v652, %v651
      %v776 = vpack.c.b16 %v654, %v653
      %v777 = vpack.c.b16 %v656, %v655
      %v778 = vpack.c.b16 %v658, %v657
      %v779 = vpack.c.b16 %v660, %v659
      %v780 = vpack.c.b16 %v662, %v661
      %v781 = vpack.c.b16 %v664, %v663
      %v782 = vpack.c.b16 %v666, %v665
      %v783 = vpack.c.b16 %v668, %v667
      %v784 = vpack.c.b16 %v670, %v669
      %v785 = vpack.c.b16 %v672, %v671
      %v786 = vpack.c.b16 %v674, %v673
      %v787 = vpack.c.b16 %v676, %v675
      %v788 = vpack.c.b16 %v678, %v677
      %v789 = vpack.c.b16 %v680, %v679
      %v790 = vpack.c.b16 %v682, %v681
      %v791 = vpack.c.b16 %v684, %v683
      %v792 = vpack.c.b16 %v686, %v685
      %v793 = vpack.c.b16 %v688, %v687
      %v794 = vpack.c.b16 %v690, %v689
      %v795 = vpack.c.b16 %v692, %v691
      %v796 = vpack.c.b16 %v694, %v693
      %v797 = vpack.c.b16 %v696, %v695
      %v798 = vpack.c.b16 %v698, %v697
      %v799 = vpack.c.b16 %v700, %v699
      %v800 = vpack.c.b16 %v702, %v701
      %v801 = vpack.c.b16 %v704, %v703
      %v802 = vpack.c.b16 %v706, %v705
      %v803 = vpack.c.b16 %v708, %v707
      %v804 = vpack.c.b16 %v710, %v709
      %v805 = vpack.c.b16 %v712, %v711
      %v806 = vpack.c.b16 %v714, %v713
      %v807 = vpack.c.b16 %v716, %v715
      %v808 = vpack.c.b16 %v718, %v717
      %v809 = vpack.c.b16 %v720, %v719
      %v810 = vpack.c.b16 %v722, %v721
      %v811 = vpack.c.b16 %v724, %v723
      %v812 = vpack.c.b16 %v726, %v725
      %v813 = vpack.c.b16 %v728, %v727
      %v814 = vpack.c.b16 %v730, %v729
      %v815 = vpack.c.b16 %v732, %v731
      %v816 = vpack.c.b16 %v734, %v733
      %v817 = vpack.c.b16 %v736, %v735
      %v818 = vpack.c.b16 %v738, %v737
      %v819 = vpack.c.b16 %v740, %v739
      %v820 = vpack.c.b16 %v742, %v741
      %v821 = vpack.c.b16 %v744, %v743
      %v822 = vpack.c.b16 %v746, %v745
      %v823 = vpack.c.b16 %v748, %v747
      %v824 = vpack.c.b16 %v750, %v749
      %v825 = vpack.c.b16 %v752, %v751
      %v826 = vpack.c.b16 %v754, %v753
      %899 = vmatprep.subr.bf16.mxu0 0
      %900 = vmatpush1.bf16.msra.mxu0 %v755
      %901 = vmatprep.subr.bf16.mxu0 0
      %902 = vmatpush1.bf16.msra.mxu0 %v756
      %903 = vmatprep.subr.bf16.mxu0 0
      %904 = vmatpush1.bf16.msra.mxu0 %v757
      %905 = vmatprep.subr.bf16.mxu0 0
      %906 = vmatpush1.bf16.msra.mxu0 %v758
      %907 = vmatprep.subr.bf16.mxu0 0
      %908 = vmatpush1.bf16.msra.mxu0 %v759
      %909 = vmatprep.subr.bf16.mxu0 0
      %910 = vmatpush1.bf16.msra.mxu0 %v760
      %911 = vmatprep.subr.bf16.mxu0 0
      %912 = vmatpush1.bf16.msra.mxu0 %v761
      %913 = vmatprep.subr.bf16.mxu0 0
      %914 = vmatpush1.bf16.msra.mxu0 %v762
      %915 = vmatprep.subr.bf16.mxu0 0
      %916 = vmatpush1.bf16.msra.mxu0 %v763
      %917 = vmatprep.subr.bf16.mxu0 0
      %918 = vmatpush1.bf16.msra.mxu0 %v764
      %919 = vmatprep.subr.bf16.mxu0 0
      %920 = vmatpush1.bf16.msra.mxu0 %v765
      %921 = vmatprep.subr.bf16.mxu0 0
      %922 = vmatpush1.bf16.msra.mxu0 %v766
      %923 = vmatprep.subr.bf16.mxu0 0
      %924 = vmatpush1.bf16.msra.mxu0 %v767
      %925 = vmatprep.subr.bf16.mxu0 0
      %926 = vmatpush1.bf16.msra.mxu0 %v768
      %927 = vmatprep.subr.bf16.mxu0 0
      %928 = vmatpush1.bf16.msra.mxu0 %v769
      %929 = vmatprep.subr.bf16.mxu0 0
      %930 = vmatpush1.bf16.msra.mxu0 %v770
      %931 = vmatprep.mubr.bf16.mxu0 %v450
      %932 = vmatmul.mubr.bf16.gmra.mrb[0].mxu0 %v449
      %v933 = vpop.f32.mrb[0].mxu0
      %v934 = vadd.f32 %v419, %v933
      %v935 = vpop.f32.mrb[0].mxu0
      %v936 = vpop.f32.mrb[0].mxu0
      %v937 = vadd.f32 %v419, %v936
      %v938 = vpop.f32.mrb[0].mxu0
      %939 = vdwg.mxu0
      %940 = vmatprep.subr.bf16.mxu0 0
      %941 = vmatpush1.bf16.msra.mxu0 %v771
      %942 = vmatprep.subr.bf16.mxu0 0
      %943 = vmatpush1.bf16.msra.mxu0 %v772
      %944 = vmatprep.subr.bf16.mxu0 0
      %945 = vmatpush1.bf16.msra.mxu0 %v773
      %946 = vmatprep.subr.bf16.mxu0 0
      %947 = vmatpush1.bf16.msra.mxu0 %v774
      %948 = vmatprep.subr.bf16.mxu0 0
      %949 = vmatpush1.bf16.msra.mxu0 %v775
      %950 = vmatprep.subr.bf16.mxu0 0
      %951 = vmatpush1.bf16.msra.mxu0 %v776
      %952 = vmatprep.subr.bf16.mxu0 0
      %953 = vmatpush1.bf16.msra.mxu0 %v777
      %954 = vmatprep.subr.bf16.mxu0 0
      %955 = vmatpush1.bf16.msra.mxu0 %v778
      %956 = vmatprep.subr.bf16.mxu0 0
      %957 = vmatpush1.bf16.msra.mxu0 %v779
      %958 = vmatprep.subr.bf16.mxu0 0
      %959 = vmatpush1.bf16.msra.mxu0 %v780
      %960 = vmatprep.subr.bf16.mxu0 0
      %961 = vmatpush1.bf16.msra.mxu0 %v781
      %962 = vmatprep.subr.bf16.mxu0 0
      %963 = vmatpush1.bf16.msra.mxu0 %v782
      %964 = vmatprep.subr.bf16.mxu0 0
      %965 = vmatpush1.bf16.msra.mxu0 %v783
      %966 = vmatprep.subr.bf16.mxu0 0
      %967 = vmatpush1.bf16.msra.mxu0 %v784
      %968 = vmatprep.subr.bf16.mxu0 0
      %969 = vmatpush1.bf16.msra.mxu0 %v785
      %970 = vmatprep.subr.bf16.mxu0 0
      %971 = vmatpush1.bf16.msra.mxu0 %v786
      %972 = vmatprep.mubr.bf16.mxu0 %v452
      %973 = vmatmul.mubr.bf16.gmra.mrb[0].mxu0 %v451
      %v974 = vpop.f32.mrb[0].mxu0
      %v975 = vadd.f32 %v934, %v974
      %v976 = vpop.f32.mrb[0].mxu0
      %v977 = vpop.f32.mrb[0].mxu0
      %v978 = vadd.f32 %v937, %v977
      %v979 = vpop.f32.mrb[0].mxu0
      %980 = vdwg.mxu0
      %981 = vmatprep.subr.bf16.mxu0 0
      %982 = vmatpush1.bf16.msra.mxu0 %v787
      %983 = vmatprep.subr.bf16.mxu0 0
      %984 = vmatpush1.bf16.msra.mxu0 %v788
      %985 = vmatprep.subr.bf16.mxu0 0
      %986 = vmatpush1.bf16.msra.mxu0 %v789
      %987 = vmatprep.subr.bf16.mxu0 0
      %988 = vmatpush1.bf16.msra.mxu0 %v790
      %989 = vmatprep.subr.bf16.mxu0 0
      %990 = vmatpush1.bf16.msra.mxu0 %v791
      %991 = vmatprep.subr.bf16.mxu0 0
      %992 = vmatpush1.bf16.msra.mxu0 %v792
      %993 = vmatprep.subr.bf16.mxu0 0
      %994 = vmatpush1.bf16.msra.mxu0 %v793
      %995 = vmatprep.subr.bf16.mxu0 0
      %996 = vmatpush1.bf16.msra.mxu0 %v794
      %997 = vmatprep.subr.bf16.mxu0 0
      %998 = vmatpush1.bf16.msra.mxu0 %v795
      %999 = vmatprep.subr.bf16.mxu0 0
      %1000 = vmatpush1.bf16.msra.mxu0 %v796
      %1001 = vmatprep.subr.bf16.mxu0 0
      %1002 = vmatpush1.bf16.msra.mxu0 %v797
      %1003 = vmatprep.subr.bf16.mxu0 0
      %1004 = vmatpush1.bf16.msra.mxu0 %v798
      %1005 = vmatprep.subr.bf16.mxu0 0
      %1006 = vmatpush1.bf16.msra.mxu0 %v799
      %1007 = vmatprep.subr.bf16.mxu0 0
      %1008 = vmatpush1.bf16.msra.mxu0 %v800
      %1009 = vmatprep.subr.bf16.mxu0 0
      %1010 = vmatpush1.bf16.msra.mxu0 %v801
      %1011 = vmatprep.subr.bf16.mxu0 0
      %1012 = vmatpush1.bf16.msra.mxu0 %v802
      %1013 = vmatprep.mubr.bf16.mxu0 %v454
      %1014 = vmatmul.mubr.bf16.gmra.mrb[0].mxu0 %v453
      %v1015 = vpop.f32.mrb[0].mxu0
      %v1016 = vadd.f32 %v975, %v1015
      %v1017 = vpop.f32.mrb[0].mxu0
      %v1018 = vpop.f32.mrb[0].mxu0
      %v1019 = vadd.f32 %v978, %v1018
      %v1020 = vpop.f32.mrb[0].mxu0
      %1021 = vdwg.mxu0
      %1022 = vmatprep.subr.bf16.mxu0 0
      %1023 = vmatpush1.bf16.msra.mxu0 %v803
      %1024 = vmatprep.subr.bf16.mxu0 0
      %1025 = vmatpush1.bf16.msra.mxu0 %v804
      %1026 = vmatprep.subr.bf16.mxu0 0
      %1027 = vmatpush1.bf16.msra.mxu0 %v805
      %1028 = vmatprep.subr.bf16.mxu0 0
      %1029 = vmatpush1.bf16.msra.mxu0 %v806
      %1030 = vmatprep.subr.bf16.mxu0 0
      %1031 = vmatpush1.bf16.msra.mxu0 %v807
      %1032 = vmatprep.subr.bf16.mxu0 0
      %1033 = vmatpush1.bf16.msra.mxu0 %v808
      %1034 = vmatprep.subr.bf16.mxu0 0
      %1035 = vmatpush1.bf16.msra.mxu0 %v809
      %1036 = vmatprep.subr.bf16.mxu0 0
      %1037 = vmatpush1.bf16.msra.mxu0 %v810
      %1038 = vmatprep.subr.bf16.mxu0 0
      %1039 = vmatpush1.bf16.msra.mxu0 %v811
      %1040 = vmatprep.subr.bf16.mxu0 0
      %1041 = vmatpush1.bf16.msra.mxu0 %v812
      %1042 = vmatprep.subr.bf16.mxu0 0
      %1043 = vmatpush1.bf16.msra.mxu0 %v813
      %1044 = vmatprep.subr.bf16.mxu0 0
      %1045 = vmatpush1.bf16.msra.mxu0 %v814
      %1046 = vmatprep.subr.bf16.mxu0 0
      %1047 = vmatpush1.bf16.msra.mxu0 %v815
      %1048 = vmatprep.subr.bf16.mxu0 0
      %1049 = vmatpush1.bf16.msra.mxu0 %v816
      %1050 = vmatprep.subr.bf16.mxu0 0
      %1051 = vmatpush1.bf16.msra.mxu0 %v817
      %1052 = vmatprep.subr.bf16.mxu0 0
      %1053 = vmatpush1.bf16.msra.mxu0 %v818
      %1054 = vmatprep.mubr.bf16.mxu0 %v456
      %1055 = vmatmul.mubr.bf16.gmra.mrb[0].mxu0 %v455
      %v1056 = vpop.f32.mrb[0].mxu0
      %v1057 = vadd.f32 %v1016, %v1056
      %v1058 = vpop.f32.mrb[0].mxu0
      %v1059 = vpop.f32.mrb[0].mxu0
      %v1060 = vadd.f32 %v1019, %v1059
      %v1061 = vpop.f32.mrb[0].mxu0
      %1062 = vdwg.mxu0
      %1063 = vmatprep.subr.bf16.mxu0 0
      %1064 = vmatpush1.bf16.msra.mxu0 %v819
      %1065 = vmatprep.subr.bf16.mxu0 0
      %1066 = vmatpush1.bf16.msra.mxu0 %v820
      %1067 = vmatprep.subr.bf16.mxu0 0
      %1068 = vmatpush1.bf16.msra.mxu0 %v821
      %1069 = vmatprep.subr.bf16.mxu0 0
      %1070 = vmatpush1.bf16.msra.mxu0 %v822
      %1071 = vmatprep.subr.bf16.mxu0 0
      %1072 = vmatpush1.bf16.msra.mxu0 %v823
      %1073 = vmatprep.subr.bf16.mxu0 0
      %1074 = vmatpush1.bf16.msra.mxu0 %v824
      %1075 = vmatprep.subr.bf16.mxu0 0
      %1076 = vmatpush1.bf16.msra.mxu0 %v825
      %1077 = vmatprep.subr.bf16.mxu0 0
      %1078 = vmatpush1.bf16.msra.mxu0 %v826
      %1079 = vmatprep.subr.bf16.mxu0 0
      %1080 = vmatpush1.bf16.msra.mxu0 0
      %1081 = vmatprep.subr.bf16.mxu0 0
      %1082 = vmatpush1.bf16.msra.mxu0 0
      %1083 = vmatprep.subr.bf16.mxu0 0
      %1084 = vmatpush1.bf16.msra.mxu0 0
      %1085 = vmatprep.subr.bf16.mxu0 0
      %1086 = vmatpush1.bf16.msra.mxu0 0
      %1087 = vmatprep.subr.bf16.mxu0 0
      %1088 = vmatpush1.bf16.msra.mxu0 0
      %1089 = vmatprep.subr.bf16.mxu0 0
      %1090 = vmatpush1.bf16.msra.mxu0 0
      %1091 = vmatprep.subr.bf16.mxu0 0
      %1092 = vmatpush1.bf16.msra.mxu0 0
      %1093 = vmatprep.subr.bf16.mxu0 0
      %1094 = vmatpush1.bf16.msra.mxu0 0
      %1095 = vmatprep.mubr.bf16.mxu0 0
      %1096 = vmatmul.mubr.bf16.gmra.mrb[0].mxu0 %v457
      %v1097 = vpop.f32.mrb[0].mxu0
      %v1098 = vadd.f32 %v1057, %v1097
      %v1099 = vpop.f32.mrb[0].mxu0
      %v1100 = vpop.f32.mrb[0].mxu0
      %v1101 = vadd.f32 %v1060, %v1100
      %v1102 = vpop.f32.mrb[0].mxu0
      %1103 = vdwg.mxu0
      %v1104 = vmax.f32 %v1098, 0.0
      %v1105 = vmax.f32 %v1101, 0.0
      %v1106 = vpack.c.bf16 %v1105, %v1104
      %v1108 = vunpack.c.l.b16 %v1106
      %v1109 = vunpack.c.h.b16 %v1106
      %v1110 = vpack.c.b16 %v1108, %v1108
      %v1111 = vpack.c.b16 %v1109, %v1109
      %1114 = vst [vmem:[%s257] sm:$0xf] %v1110
      %1115 = vst [vmem:[%s257 + $0x4] sm:$0xf] %v1111
      %s1116 = smul.u32 2, %s20
      %p1117 = scmp.lt.s32.totalorder %s19, 1
      %s1118 = scalar_select %p1117, %s19, 1
      %p1119 = scmp.lt.s32.totalorder %s1116, 1
      %s1120 = scalar_select %p1119, %s1116, 1
      %p1121 = scmp.lt.s32.totalorder %s21, 0
      %s1122 = scalar_select %p1121, %s21, 0
      %s1123 = sadd.s32 %s1122, %s1120
      %s1124 = smul.addr %s1118, 2
      %s1125 = sadd.s32 %s1123, %s1124
      %s1126 = smul.addr %s1125, 4
      %s1127 = scalar_lea.vmem %s3, %s1126
      // Predicated region
      $region33: #{centernet_forward.6} parent=31 // pred_check
        %p1128 = pneg %p135
      $region34: #{centernet_forward.6} parent=31 // pred_check_branch
        %1130 = sbr.rel (%p1128) target = $region36
      $region35: #{centernet_forward.6} parent=31 // pred_region
        %s1131 = smul.u32 2, %s20
      $region36: #{centernet_forward.6} parent=31 // pred_fallthru
        _
    $region32: #{centernet_forward.6} parent=5 // pred_fallthru
      _
    %p1132 = scmp.le.s32.totalorder 2, %s9
    // Predicated region
    $region37: #{centernet_forward.6} parent=5 // pred_check
      %p1133 = pneg %p1132
    $region38: #{centernet_forward.6} parent=5 // pred_check_branch
      %1135 = sbr.rel (%p1133) target = $region40
    $region39: #{centernet_forward.6} parent=5 // pred_region
      %s1136 = ssub.s32 %s9, 2
      // Predicated region
      $region41: #{centernet_forward.6} parent=39 // pred_check
        %p1137 = pneg %p141
      $region42: #{centernet_forward.6} parent=39 // pred_check_branch
        %1139 = sbr.rel (%p1137) target = $region44
      $region43: #{centernet_forward.6} parent=39 // pred_region
        %s1140 = smul.u32 2, %s23
        %p1141 = scmp.lt.s32.totalorder %s22, 1
        %s1142 = scalar_select %p1141, %s22, 1
        %p1143 = scmp.lt.s32.totalorder %s1140, 1
        %s1144 = scalar_select %p1143, %s1140, 1
        %p1145 = scmp.lt.s32.totalorder %s24, 0
        %s1146 = scalar_select %p1145, %s24, 0
        %s1147 = sadd.s32 %s1146, %s1144
        %s1148 = smul.addr %s1142, 2
        %s1149 = sadd.s32 %s1147, %s1148
        %s1150 = smul.addr %s1149, 4
        %s1151 = scalar_lea.vmem %s3, %s1150
      $region44: #{centernet_forward.6} parent=39 // pred_fallthru
        _
    $region40: #{centernet_forward.6} parent=5 // pred_fallthru
      _
  $region6: #{centernet_forward.6} parent=0 // loop_footer
    %s13 = sadd.s32 1, %s9
  $region7: #{centernet_forward.6} parent=0 // loop_footer_branch
    %8 = sbr.rel target = $region3
  $region8: #{centernet_forward.6} parent=0 // loop_exit
    _

// kernel: centernet_forward.7
$region0: #{centernet_forward.7}
  #allocation0 [shape = 'u32[]', space=smem, size = 0x4, offset = 0x4, fixed_abs, tag = 'smem constant byte address 0x4 - core index']
  #allocation1 [shape = 'u32[144,128]{1,0:T(1,128)}', space=vmem, size = 0x12000, scoped, tag = 'internal scratch']
  %s0 = inlined_call_operand.vmem [shape: bf16[2,16,1152], index: 0, kind: input, shape index: {}]
  %s1 = inlined_call_operand.vmem [shape: bf16[1,1152,256], index: 1, kind: input, shape index: {}]
  %s2 = inlined_call_operand.vmem [shape: f32[1,1,256], index: 2, kind: input, shape index: {}]
  %s3 = inlined_call_operand.vmem [shape: bf16[2,16,256], index: 3, kind: output, shape index: {}]
  %s4 = sld [smem:[#allocation0]]
  $region45: #{centernet_forward.7} parent=0
    _
  %s6 = ssub.s32 1, %s4
  %s7 = scalar_select 0, %s6, %s4
  loop: start=0, step=1, limit=4
  $region2: #{centernet_forward.7} parent=0 // loop_pre_header
    _
  $region3: #{centernet_forward.7} parent=0 // loop_header
    %s9 = sphi 0, %s13
    %p10 = scmp.ge.s32.totalorder %s9, 4
    %s16 = sphi 0, %s35
    %s17 = sphi 0, %s31
    %s18 = sphi 0, %s27
    %s19 = sphi 0, %s16
    %s20 = sphi 0, %s17
    %s21 = sphi 0, %s18
    %s22 = sphi 0, %s19
    %s23 = sphi 0, %s20
    %s24 = sphi 0, %s21
    %s40 = sphi 0, %s42
    %s43 = sphi 0, %s40
    %s44 = sphi 0, %s43
    %s60 = sphi 0, %s44
    %s66 = sphi 0, %s68
    %s69 = sphi 0, %s66
    %s70 = sphi 0, %s69
    %s86 = sphi 0, %s70
    %s92 = sphi 0, %s94
    %s95 = sphi 0, %s92
    %s96 = sphi 0, %s95
    %s112 = sphi 0, %s96
    %s122 = sphi 0, %s124
    %s125 = sphi 0, %s122
    %s126 = sphi 0, %s125
    %s142 = sphi 0, %s126
  $region4: #{centernet_forward.7} parent=0 // loop_header_branch
    %12 = sbr.rel (%p10) target = $region8
  $region5: #{centernet_forward.7} parent=0 // loop_body
    %s14 = ssub.s32 %s9, 1
    %s15 = ssub.s32 %s9, 2
    %s25 = sadd.s32 1, %s18
    %p26 = scmp.ge.s32.totalorder %s25, 1
    %s27 = scalar_select %p26, 0, %s25
    %s28 = sadd.s32 1, %s17
    %s29 = scalar_select %p26, %s28, %s17
    %p30 = scmp.ge.s32.totalorder %s29, 1
    %s31 = scalar_select %p30, 0, %s29
    %s32 = sadd.s32 1, %s16
    %s33 = scalar_select %p30, %s32, %s16
    %p34 = scmp.ge.s32.totalorder %s33, 2
    %s35 = scalar_select %p34, 0, %s33
    %s36 = ssub.s32 %s16, %s35
    %s37 = ssub.s32 %s17, %s31
    %s38 = sor.u32 %s36, %s37
    %p39 = scmp.eq.s32.totalorder %s38, 0
    %s41 = sadd.s32 %s40, 1
    %s42 = scalar_select %p39, %s40, %s41
    %p45 = pneg %p39
    %p46 = scmp.eq.s32.totalorder %s9, 1
    %p47 = por %p45, %p46
    %p48 = scmp.ne.s32.totalorder %s40, %s43
    %p49 = scmp.eq.s32.totalorder %s9, 0
    %p50 = por %p48, %p49
    %p51 = scmp.ne.s32.totalorder %s40, %s43
    %p52 = scmp.eq.s32.totalorder %s14, 1
    %p53 = por %p51, %p52
    %p54 = scmp.ne.s32.totalorder %s43, %s44
    %p55 = scmp.eq.s32.totalorder %s14, 0
    %p56 = por %p54, %p55
    %p57 = scmp.ne.s32.totalorder %s43, %s44
    %p58 = scmp.eq.s32.totalorder %s15, 1
    %p59 = por %p57, %p58
    %p61 = scmp.ne.s32.totalorder %s44, %s60
    %p62 = scmp.eq.s32.totalorder %s15, 0
    %p63 = por %p61, %p62
    %s64 = ssub.s32 %s18, %s27
    %p65 = scmp.eq.s32.totalorder %s64, 0
    %s67 = sadd.s32 %s66, 1
    %s68 = scalar_select %p65, %s66, %s67
    %p71 = pneg %p65
    %p72 = scmp.eq.s32.totalorder %s9, 1
    %p73 = por %p71, %p72
    %p74 = scmp.ne.s32.totalorder %s66, %s69
    %p75 = scmp.eq.s32.totalorder %s9, 0
    %p76 = por %p74, %p75
    %p77 = scmp.ne.s32.totalorder %s66, %s69
    %p78 = scmp.eq.s32.totalorder %s14, 1
    %p79 = por %p77, %p78
    %p80 = scmp.ne.s32.totalorder %s69, %s70
    %p81 = scmp.eq.s32.totalorder %s14, 0
    %p82 = por %p80, %p81
    %p83 = scmp.ne.s32.totalorder %s69, %s70
    %p84 = scmp.eq.s32.totalorder %s15, 1
    %p85 = por %p83, %p84
    %p87 = scmp.ne.s32.totalorder %s70, %s86
    %p88 = scmp.eq.s32.totalorder %s15, 0
    %p89 = por %p87, %p88
    %s90 = ssub.s32 %s18, %s27
    %p91 = scmp.eq.s32.totalorder %s90, 0
    %s93 = sadd.s32 %s92, 1
    %s94 = scalar_select %p91, %s92, %s93
    %p97 = pneg %p91
    %p98 = scmp.eq.s32.totalorder %s9, 1
    %p99 = por %p97, %p98
    %p100 = scmp.ne.s32.totalorder %s92, %s95
    %p101 = scmp.eq.s32.totalorder %s9, 0
    %p102 = por %p100, %p101
    %p103 = scmp.ne.s32.totalorder %s92, %s95
    %p104 = scmp.eq.s32.totalorder %s14, 1
    %p105 = por %p103, %p104
    %p106 = scmp.ne.s32.totalorder %s95, %s96
    %p107 = scmp.eq.s32.totalorder %s14, 0
    %p108 = por %p106, %p107
    %p109 = scmp.ne.s32.totalorder %s95, %s96
    %p110 = scmp.eq.s32.totalorder %s15, 1
    %p111 = por %p109, %p110
    %p113 = scmp.ne.s32.totalorder %s96, %s112
    %p114 = scmp.eq.s32.totalorder %s15, 0
    %p115 = por %p113, %p114
    %s116 = ssub.s32 %s16, %s35
    %s117 = ssub.s32 %s17, %s31
    %s118 = sor.u32 %s116, %s117
    %s119 = ssub.s32 %s18, %s27
    %s120 = sor.u32 %s118, %s119
    %p121 = scmp.eq.s32.totalorder %s120, 0
    %s123 = sadd.s32 %s122, 1
    %s124 = scalar_select %p121, %s122, %s123
    %p127 = pneg %p121
    %p128 = scmp.eq.s32.totalorder %s9, 1
    %p129 = por %p127, %p128
    %p130 = scmp.ne.s32.totalorder %s122, %s125
    %p131 = scmp.eq.s32.totalorder %s9, 0
    %p132 = por %p130, %p131
    %p133 = scmp.ne.s32.totalorder %s122, %s125
    %p134 = scmp.eq.s32.totalorder %s14, 1
    %p135 = por %p133, %p134
    %p136 = scmp.ne.s32.totalorder %s125, %s126
    %p137 = scmp.eq.s32.totalorder %s14, 0
    %p138 = por %p136, %p137
    %p139 = scmp.ne.s32.totalorder %s125, %s126
    %p140 = scmp.eq.s32.totalorder %s15, 1
    %p141 = por %p139, %p140
    %p143 = scmp.ne.s32.totalorder %s126, %s142
    %p144 = scmp.eq.s32.totalorder %s15, 0
    %p145 = por %p143, %p144
    %p146 = scmp.le.s32.totalorder 1, %s9
    %p147 = scmp.lt.s32.totalorder %s9, 3
    %p148 = pnand %p146, %p147
    %p149 = pneg %p148
    // Predicated region
    $region9: #{centernet_forward.7} parent=5 // pred_check
      _
    $region10: #{centernet_forward.7} parent=5 // pred_check_branch
      %151 = sbr.rel (%p148) target = $region12
    $region11: #{centernet_forward.7} parent=5 // pred_region
      %s152 = ssub.s32 %s9, 1
      // Predicated region
      $region13: #{centernet_forward.7} parent=11 // pred_check
        %p153 = pneg %p82
      $region14: #{centernet_forward.7} parent=11 // pred_check_branch
        %155 = sbr.rel (%p153) target = $region16
      $region15: #{centernet_forward.7} parent=11 // pred_region
        %s156 = smul.u32 2, %s21
        %p157 = scmp.lt.s32.totalorder %s156, 1
        %s158 = scalar_select %p157, %s156, 1
        %s159 = smul.addr %s158, 4
        %s160 = scalar_lea.vmem %s1, %s159
        %s161 = smul.u32 2, %s21
      $region16: #{centernet_forward.7} parent=11 // pred_fallthru
        _
      // Predicated region
      $region17: #{centernet_forward.7} parent=11 // pred_check
        %p162 = pneg %p108
      $region18: #{centernet_forward.7} parent=11 // pred_check_branch
        %164 = sbr.rel (%p162) target = $region20
      $region19: #{centernet_forward.7} parent=11 // pred_region
        %s165 = smul.u32 2, %s21
        %p166 = scmp.lt.s32.totalorder %s165, 1
        %s167 = scalar_select %p166, %s165, 1
        %s168 = scalar_lea.vmem %s2, %s167
        %s169 = smul.u32 2, %s21
      $region20: #{centernet_forward.7} parent=11 // pred_fallthru
        _
    $region12: #{centernet_forward.7} parent=5 // pred_fallthru
      _
    %p170 = scmp.lt.s32.totalorder %s9, 2
    // Predicated region
    $region21: #{centernet_forward.7} parent=5 // pred_check
      %p171 = pneg %p170
    $region22: #{centernet_forward.7} parent=5 // pred_check_branch
      %173 = sbr.rel (%p171) target = $region24
    $region23: #{centernet_forward.7} parent=5 // pred_region
      // Predicated region
      $region25: #{centernet_forward.7} parent=23 // pred_check
        %p174 = pneg %p50
      $region26: #{centernet_forward.7} parent=23 // pred_check_branch
        %176 = sbr.rel (%p174) target = $region28
      $region27: #{centernet_forward.7} parent=23 // pred_region
        %s177 = smul.u32 2, %s17
        %p178 = scmp.lt.s32.totalorder %s16, 1
        %s179 = scalar_select %p178, %s16, 1
        %p180 = scmp.lt.s32.totalorder %s177, 1
        %s181 = scalar_select %p180, %s177, 1
        %s182 = smul.addr %s181, 9
        %s183 = smul.addr %s179, 18
        %s184 = sadd.s32 %s182, %s183
        %s185 = smul.addr %s184, 4
        %s186 = scalar_lea.vmem %s0, %s185
        %s187 = smul.u32 2, %s17
      $region28: #{centernet_forward.7} parent=23 // pred_fallthru
        _
    $region24: #{centernet_forward.7} parent=5 // pred_fallthru
      _
    %p188 = scmp.le.s32.totalorder 1, %s9
    %p189 = scmp.lt.s32.totalorder %s9, 3
    %p190 = pnand %p188, %p189
    %p191 = pneg %p190
    // Predicated region
    $region29: #{centernet_forward.7} parent=5 // pred_check
      _
    $region30: #{centernet_forward.7} parent=5 // pred_check_branch
      %193 = sbr.rel (%p190) target = $region32
    $region31: #{centernet_forward.7} parent=5 // pred_region
      %s194 = ssub.s32 %s9, 1
      %s195 = smul.u32 2, %s20
      %p196 = scmp.lt.s32.totalorder %s19, 1
      %s197 = scalar_select %p196, %s19, 1
      %p198 = scmp.lt.s32.totalorder %s195, 1
      %s199 = scalar_select %p198, %s195, 1
      %s200 = smul.addr %s199, 9
      %s201 = smul.addr %s197, 18
      %s202 = sadd.s32 %s200, %s201
      %s203 = smul.addr %s202, 4
      %s204 = scalar_lea.vmem %s0, %s203
      %p205 = pneg %p56
      %p206 = pneg %p53
      %s207 = smul.u32 2, %s21
      %p208 = scmp.lt.s32.totalorder %s207, 1
      %s209 = scalar_select %p208, %s207, 1
      %s210 = smul.addr %s209, 4
      %s211 = scalar_lea.vmem %s1, %s210
      %p212 = pneg %p82
      %p213 = pneg %p79
      %s214 = smul.u32 2, %s21
      %p215 = scmp.lt.s32.totalorder %s214, 1
      %s216 = scalar_select %p215, %s214, 1
      %s217 = scalar_lea.vmem %s2, %s216
      %p218 = pneg %p108
      %p219 = pneg %p105
      %p220 = pneg %p138
      %p221 = pneg %p135
      %s222 = smul.u32 2, %s20
      %s223 = smul.u32 2, %s21
      %p224 = scmp.lt.s32.totalorder %s19, 1
      %s225 = scalar_select %p224, %s19, 1
      %p226 = scmp.lt.s32.totalorder %s222, 1
      %s227 = scalar_select %p226, %s222, 1
      %p228 = scmp.lt.s32.totalorder %s223, 1
      %s229 = scalar_select %p228, %s223, 1
      %s230 = smul.addr %s227, 2
      %s231 = sadd.s32 %s229, %s230
      %s232 = smul.addr %s225, 4
      %s233 = sadd.s32 %s231, %s232
      %s234 = smul.addr %s233, 4
      %s235 = scalar_lea.vmem %s3, %s234
      %s236 = smul.u32 2, %s20
      %p237 = scmp.lt.s32.totalorder %s19, 1
      %s238 = scalar_select %p237, %s19, 1
      %p239 = scmp.lt.s32.totalorder %s236, 1
      %s240 = scalar_select %p239, %s236, 1
      %s241 = smul.addr %s240, 9
      %s242 = smul.addr %s238, 18
      %s243 = sadd.s32 %s241, %s242
      %s244 = smul.addr %s243, 4
      %s245 = scalar_lea.vmem %s0, %s244
      %s246 = smul.u32 2, %s20
      %s247 = smul.u32 2, %s21
      %p248 = scmp.lt.s32.totalorder %s247, 1
      %s249 = scalar_select %p248, %s247, 1
      %s250 = smul.addr %s249, 4
      %s251 = scalar_lea.vmem %s1, %s250
      %s252 = smul.u32 2, %s21
      %s253 = smul.u32 2, %s21
      %p254 = scmp.lt.s32.totalorder %s253, 1
      %s255 = scalar_select %p254, %s253, 1
      %s256 = scalar_lea.vmem %s2, %s255
      %s257 = smul.u32 2, %s21
      %s258 = smul.u32 2, %s20
      %s259 = smul.u32 2, %s21
      %p260 = scmp.lt.s32.totalorder %s19, 1
      %s261 = scalar_select %p260, %s19, 1
      %p262 = scmp.lt.s32.totalorder %s258, 1
      %s263 = scalar_select %p262, %s258, 1
      %p264 = scmp.lt.s32.totalorder %s259, 1
      %s265 = scalar_select %p264, %s259, 1
      %s266 = smul.addr %s263, 2
      %s267 = sadd.s32 %s265, %s266
      %s268 = smul.addr %s261, 4
      %s269 = sadd.s32 %s267, %s268
      %s270 = smul.addr %s269, 4
      %s271 = scalar_lea.vmem %s3, %s270
      %s272 = smul.u32 2, %s20
      %s273 = smul.u32 2, %s21
      %v275 = vld [vmem:[%s245] sm:$0xff]
      %v276 = vld [vmem:[%s245 + $0x8] sm:$0xff]
      %v277 = vld [vmem:[%s245 + $0x10] sm:$0xff]
      %v278 = vld [vmem:[%s245 + $0x18] sm:$0xff]
      %v279 = vld [vmem:[%s245 + $0x20] sm:$0xf]
      %v280 = vld [vmem:[%s245 + $0x24] sm:$0xff]
      %v281 = vld [vmem:[%s245 + $0x2c] sm:$0xff]
      %v282 = vld [vmem:[%s245 + $0x34] sm:$0xff]
      %v283 = vld [vmem:[%s245 + $0x3c] sm:$0xff]
      %v284 = vld [vmem:[%s245 + $0x44] sm:$0xf]
      %v285 = vld [vmem:[%s251] sm:$0xff]
      %v286 = vld [vmem:[%s251 + $0x8] sm:$0xff]
      %v287 = vld [vmem:[%s251 + $0x10] sm:$0xff]
      %v288 = vld [vmem:[%s251 + $0x18] sm:$0xff]
      %v289 = vld [vmem:[%s251 + $0x20] sm:$0xff]
      %v290 = vld [vmem:[%s251 + $0x28] sm:$0xff]
      %v291 = vld [vmem:[%s251 + $0x30] sm:$0xff]
      %v292 = vld [vmem:[%s251 + $0x38] sm:$0xff]
      %v293 = vld [vmem:[%s251 + $0x40] sm:$0xff]
      %v294 = vld [vmem:[%s251 + $0x48] sm:$0xff]
      %v295 = vld [vmem:[%s251 + $0x50] sm:$0xff]
      %v296 = vld [vmem:[%s251 + $0x58] sm:$0xff]
      %v297 = vld [vmem:[%s251 + $0x60] sm:$0xff]
      %v298 = vld [vmem:[%s251 + $0x68] sm:$0xff]
      %v299 = vld [vmem:[%s251 + $0x70] sm:$0xff]
      %v300 = vld [vmem:[%s251 + $0x78] sm:$0xff]
      %v301 = vld [vmem:[%s251 + $0x80] sm:$0xff]
      %v302 = vld [vmem:[%s251 + $0x88] sm:$0xff]
      %v303 = vld [vmem:[%s251 + $0x90] sm:$0xff]
      %v304 = vld [vmem:[%s251 + $0x98] sm:$0xff]
      %v305 = vld [vmem:[%s251 + $0xa0] sm:$0xff]
      %v306 = vld [vmem:[%s251 + $0xa8] sm:$0xff]
      %v307 = vld [vmem:[%s251 + $0xb0] sm:$0xff]
      %v308 = vld [vmem:[%s251 + $0xb8] sm:$0xff]
      %v309 = vld [vmem:[%s251 + $0xc0] sm:$0xff]
      %v310 = vld [vmem:[%s251 + $0xc8] sm:$0xff]
      %v311 = vld [vmem:[%s251 + $0xd0] sm:$0xff]
      %v312 = vld [vmem:[%s251 + $0xd8] sm:$0xff]
      %v313 = vld [vmem:[%s251 + $0xe0] sm:$0xff]
      %v314 = vld [vmem:[%s251 + $0xe8] sm:$0xff]
      %v315 = vld [vmem:[%s251 + $0xf0] sm:$0xff]
      %v316 = vld [vmem:[%s251 + $0xf8] sm:$0xff]
      %v317 = vld [vmem:[%s251 + $0x100] sm:$0xff]
      %v318 = vld [vmem:[%s251 + $0x108] sm:$0xff]
      %v319 = vld [vmem:[%s251 + $0x110] sm:$0xff]
      %v320 = vld [vmem:[%s251 + $0x118] sm:$0xff]
      %v321 = vld [vmem:[%s251 + $0x120] sm:$0xff]
      %v322 = vld [vmem:[%s251 + $0x128] sm:$0xff]
      %v323 = vld [vmem:[%s251 + $0x130] sm:$0xff]
      %v324 = vld [vmem:[%s251 + $0x138] sm:$0xff]
      %v325 = vld [vmem:[%s251 + $0x140] sm:$0xff]
      %v326 = vld [vmem:[%s251 + $0x148] sm:$0xff]
      %v327 = vld [vmem:[%s251 + $0x150] sm:$0xff]
      %v328 = vld [vmem:[%s251 + $0x158] sm:$0xff]
      %v329 = vld [vmem:[%s251 + $0x160] sm:$0xff]
      %v330 = vld [vmem:[%s251 + $0x168] sm:$0xff]
      %v331 = vld [vmem:[%s251 + $0x170] sm:$0xff]
      %v332 = vld [vmem:[%s251 + $0x178] sm:$0xff]
      %v333 = vld [vmem:[%s251 + $0x180] sm:$0xff]
      %v334 = vld [vmem:[%s251 + $0x188] sm:$0xff]
      %v335 = vld [vmem:[%s251 + $0x190] sm:$0xff]
      %v336 = vld [vmem:[%s251 + $0x198] sm:$0xff]
      %v337 = vld [vmem:[%s251 + $0x1a0] sm:$0xff]
      %v338 = vld [vmem:[%s251 + $0x1a8] sm:$0xff]
      %v339 = vld [vmem:[%s251 + $0x1b0] sm:$0xff]
      %v340 = vld [vmem:[%s251 + $0x1b8] sm:$0xff]
      %v341 = vld [vmem:[%s251 + $0x1c0] sm:$0xff]
      %v342 = vld [vmem:[%s251 + $0x1c8] sm:$0xff]
      %v343 = vld [vmem:[%s251 + $0x1d0] sm:$0xff]
      %v344 = vld [vmem:[%s251 + $0x1d8] sm:$0xff]
      %v345 = vld [vmem:[%s251 + $0x1e0] sm:$0xff]
      %v346 = vld [vmem:[%s251 + $0x1e8] sm:$0xff]
      %v347 = vld [vmem:[%s251 + $0x1f0] sm:$0xff]
      %v348 = vld [vmem:[%s251 + $0x1f8] sm:$0xff]
      %v349 = vld [vmem:[%s251 + $0x200] sm:$0xff]
      %v350 = vld [vmem:[%s251 + $0x208] sm:$0xff]
      %v351 = vld [vmem:[%s251 + $0x210] sm:$0xff]
      %v352 = vld [vmem:[%s251 + $0x218] sm:$0xff]
      %v353 = vld [vmem:[%s251 + $0x220] sm:$0xff]
      %v354 = vld [vmem:[%s251 + $0x228] sm:$0xff]
      %v355 = vld [vmem:[%s251 + $0x230] sm:$0xff]
      %v356 = vld [vmem:[%s251 + $0x238] sm:$0xff]
      %v357 = vld [vmem:[%s251 + $0x240] sm:$0xff]
      %v358 = vld [vmem:[%s251 + $0x248] sm:$0xff]
      %v359 = vld [vmem:[%s251 + $0x250] sm:$0xff]
      %v360 = vld [vmem:[%s251 + $0x258] sm:$0xff]
      %v361 = vld [vmem:[%s251 + $0x260] sm:$0xff]
      %v362 = vld [vmem:[%s251 + $0x268] sm:$0xff]
      %v363 = vld [vmem:[%s251 + $0x270] sm:$0xff]
      %v364 = vld [vmem:[%s251 + $0x278] sm:$0xff]
      %v365 = vld [vmem:[%s251 + $0x280] sm:$0xff]
      %v366 = vld [vmem:[%s251 + $0x288] sm:$0xff]
      %v367 = vld [vmem:[%s251 + $0x290] sm:$0xff]
      %v368 = vld [vmem:[%s251 + $0x298] sm:$0xff]
      %v369 = vld [vmem:[%s251 + $0x2a0] sm:$0xff]
      %v370 = vld [vmem:[%s251 + $0x2a8] sm:$0xff]
      %v371 = vld [vmem:[%s251 + $0x2b0] sm:$0xff]
      %v372 = vld [vmem:[%s251 + $0x2b8] sm:$0xff]
      %v373 = vld [vmem:[%s251 + $0x2c0] sm:$0xff]
      %v374 = vld [vmem:[%s251 + $0x2c8] sm:$0xff]
      %v375 = vld [vmem:[%s251 + $0x2d0] sm:$0xff]
      %v376 = vld [vmem:[%s251 + $0x2d8] sm:$0xff]
      %v377 = vld [vmem:[%s251 + $0x2e0] sm:$0xff]
      %v378 = vld [vmem:[%s251 + $0x2e8] sm:$0xff]
      %v379 = vld [vmem:[%s251 + $0x2f0] sm:$0xff]
      %v380 = vld [vmem:[%s251 + $0x2f8] sm:$0xff]
      %v381 = vld [vmem:[%s251 + $0x300] sm:$0xff]
      %v382 = vld [vmem:[%s251 + $0x308] sm:$0xff]
      %v383 = vld [vmem:[%s251 + $0x310] sm:$0xff]
      %v384 = vld [vmem:[%s251 + $0x318] sm:$0xff]
      %v385 = vld [vmem:[%s251 + $0x320] sm:$0xff]
      %v386 = vld [vmem:[%s251 + $0x328] sm:$0xff]
      %v387 = vld [vmem:[%s251 + $0x330] sm:$0xff]
      %v388 = vld [vmem:[%s251 + $0x338] sm:$0xff]
      %v389 = vld [vmem:[%s251 + $0x340] sm:$0xff]
      %v390 = vld [vmem:[%s251 + $0x348] sm:$0xff]
      %v391 = vld [vmem:[%s251 + $0x350] sm:$0xff]
      %v392 = vld [vmem:[%s251 + $0x358] sm:$0xff]
      %v393 = vld [vmem:[%s251 + $0x360] sm:$0xff]
      %v394 = vld [vmem:[%s251 + $0x368] sm:$0xff]
      %v395 = vld [vmem:[%s251 + $0x370] sm:$0xff]
      %v396 = vld [vmem:[%s251 + $0x378] sm:$0xff]
      %v397 = vld [vmem:[%s251 + $0x380] sm:$0xff]
      %v398 = vld [vmem:[%s251 + $0x388] sm:$0xff]
      %v399 = vld [vmem:[%s251 + $0x390] sm:$0xff]
      %v400 = vld [vmem:[%s251 + $0x398] sm:$0xff]
      %v401 = vld [vmem:[%s251 + $0x3a0] sm:$0xff]
      %v402 = vld [vmem:[%s251 + $0x3a8] sm:$0xff]
      %v403 = vld [vmem:[%s251 + $0x3b0] sm:$0xff]
      %v404 = vld [vmem:[%s251 + $0x3b8] sm:$0xff]
      %v405 = vld [vmem:[%s251 + $0x3c0] sm:$0xff]
      %v406 = vld [vmem:[%s251 + $0x3c8] sm:$0xff]
      %v407 = vld [vmem:[%s251 + $0x3d0] sm:$0xff]
      %v408 = vld [vmem:[%s251 + $0x3d8] sm:$0xff]
      %v409 = vld [vmem:[%s251 + $0x3e0] sm:$0xff]
      %v410 = vld [vmem:[%s251 + $0x3e8] sm:$0xff]
      %v411 = vld [vmem:[%s251 + $0x3f0] sm:$0xff]
      %v412 = vld [vmem:[%s251 + $0x3f8] sm:$0xff]
      %v413 = vld [vmem:[%s251 + $0x400] sm:$0xff]
      %v414 = vld [vmem:[%s251 + $0x408] sm:$0xff]
      %v415 = vld [vmem:[%s251 + $0x410] sm:$0xff]
      %v416 = vld [vmem:[%s251 + $0x418] sm:$0xff]
      %v417 = vld [vmem:[%s251 + $0x420] sm:$0xff]
      %v418 = vld [vmem:[%s251 + $0x428] sm:$0xff]
      %v419 = vld [vmem:[%s251 + $0x430] sm:$0xff]
      %v420 = vld [vmem:[%s251 + $0x438] sm:$0xff]
      %v421 = vld [vmem:[%s251 + $0x440] sm:$0xff]
      %v422 = vld [vmem:[%s251 + $0x448] sm:$0xff]
      %v423 = vld [vmem:[%s251 + $0x450] sm:$0xff]
      %v424 = vld [vmem:[%s251 + $0x458] sm:$0xff]
      %v425 = vld [vmem:[%s251 + $0x460] sm:$0xff]
      %v426 = vld [vmem:[%s251 + $0x468] sm:$0xff]
      %v427 = vld [vmem:[%s251 + $0x470] sm:$0xff]
      %v428 = vld [vmem:[%s251 + $0x478] sm:$0xff]
      %v429 = vld [vmem:[%s256] sm:$0x3]
      %v431 = vlaneseq
      %v432 = vshrl.u32 %v431, 7
      %v433 = vsub.s32 0, %v432
      %v434 = vrot.slane %v429, %v433
      %v435 = vlaneseq
      %v436 = vshrl.u32 %v435, 7
      %v437 = vsub.s32 1, %v436
      %v438 = vrot.slane %v429, %v437
      %v451 = vunpack.c.l.b16 %v275
      %v452 = vunpack.c.h.b16 %v275
      %v453 = vunpack.c.l.b16 %v276
      %v454 = vunpack.c.h.b16 %v276
      %v455 = vunpack.c.l.b16 %v277
      %v456 = vunpack.c.h.b16 %v277
      %v457 = vunpack.c.l.b16 %v278
      %v458 = vunpack.c.h.b16 %v278
      %v459 = vunpack.c.l.b16 %v279
      %v460 = vunpack.c.l.b16 %v280
      %v461 = vunpack.c.h.b16 %v280
      %v462 = vunpack.c.l.b16 %v281
      %v463 = vunpack.c.h.b16 %v281
      %v464 = vunpack.c.l.b16 %v282
      %v465 = vunpack.c.h.b16 %v282
      %v466 = vunpack.c.l.b16 %v283
      %v467 = vunpack.c.h.b16 %v283
      %v468 = vunpack.c.l.b16 %v284
      %v469 = vpack.c.b16 %v460, %v451
      %v470 = vpack.c.b16 %v461, %v452
      %v471 = vpack.c.b16 %v462, %v453
      %v472 = vpack.c.b16 %v463, %v454
      %v473 = vpack.c.b16 %v464, %v455
      %v474 = vpack.c.b16 %v465, %v456
      %v475 = vpack.c.b16 %v466, %v457
      %v476 = vpack.c.b16 %v467, %v458
      %v477 = vpack.c.b16 %v468, %v459
      %v631 = vunpack.c.l.b16 %v285
      %v632 = vunpack.c.h.b16 %v285
      %v633 = vunpack.c.l.b16 %v286
      %v634 = vunpack.c.h.b16 %v286
      %v635 = vunpack.c.l.b16 %v287
      %v636 = vunpack.c.h.b16 %v287
      %v637 = vunpack.c.l.b16 %v288
      %v638 = vunpack.c.h.b16 %v288
      %v639 = vunpack.c.l.b16 %v289
      %v640 = vunpack.c.h.b16 %v289
      %v641 = vunpack.c.l.b16 %v290
      %v642 = vunpack.c.h.b16 %v290
      %v643 = vunpack.c.l.b16 %v291
      %v644 = vunpack.c.h.b16 %v291
      %v645 = vunpack.c.l.b16 %v292
      %v646 = vunpack.c.h.b16 %v292
      %v647 = vunpack.c.l.b16 %v293
      %v648 = vunpack.c.h.b16 %v293
      %v649 = vunpack.c.l.b16 %v294
      %v650 = vunpack.c.h.b16 %v294
      %v651 = vunpack.c.l.b16 %v295
      %v652 = vunpack.c.h.b16 %v295
      %v653 = vunpack.c.l.b16 %v296
      %v654 = vunpack.c.h.b16 %v296
      %v655 = vunpack.c.l.b16 %v297
      %v656 = vunpack.c.h.b16 %v297
      %v657 = vunpack.c.l.b16 %v298
      %v658 = vunpack.c.h.b16 %v298
      %v659 = vunpack.c.l.b16 %v299
      %v660 = vunpack.c.h.b16 %v299
      %v661 = vunpack.c.l.b16 %v300
      %v662 = vunpack.c.h.b16 %v300
      %v663 = vunpack.c.l.b16 %v301
      %v664 = vunpack.c.h.b16 %v301
      %v665 = vunpack.c.l.b16 %v302
      %v666 = vunpack.c.h.b16 %v302
      %v667 = vunpack.c.l.b16 %v303
      %v668 = vunpack.c.h.b16 %v303
      %v669 = vunpack.c.l.b16 %v304
      %v670 = vunpack.c.h.b16 %v304
      %v671 = vunpack.c.l.b16 %v305
      %v672 = vunpack.c.h.b16 %v305
      %v673 = vunpack.c.l.b16 %v306
      %v674 = vunpack.c.h.b16 %v306
      %v675 = vunpack.c.l.b16 %v307
      %v676 = vunpack.c.h.b16 %v307
      %v677 = vunpack.c.l.b16 %v308
      %v678 = vunpack.c.h.b16 %v308
      %v679 = vunpack.c.l.b16 %v309
      %v680 = vunpack.c.h.b16 %v309
      %v681 = vunpack.c.l.b16 %v310
      %v682 = vunpack.c.h.b16 %v310
      %v683 = vunpack.c.l.b16 %v311
      %v684 = vunpack.c.h.b16 %v311
      %v685 = vunpack.c.l.b16 %v312
      %v686 = vunpack.c.h.b16 %v312
      %v687 = vunpack.c.l.b16 %v313
      %v688 = vunpack.c.h.b16 %v313
      %v689 = vunpack.c.l.b16 %v314
      %v690 = vunpack.c.h.b16 %v314
      %v691 = vunpack.c.l.b16 %v315
      %v692 = vunpack.c.h.b16 %v315
      %v693 = vunpack.c.l.b16 %v316
      %v694 = vunpack.c.h.b16 %v316
      %v695 = vunpack.c.l.b16 %v317
      %v696 = vunpack.c.h.b16 %v317
      %v697 = vunpack.c.l.b16 %v318
      %v698 = vunpack.c.h.b16 %v318
      %v699 = vunpack.c.l.b16 %v319
      %v700 = vunpack.c.h.b16 %v319
      %v701 = vunpack.c.l.b16 %v320
      %v702 = vunpack.c.h.b16 %v320
      %v703 = vunpack.c.l.b16 %v321
      %v704 = vunpack.c.h.b16 %v321
      %v705 = vunpack.c.l.b16 %v322
      %v706 = vunpack.c.h.b16 %v322
      %v707 = vunpack.c.l.b16 %v323
      %v708 = vunpack.c.h.b16 %v323
      %v709 = vunpack.c.l.b16 %v324
      %v710 = vunpack.c.h.b16 %v324
      %v711 = vunpack.c.l.b16 %v325
      %v712 = vunpack.c.h.b16 %v325
      %v713 = vunpack.c.l.b16 %v326
      %v714 = vunpack.c.h.b16 %v326
      %v715 = vunpack.c.l.b16 %v327
      %v716 = vunpack.c.h.b16 %v327
      %v717 = vunpack.c.l.b16 %v328
      %v718 = vunpack.c.h.b16 %v328
      %v719 = vunpack.c.l.b16 %v329
      %v720 = vunpack.c.h.b16 %v329
      %v721 = vunpack.c.l.b16 %v330
      %v722 = vunpack.c.h.b16 %v330
      %v723 = vunpack.c.l.b16 %v331
      %v724 = vunpack.c.h.b16 %v331
      %v725 = vunpack.c.l.b16 %v332
      %v726 = vunpack.c.h.b16 %v332
      %v727 = vunpack.c.l.b16 %v333
      %v728 = vunpack.c.h.b16 %v333
      %v729 = vunpack.c.l.b16 %v334
      %v730 = vunpack.c.h.b16 %v334
      %v731 = vunpack.c.l.b16 %v335
      %v732 = vunpack.c.h.b16 %v335
      %v733 = vunpack.c.l.b16 %v336
      %v734 = vunpack.c.h.b16 %v336
      %v735 = vunpack.c.l.b16 %v337
      %v736 = vunpack.c.h.b16 %v337
      %v737 = vunpack.c.l.b16 %v338
      %v738 = vunpack.c.h.b16 %v338
      %v739 = vunpack.c.l.b16 %v339
      %v740 = vunpack.c.h.b16 %v339
      %v741 = vunpack.c.l.b16 %v340
      %v742 = vunpack.c.h.b16 %v340
      %v743 = vunpack.c.l.b16 %v341
      %v744 = vunpack.c.h.b16 %v341
      %v745 = vunpack.c.l.b16 %v342
      %v746 = vunpack.c.h.b16 %v342
      %v747 = vunpack.c.l.b16 %v343
      %v748 = vunpack.c.h.b16 %v343
      %v749 = vunpack.c.l.b16 %v344
      %v750 = vunpack.c.h.b16 %v344
      %v751 = vunpack.c.l.b16 %v345
      %v752 = vunpack.c.h.b16 %v345
      %v753 = vunpack.c.l.b16 %v346
      %v754 = vunpack.c.h.b16 %v346
      %v755 = vunpack.c.l.b16 %v347
      %v756 = vunpack.c.h.b16 %v347
      %v757 = vunpack.c.l.b16 %v348
      %v758 = vunpack.c.h.b16 %v348
      %v759 = vunpack.c.l.b16 %v349
      %v760 = vunpack.c.h.b16 %v349
      %v761 = vunpack.c.l.b16 %v350
      %v762 = vunpack.c.h.b16 %v350
      %v763 = vunpack.c.l.b16 %v351
      %v764 = vunpack.c.h.b16 %v351
      %v765 = vunpack.c.l.b16 %v352
      %v766 = vunpack.c.h.b16 %v352
      %v767 = vunpack.c.l.b16 %v353
      %v768 = vunpack.c.h.b16 %v353
      %v769 = vunpack.c.l.b16 %v354
      %v770 = vunpack.c.h.b16 %v354
      %v771 = vunpack.c.l.b16 %v355
      %v772 = vunpack.c.h.b16 %v355
      %v773 = vunpack.c.l.b16 %v356
      %v774 = vunpack.c.h.b16 %v356
      %v775 = vunpack.c.l.b16 %v357
      %v776 = vunpack.c.h.b16 %v357
      %v777 = vunpack.c.l.b16 %v358
      %v778 = vunpack.c.h.b16 %v358
      %v779 = vunpack.c.l.b16 %v359
      %v780 = vunpack.c.h.b16 %v359
      %v781 = vunpack.c.l.b16 %v360
      %v782 = vunpack.c.h.b16 %v360
      %v783 = vunpack.c.l.b16 %v361
      %v784 = vunpack.c.h.b16 %v361
      %v785 = vunpack.c.l.b16 %v362
      %v786 = vunpack.c.h.b16 %v362
      %v787 = vunpack.c.l.b16 %v363
      %v788 = vunpack.c.h.b16 %v363
      %v789 = vunpack.c.l.b16 %v364
      %v790 = vunpack.c.h.b16 %v364
      %v791 = vunpack.c.l.b16 %v365
      %v792 = vunpack.c.h.b16 %v365
      %v793 = vunpack.c.l.b16 %v366
      %v794 = vunpack.c.h.b16 %v366
      %v795 = vunpack.c.l.b16 %v367
      %v796 = vunpack.c.h.b16 %v367
      %v797 = vunpack.c.l.b16 %v368
      %v798 = vunpack.c.h.b16 %v368
      %v799 = vunpack.c.l.b16 %v369
      %v800 = vunpack.c.h.b16 %v369
      %v801 = vunpack.c.l.b16 %v370
      %v802 = vunpack.c.h.b16 %v370
      %v803 = vunpack.c.l.b16 %v371
      %v804 = vunpack.c.h.b16 %v371
      %v805 = vunpack.c.l.b16 %v372
      %v806 = vunpack.c.h.b16 %v372
      %v807 = vunpack.c.l.b16 %v373
      %v808 = vunpack.c.h.b16 %v373
      %v809 = vunpack.c.l.b16 %v374
      %v810 = vunpack.c.h.b16 %v374
      %v811 = vunpack.c.l.b16 %v375
      %v812 = vunpack.c.h.b16 %v375
      %v813 = vunpack.c.l.b16 %v376
      %v814 = vunpack.c.h.b16 %v376
      %v815 = vunpack.c.l.b16 %v377
      %v816 = vunpack.c.h.b16 %v377
      %v817 = vunpack.c.l.b16 %v378
      %v818 = vunpack.c.h.b16 %v378
      %v819 = vunpack.c.l.b16 %v379
      %v820 = vunpack.c.h.b16 %v379
      %v821 = vunpack.c.l.b16 %v380
      %v822 = vunpack.c.h.b16 %v380
      %v823 = vunpack.c.l.b16 %v381
      %v824 = vunpack.c.h.b16 %v381
      %v825 = vunpack.c.l.b16 %v382
      %v826 = vunpack.c.h.b16 %v382
      %v827 = vunpack.c.l.b16 %v383
      %v828 = vunpack.c.h.b16 %v383
      %v829 = vunpack.c.l.b16 %v384
      %v830 = vunpack.c.h.b16 %v384
      %v831 = vunpack.c.l.b16 %v385
      %v832 = vunpack.c.h.b16 %v385
      %v833 = vunpack.c.l.b16 %v386
      %v834 = vunpack.c.h.b16 %v386
      %v835 = vunpack.c.l.b16 %v387
      %v836 = vunpack.c.h.b16 %v387
      %v837 = vunpack.c.l.b16 %v388
      %v838 = vunpack.c.h.b16 %v388
      %v839 = vunpack.c.l.b16 %v389
      %v840 = vunpack.c.h.b16 %v389
      %v841 = vunpack.c.l.b16 %v390
      %v842 = vunpack.c.h.b16 %v390
      %v843 = vunpack.c.l.b16 %v391
      %v844 = vunpack.c.h.b16 %v391
      %v845 = vunpack.c.l.b16 %v392
      %v846 = vunpack.c.h.b16 %v392
      %v847 = vunpack.c.l.b16 %v393
      %v848 = vunpack.c.h.b16 %v393
      %v849 = vunpack.c.l.b16 %v394
      %v850 = vunpack.c.h.b16 %v394
      %v851 = vunpack.c.l.b16 %v395
      %v852 = vunpack.c.h.b16 %v395
      %v853 = vunpack.c.l.b16 %v396
      %v854 = vunpack.c.h.b16 %v396
      %v855 = vunpack.c.l.b16 %v397
      %v856 = vunpack.c.h.b16 %v397
      %v857 = vunpack.c.l.b16 %v398
      %v858 = vunpack.c.h.b16 %v398
      %v859 = vunpack.c.l.b16 %v399
      %v860 = vunpack.c.h.b16 %v399
      %v861 = vunpack.c.l.b16 %v400
      %v862 = vunpack.c.h.b16 %v400
      %v863 = vunpack.c.l.b16 %v401
      %v864 = vunpack.c.h.b16 %v401
      %v865 = vunpack.c.l.b16 %v402
      %v866 = vunpack.c.h.b16 %v402
      %v867 = vunpack.c.l.b16 %v403
      %v868 = vunpack.c.h.b16 %v403
      %v869 = vunpack.c.l.b16 %v404
      %v870 = vunpack.c.h.b16 %v404
      %v871 = vunpack.c.l.b16 %v405
      %v872 = vunpack.c.h.b16 %v405
      %v873 = vunpack.c.l.b16 %v406
      %v874 = vunpack.c.h.b16 %v406
      %v875 = vunpack.c.l.b16 %v407
      %v876 = vunpack.c.h.b16 %v407
      %v877 = vunpack.c.l.b16 %v408
      %v878 = vunpack.c.h.b16 %v408
      %v879 = vunpack.c.l.b16 %v409
      %v880 = vunpack.c.h.b16 %v409
      %v881 = vunpack.c.l.b16 %v410
      %v882 = vunpack.c.h.b16 %v410
      %v883 = vunpack.c.l.b16 %v411
      %v884 = vunpack.c.h.b16 %v411
      %v885 = vunpack.c.l.b16 %v412
      %v886 = vunpack.c.h.b16 %v412
      %v887 = vunpack.c.l.b16 %v413
      %v888 = vunpack.c.h.b16 %v413
      %v889 = vunpack.c.l.b16 %v414
      %v890 = vunpack.c.h.b16 %v414
      %v891 = vunpack.c.l.b16 %v415
      %v892 = vunpack.c.h.b16 %v415
      %v893 = vunpack.c.l.b16 %v416
      %v894 = vunpack.c.h.b16 %v416
      %v895 = vunpack.c.l.b16 %v417
      %v896 = vunpack.c.h.b16 %v417
      %v897 = vunpack.c.l.b16 %v418
      %v898 = vunpack.c.h.b16 %v418
      %v899 = vunpack.c.l.b16 %v419
      %v900 = vunpack.c.h.b16 %v419
      %v901 = vunpack.c.l.b16 %v420
      %v902 = vunpack.c.h.b16 %v420
      %v903 = vunpack.c.l.b16 %v421
      %v904 = vunpack.c.h.b16 %v421
      %v905 = vunpack.c.l.b16 %v422
      %v906 = vunpack.c.h.b16 %v422
      %v907 = vunpack.c.l.b16 %v423
      %v908 = vunpack.c.h.b16 %v423
      %v909 = vunpack.c.l.b16 %v424
      %v910 = vunpack.c.h.b16 %v424
      %v911 = vunpack.c.l.b16 %v425
      %v912 = vunpack.c.h.b16 %v425
      %v913 = vunpack.c.l.b16 %v426
      %v914 = vunpack.c.h.b16 %v426
      %v915 = vunpack.c.l.b16 %v427
      %v916 = vunpack.c.h.b16 %v427
      %v917 = vunpack.c.l.b16 %v428
      %v918 = vunpack.c.h.b16 %v428
      %v919 = vpack.c.b16 %v633, %v631
      %v920 = vpack.c.b16 %v634, %v632
      %v921 = vpack.c.b16 %v637, %v635
      %v922 = vpack.c.b16 %v638, %v636
      %v923 = vpack.c.b16 %v641, %v639
      %v924 = vpack.c.b16 %v642, %v640
      %v925 = vpack.c.b16 %v645, %v643
      %v926 = vpack.c.b16 %v646, %v644
      %v927 = vpack.c.b16 %v649, %v647
      %v928 = vpack.c.b16 %v650, %v648
      %v929 = vpack.c.b16 %v653, %v651
      %v930 = vpack.c.b16 %v654, %v652
      %v931 = vpack.c.b16 %v657, %v655
      %v932 = vpack.c.b16 %v658, %v656
      %v933 = vpack.c.b16 %v661, %v659
      %v934 = vpack.c.b16 %v662, %v660
      %v935 = vpack.c.b16 %v665, %v663
      %v936 = vpack.c.b16 %v666, %v664
      %v937 = vpack.c.b16 %v669, %v667
      %v938 = vpack.c.b16 %v670, %v668
      %v939 = vpack.c.b16 %v673, %v671
      %v940 = vpack.c.b16 %v674, %v672
      %v941 = vpack.c.b16 %v677, %v675
      %v942 = vpack.c.b16 %v678, %v676
      %v943 = vpack.c.b16 %v681, %v679
      %v944 = vpack.c.b16 %v682, %v680
      %v945 = vpack.c.b16 %v685, %v683
      %v946 = vpack.c.b16 %v686, %v684
      %v947 = vpack.c.b16 %v689, %v687
      %v948 = vpack.c.b16 %v690, %v688
      %v949 = vpack.c.b16 %v693, %v691
      %v950 = vpack.c.b16 %v694, %v692
      %v951 = vpack.c.b16 %v697, %v695
      %v952 = vpack.c.b16 %v698, %v696
      %v953 = vpack.c.b16 %v701, %v699
      %v954 = vpack.c.b16 %v702, %v700
      %v955 = vpack.c.b16 %v705, %v703
      %v956 = vpack.c.b16 %v706, %v704
      %v957 = vpack.c.b16 %v709, %v707
      %v958 = vpack.c.b16 %v710, %v708
      %v959 = vpack.c.b16 %v713, %v711
      %v960 = vpack.c.b16 %v714, %v712
      %v961 = vpack.c.b16 %v717, %v715
      %v962 = vpack.c.b16 %v718, %v716
      %v963 = vpack.c.b16 %v721, %v719
      %v964 = vpack.c.b16 %v722, %v720
      %v965 = vpack.c.b16 %v725, %v723
      %v966 = vpack.c.b16 %v726, %v724
      %v967 = vpack.c.b16 %v729, %v727
      %v968 = vpack.c.b16 %v730, %v728
      %v969 = vpack.c.b16 %v733, %v731
      %v970 = vpack.c.b16 %v734, %v732
      %v971 = vpack.c.b16 %v737, %v735
      %v972 = vpack.c.b16 %v738, %v736
      %v973 = vpack.c.b16 %v741, %v739
      %v974 = vpack.c.b16 %v742, %v740
      %v975 = vpack.c.b16 %v745, %v743
      %v976 = vpack.c.b16 %v746, %v744
      %v977 = vpack.c.b16 %v749, %v747
      %v978 = vpack.c.b16 %v750, %v748
      %v979 = vpack.c.b16 %v753, %v751
      %v980 = vpack.c.b16 %v754, %v752
      %v981 = vpack.c.b16 %v757, %v755
      %v982 = vpack.c.b16 %v758, %v756
      %v983 = vpack.c.b16 %v761, %v759
      %v984 = vpack.c.b16 %v762, %v760
      %v985 = vpack.c.b16 %v765, %v763
      %v986 = vpack.c.b16 %v766, %v764
      %v987 = vpack.c.b16 %v769, %v767
      %v988 = vpack.c.b16 %v770, %v768
      %v989 = vpack.c.b16 %v773, %v771
      %v990 = vpack.c.b16 %v774, %v772
      %v991 = vpack.c.b16 %v777, %v775
      %v992 = vpack.c.b16 %v778, %v776
      %v993 = vpack.c.b16 %v781, %v779
      %v994 = vpack.c.b16 %v782, %v780
      %v995 = vpack.c.b16 %v785, %v783
      %v996 = vpack.c.b16 %v786, %v784
      %v997 = vpack.c.b16 %v789, %v787
      %v998 = vpack.c.b16 %v790, %v788
      %v999 = vpack.c.b16 %v793, %v791
      %v1000 = vpack.c.b16 %v794, %v792
      %v1001 = vpack.c.b16 %v797, %v795
      %v1002 = vpack.c.b16 %v798, %v796
      %v1003 = vpack.c.b16 %v801, %v799
      %v1004 = vpack.c.b16 %v802, %v800
      %v1005 = vpack.c.b16 %v805, %v803
      %v1006 = vpack.c.b16 %v806, %v804
      %v1007 = vpack.c.b16 %v809, %v807
      %v1008 = vpack.c.b16 %v810, %v808
      %v1009 = vpack.c.b16 %v813, %v811
      %v1010 = vpack.c.b16 %v814, %v812
      %v1011 = vpack.c.b16 %v817, %v815
      %v1012 = vpack.c.b16 %v818, %v816
      %v1013 = vpack.c.b16 %v821, %v819
      %v1014 = vpack.c.b16 %v822, %v820
      %v1015 = vpack.c.b16 %v825, %v823
      %v1016 = vpack.c.b16 %v826, %v824
      %v1017 = vpack.c.b16 %v829, %v827
      %v1018 = vpack.c.b16 %v830, %v828
      %v1019 = vpack.c.b16 %v833, %v831
      %v1020 = vpack.c.b16 %v834, %v832
      %v1021 = vpack.c.b16 %v837, %v835
      %v1022 = vpack.c.b16 %v838, %v836
      %v1023 = vpack.c.b16 %v841, %v839
      %v1024 = vpack.c.b16 %v842, %v840
      %v1025 = vpack.c.b16 %v845, %v843
      %v1026 = vpack.c.b16 %v846, %v844
      %v1027 = vpack.c.b16 %v849, %v847
      %v1028 = vpack.c.b16 %v850, %v848
      %v1029 = vpack.c.b16 %v853, %v851
      %v1030 = vpack.c.b16 %v854, %v852
      %v1031 = vpack.c.b16 %v857, %v855
      %v1032 = vpack.c.b16 %v858, %v856
      %v1033 = vpack.c.b16 %v861, %v859
      %v1034 = vpack.c.b16 %v862, %v860
      %v1035 = vpack.c.b16 %v865, %v863
      %v1036 = vpack.c.b16 %v866, %v864
      %v1037 = vpack.c.b16 %v869, %v867
      %v1038 = vpack.c.b16 %v870, %v868
      %v1039 = vpack.c.b16 %v873, %v871
      %v1040 = vpack.c.b16 %v874, %v872
      %v1041 = vpack.c.b16 %v877, %v875
      %v1042 = vpack.c.b16 %v878, %v876
      %v1043 = vpack.c.b16 %v881, %v879
      %v1044 = vpack.c.b16 %v882, %v880
      %v1045 = vpack.c.b16 %v885, %v883
      %v1046 = vpack.c.b16 %v886, %v884
      %v1047 = vpack.c.b16 %v889, %v887
      %v1048 = vpack.c.b16 %v890, %v888
      %v1049 = vpack.c.b16 %v893, %v891
      %v1050 = vpack.c.b16 %v894, %v892
      %v1051 = vpack.c.b16 %v897, %v895
      %v1052 = vpack.c.b16 %v898, %v896
      %v1053 = vpack.c.b16 %v901, %v899
      %v1054 = vpack.c.b16 %v902, %v900
      %v1055 = vpack.c.b16 %v905, %v903
      %v1056 = vpack.c.b16 %v906, %v904
      %v1057 = vpack.c.b16 %v909, %v907
      %v1058 = vpack.c.b16 %v910, %v908
      %v1059 = vpack.c.b16 %v913, %v911
      %v1060 = vpack.c.b16 %v914, %v912
      %v1061 = vpack.c.b16 %v917, %v915
      %v1062 = vpack.c.b16 %v918, %v916
      %1207 = vmatprep.subr.bf16.mxu0 %v920
      %1208 = vmatpush1.bf16.msra.mxu0 %v919
      %1209 = vmatprep.subr.bf16.mxu0 %v922
      %1210 = vmatpush1.bf16.msra.mxu0 %v921
      %1211 = vmatprep.subr.bf16.mxu0 %v924
      %1212 = vmatpush1.bf16.msra.mxu0 %v923
      %1213 = vmatprep.subr.bf16.mxu0 %v926
      %1214 = vmatpush1.bf16.msra.mxu0 %v925
      %1215 = vmatprep.subr.bf16.mxu0 %v928
      %1216 = vmatpush1.bf16.msra.mxu0 %v927
      %1217 = vmatprep.subr.bf16.mxu0 %v930
      %1218 = vmatpush1.bf16.msra.mxu0 %v929
      %1219 = vmatprep.subr.bf16.mxu0 %v932
      %1220 = vmatpush1.bf16.msra.mxu0 %v931
      %1221 = vmatprep.subr.bf16.mxu0 %v934
      %1222 = vmatpush1.bf16.msra.mxu0 %v933
      %1223 = vmatprep.subr.bf16.mxu0 %v936
      %1224 = vmatpush1.bf16.msra.mxu0 %v935
      %1225 = vmatprep.subr.bf16.mxu0 %v938
      %1226 = vmatpush1.bf16.msra.mxu0 %v937
      %1227 = vmatprep.subr.bf16.mxu0 %v940
      %1228 = vmatpush1.bf16.msra.mxu0 %v939
      %1229 = vmatprep.subr.bf16.mxu0 %v942
      %1230 = vmatpush1.bf16.msra.mxu0 %v941
      %1231 = vmatprep.subr.bf16.mxu0 %v944
      %1232 = vmatpush1.bf16.msra.mxu0 %v943
      %1233 = vmatprep.subr.bf16.mxu0 %v946
      %1234 = vmatpush1.bf16.msra.mxu0 %v945
      %1235 = vmatprep.subr.bf16.mxu0 %v948
      %1236 = vmatpush1.bf16.msra.mxu0 %v947
      %1237 = vmatprep.subr.bf16.mxu0 %v950
      %1238 = vmatpush1.bf16.msra.mxu0 %v949
      %1239 = vmatprep.mubr.bf16.mxu0 %v470
      %1240 = vmatmul.mubr.bf16.gmra.mrb[0].mxu0 %v469
      %v1241 = vpop.f32.mrb[0].mxu0
      %v1242 = vadd.f32 %v434, %v1241
      %v1243 = vpop.f32.mrb[0].mxu0
      %v1244 = vadd.f32 %v438, %v1243
      %v1245 = vpop.f32.mrb[0].mxu0
      %v1246 = vadd.f32 %v434, %v1245
      %v1247 = vpop.f32.mrb[0].mxu0
      %v1248 = vadd.f32 %v438, %v1247
      %1249 = vdwg.mxu0
      %1250 = vmatprep.subr.bf16.mxu0 %v952
      %1251 = vmatpush1.bf16.msra.mxu0 %v951
      %1252 = vmatprep.subr.bf16.mxu0 %v954
      %1253 = vmatpush1.bf16.msra.mxu0 %v953
      %1254 = vmatprep.subr.bf16.mxu0 %v956
      %1255 = vmatpush1.bf16.msra.mxu0 %v955
      %1256 = vmatprep.subr.bf16.mxu0 %v958
      %1257 = vmatpush1.bf16.msra.mxu0 %v957
      %1258 = vmatprep.subr.bf16.mxu0 %v960
      %1259 = vmatpush1.bf16.msra.mxu0 %v959
      %1260 = vmatprep.subr.bf16.mxu0 %v962
      %1261 = vmatpush1.bf16.msra.mxu0 %v961
      %1262 = vmatprep.subr.bf16.mxu0 %v964
      %1263 = vmatpush1.bf16.msra.mxu0 %v963
      %1264 = vmatprep.subr.bf16.mxu0 %v966
      %1265 = vmatpush1.bf16.msra.mxu0 %v965
      %1266 = vmatprep.subr.bf16.mxu0 %v968
      %1267 = vmatpush1.bf16.msra.mxu0 %v967
      %1268 = vmatprep.subr.bf16.mxu0 %v970
      %1269 = vmatpush1.bf16.msra.mxu0 %v969
      %1270 = vmatprep.subr.bf16.mxu0 %v972
      %1271 = vmatpush1.bf16.msra.mxu0 %v971
      %1272 = vmatprep.subr.bf16.mxu0 %v974
      %1273 = vmatpush1.bf16.msra.mxu0 %v973
      %1274 = vmatprep.subr.bf16.mxu0 %v976
      %1275 = vmatpush1.bf16.msra.mxu0 %v975
      %1276 = vmatprep.subr.bf16.mxu0 %v978
      %1277 = vmatpush1.bf16.msra.mxu0 %v977
      %1278 = vmatprep.subr.bf16.mxu0 %v980
      %1279 = vmatpush1.bf16.msra.mxu0 %v979
      %1280 = vmatprep.subr.bf16.mxu0 %v982
      %1281 = vmatpush1.bf16.msra.mxu0 %v981
      %1282 = vmatprep.mubr.bf16.mxu0 %v472
      %1283 = vmatmul.mubr.bf16.gmra.mrb[0].mxu0 %v471
      %v1284 = vpop.f32.mrb[0].mxu0
      %v1285 = vadd.f32 %v1242, %v1284
      %v1286 = vpop.f32.mrb[0].mxu0
      %v1287 = vadd.f32 %v1244, %v1286
      %v1288 = vpop.f32.mrb[0].mxu0
      %v1289 = vadd.f32 %v1246, %v1288
      %v1290 = vpop.f32.mrb[0].mxu0
      %v1291 = vadd.f32 %v1248, %v1290
      %1292 = vdwg.mxu0
      %1293 = vmatprep.subr.bf16.mxu0 %v984
      %1294 = vmatpush1.bf16.msra.mxu0 %v983
      %1295 = vmatprep.subr.bf16.mxu0 %v986
      %1296 = vmatpush1.bf16.msra.mxu0 %v985
      %1297 = vmatprep.subr.bf16.mxu0 %v988
      %1298 = vmatpush1.bf16.msra.mxu0 %v987
      %1299 = vmatprep.subr.bf16.mxu0 %v990
      %1300 = vmatpush1.bf16.msra.mxu0 %v989
      %1301 = vmatprep.subr.bf16.mxu0 %v992
      %1302 = vmatpush1.bf16.msra.mxu0 %v991
      %1303 = vmatprep.subr.bf16.mxu0 %v994
      %1304 = vmatpush1.bf16.msra.mxu0 %v993
      %1305 = vmatprep.subr.bf16.mxu0 %v996
      %1306 = vmatpush1.bf16.msra.mxu0 %v995
      %1307 = vmatprep.subr.bf16.mxu0 %v998
      %1308 = vmatpush1.bf16.msra.mxu0 %v997
      %1309 = vmatprep.subr.bf16.mxu0 %v1000
      %1310 = vmatpush1.bf16.msra.mxu0 %v999
      %1311 = vmatprep.subr.bf16.mxu0 %v1002
      %1312 = vmatpush1.bf16.msra.mxu0 %v1001
      %1313 = vmatprep.subr.bf16.mxu0 %v1004
      %1314 = vmatpush1.bf16.msra.mxu0 %v1003
      %1315 = vmatprep.subr.bf16.mxu0 %v1006
      %1316 = vmatpush1.bf16.msra.mxu0 %v1005
      %1317 = vmatprep.subr.bf16.mxu0 %v1008
      %1318 = vmatpush1.bf16.msra.mxu0 %v1007
      %1319 = vmatprep.subr.bf16.mxu0 %v1010
      %1320 = vmatpush1.bf16.msra.mxu0 %v1009
      %1321 = vmatprep.subr.bf16.mxu0 %v1012
      %1322 = vmatpush1.bf16.msra.mxu0 %v1011
      %1323 = vmatprep.subr.bf16.mxu0 %v1014
      %1324 = vmatpush1.bf16.msra.mxu0 %v1013
      %1325 = vmatprep.mubr.bf16.mxu0 %v474
      %1326 = vmatmul.mubr.bf16.gmra.mrb[0].mxu0 %v473
      %v1327 = vpop.f32.mrb[0].mxu0
      %v1328 = vadd.f32 %v1285, %v1327
      %v1329 = vpop.f32.mrb[0].mxu0
      %v1330 = vadd.f32 %v1287, %v1329
      %v1331 = vpop.f32.mrb[0].mxu0
      %v1332 = vadd.f32 %v1289, %v1331
      %v1333 = vpop.f32.mrb[0].mxu0
      %v1334 = vadd.f32 %v1291, %v1333
      %1335 = vdwg.mxu0
      %1336 = vmatprep.subr.bf16.mxu0 %v1016
      %1337 = vmatpush1.bf16.msra.mxu0 %v1015
      %1338 = vmatprep.subr.bf16.mxu0 %v1018
      %1339 = vmatpush1.bf16.msra.mxu0 %v1017
      %1340 = vmatprep.subr.bf16.mxu0 %v1020
      %1341 = vmatpush1.bf16.msra.mxu0 %v1019
      %1342 = vmatprep.subr.bf16.mxu0 %v1022
      %1343 = vmatpush1.bf16.msra.mxu0 %v1021
      %1344 = vmatprep.subr.bf16.mxu0 %v1024
      %1345 = vmatpush1.bf16.msra.mxu0 %v1023
      %1346 = vmatprep.subr.bf16.mxu0 %v1026
      %1347 = vmatpush1.bf16.msra.mxu0 %v1025
      %1348 = vmatprep.subr.bf16.mxu0 %v1028
      %1349 = vmatpush1.bf16.msra.mxu0 %v1027
      %1350 = vmatprep.subr.bf16.mxu0 %v1030
      %1351 = vmatpush1.bf16.msra.mxu0 %v1029
      %1352 = vmatprep.subr.bf16.mxu0 %v1032
      %1353 = vmatpush1.bf16.msra.mxu0 %v1031
      %1354 = vmatprep.subr.bf16.mxu0 %v1034
      %1355 = vmatpush1.bf16.msra.mxu0 %v1033
      %1356 = vmatprep.subr.bf16.mxu0 %v1036
      %1357 = vmatpush1.bf16.msra.mxu0 %v1035
      %1358 = vmatprep.subr.bf16.mxu0 %v1038
      %1359 = vmatpush1.bf16.msra.mxu0 %v1037
      %1360 = vmatprep.subr.bf16.mxu0 %v1040
      %1361 = vmatpush1.bf16.msra.mxu0 %v1039
      %1362 = vmatprep.subr.bf16.mxu0 %v1042
      %1363 = vmatpush1.bf16.msra.mxu0 %v1041
      %1364 = vmatprep.subr.bf16.mxu0 %v1044
      %1365 = vmatpush1.bf16.msra.mxu0 %v1043
      %1366 = vmatprep.subr.bf16.mxu0 %v1046
      %1367 = vmatpush1.bf16.msra.mxu0 %v1045
      %1368 = vmatprep.mubr.bf16.mxu0 %v476
      %1369 = vmatmul.mubr.bf16.gmra.mrb[0].mxu0 %v475
      %v1370 = vpop.f32.mrb[0].mxu0
      %v1371 = vadd.f32 %v1328, %v1370
      %v1372 = vpop.f32.mrb[0].mxu0
      %v1373 = vadd.f32 %v1330, %v1372
      %v1374 = vpop.f32.mrb[0].mxu0
      %v1375 = vadd.f32 %v1332, %v1374
      %v1376 = vpop.f32.mrb[0].mxu0
      %v1377 = vadd.f32 %v1334, %v1376
      %1378 = vdwg.mxu0
      %1379 = vmatprep.subr.bf16.mxu0 %v1048
      %1380 = vmatpush1.bf16.msra.mxu0 %v1047
      %1381 = vmatprep.subr.bf16.mxu0 %v1050
      %1382 = vmatpush1.bf16.msra.mxu0 %v1049
      %1383 = vmatprep.subr.bf16.mxu0 %v1052
      %1384 = vmatpush1.bf16.msra.mxu0 %v1051
      %1385 = vmatprep.subr.bf16.mxu0 %v1054
      %1386 = vmatpush1.bf16.msra.mxu0 %v1053
      %1387 = vmatprep.subr.bf16.mxu0 %v1056
      %1388 = vmatpush1.bf16.msra.mxu0 %v1055
      %1389 = vmatprep.subr.bf16.mxu0 %v1058
      %1390 = vmatpush1.bf16.msra.mxu0 %v1057
      %1391 = vmatprep.subr.bf16.mxu0 %v1060
      %1392 = vmatpush1.bf16.msra.mxu0 %v1059
      %1393 = vmatprep.subr.bf16.mxu0 %v1062
      %1394 = vmatpush1.bf16.msra.mxu0 %v1061
      %1395 = vmatprep.subr.bf16.mxu0 0
      %1396 = vmatpush1.bf16.msra.mxu0 0
      %1397 = vmatprep.subr.bf16.mxu0 0
      %1398 = vmatpush1.bf16.msra.mxu0 0
      %1399 = vmatprep.subr.bf16.mxu0 0
      %1400 = vmatpush1.bf16.msra.mxu0 0
      %1401 = vmatprep.subr.bf16.mxu0 0
      %1402 = vmatpush1.bf16.msra.mxu0 0
      %1403 = vmatprep.subr.bf16.mxu0 0
      %1404 = vmatpush1.bf16.msra.mxu0 0
      %1405 = vmatprep.subr.bf16.mxu0 0
      %1406 = vmatpush1.bf16.msra.mxu0 0
      %1407 = vmatprep.subr.bf16.mxu0 0
      %1408 = vmatpush1.bf16.msra.mxu0 0
      %1409 = vmatprep.subr.bf16.mxu0 0
      %1410 = vmatpush1.bf16.msra.mxu0 0
      %1411 = vmatprep.mubr.bf16.mxu0 0
      %1412 = vmatmul.mubr.bf16.gmra.mrb[0].mxu0 %v477
      %v1413 = vpop.f32.mrb[0].mxu0
      %v1414 = vadd.f32 %v1371, %v1413
      %v1415 = vpop.f32.mrb[0].mxu0
      %v1416 = vadd.f32 %v1373, %v1415
      %v1417 = vpop.f32.mrb[0].mxu0
      %v1418 = vadd.f32 %v1375, %v1417
      %v1419 = vpop.f32.mrb[0].mxu0
      %v1420 = vadd.f32 %v1377, %v1419
      %1421 = vdwg.mxu0
      %v1422 = vmax.f32 %v1414, 0.0
      %v1423 = vmax.f32 %v1416, 0.0
      %v1424 = vmax.f32 %v1418, 0.0
      %v1425 = vmax.f32 %v1420, 0.0
      %v1426 = vpack.c.bf16 %v1424, %v1422
      %v1427 = vpack.c.bf16 %v1425, %v1423
      %v1430 = vunpack.c.l.b16 %v1426
      %v1431 = vunpack.c.l.b16 %v1427
      %v1432 = vunpack.c.h.b16 %v1426
      %v1433 = vunpack.c.h.b16 %v1427
      %v1434 = vpack.c.b16 %v1431, %v1430
      %v1435 = vpack.c.b16 %v1433, %v1432
      %1438 = vst [vmem:[%s271] sm:$0xff] %v1434
      %1439 = vst [vmem:[%s271 + $0x8] sm:$0xff] %v1435
      %s1440 = smul.u32 2, %s20
      %s1441 = smul.u32 2, %s21
      %p1442 = scmp.lt.s32.totalorder %s19, 1
      %s1443 = scalar_select %p1442, %s19, 1
      %p1444 = scmp.lt.s32.totalorder %s1440, 1
      %s1445 = scalar_select %p1444, %s1440, 1
      %p1446 = scmp.lt.s32.totalorder %s1441, 1
      %s1447 = scalar_select %p1446, %s1441, 1
      %s1448 = smul.addr %s1445, 2
      %s1449 = sadd.s32 %s1447, %s1448
      %s1450 = smul.addr %s1443, 4
      %s1451 = sadd.s32 %s1449, %s1450
      %s1452 = smul.addr %s1451, 4
      %s1453 = scalar_lea.vmem %s3, %s1452
      // Predicated region
      $region33: #{centernet_forward.7} parent=31 // pred_check
        %p1454 = pneg %p135
      $region34: #{centernet_forward.7} parent=31 // pred_check_branch
        %1456 = sbr.rel (%p1454) target = $region36
      $region35: #{centernet_forward.7} parent=31 // pred_region
        %s1457 = smul.u32 2, %s20
        %s1458 = smul.u32 2, %s21
      $region36: #{centernet_forward.7} parent=31 // pred_fallthru
        _
    $region32: #{centernet_forward.7} parent=5 // pred_fallthru
      _
    %p1459 = scmp.le.s32.totalorder 2, %s9
    // Predicated region
    $region37: #{centernet_forward.7} parent=5 // pred_check
      %p1460 = pneg %p1459
    $region38: #{centernet_forward.7} parent=5 // pred_check_branch
      %1462 = sbr.rel (%p1460) target = $region40
    $region39: #{centernet_forward.7} parent=5 // pred_region
      %s1463 = ssub.s32 %s9, 2
      // Predicated region
      $region41: #{centernet_forward.7} parent=39 // pred_check
        %p1464 = pneg %p141
      $region42: #{centernet_forward.7} parent=39 // pred_check_branch
        %1466 = sbr.rel (%p1464) target = $region44
      $region43: #{centernet_forward.7} parent=39 // pred_region
        %s1467 = smul.u32 2, %s23
        %s1468 = smul.u32 2, %s24
        %p1469 = scmp.lt.s32.totalorder %s22, 1
        %s1470 = scalar_select %p1469, %s22, 1
        %p1471 = scmp.lt.s32.totalorder %s1467, 1
        %s1472 = scalar_select %p1471, %s1467, 1
        %p1473 = scmp.lt.s32.totalorder %s1468, 1
        %s1474 = scalar_select %p1473, %s1468, 1
        %s1475 = smul.addr %s1472, 2
        %s1476 = sadd.s32 %s1474, %s1475
        %s1477 = smul.addr %s1470, 4
        %s1478 = sadd.s32 %s1476, %s1477
        %s1479 = smul.addr %s1478, 4
        %s1480 = scalar_lea.vmem %s3, %s1479
      $region44: #{centernet_forward.7} parent=39 // pred_fallthru
        _
    $region40: #{centernet_forward.7} parent=5 // pred_fallthru
      _
  $region6: #{centernet_forward.7} parent=0 // loop_footer
    %s13 = sadd.s32 1, %s9
  $region7: #{centernet_forward.7} parent=0 // loop_footer_branch
    %8 = sbr.rel target = $region3
  $region8: #{centernet_forward.7} parent=0 // loop_exit
    _

// kernel: centernet_forward.8
$region0: #{centernet_forward.8}
  #allocation0 [shape = 'u32[]', space=smem, size = 0x4, offset = 0x4, fixed_abs, tag = 'smem constant byte address 0x4 - core index']
  #allocation1 [shape = 'u32[144,128]{1,0:T(1,128)}', space=vmem, size = 0x12000, scoped, tag = 'internal scratch']
  %s0 = inlined_call_operand.vmem [shape: bf16[4,16,1024], index: 0, kind: input, shape index: {}]
  %s1 = inlined_call_operand.vmem [shape: bf16[4,1024,128], index: 1, kind: input, shape index: {}]
  %s2 = inlined_call_operand.vmem [shape: f32[4,1,128], index: 2, kind: input, shape index: {}]
  %s3 = inlined_call_operand.vmem [shape: bf16[4,16,128], index: 3, kind: output, shape index: {}]
  %s4 = sld [smem:[#allocation0]]
  $region45: #{centernet_forward.8} parent=0
    _
  %s6 = ssub.s32 1, %s4
  %s7 = scalar_select 0, %s6, %s4
  loop: start=0, step=1, limit=6
  $region2: #{centernet_forward.8} parent=0 // loop_pre_header
    _
  $region3: #{centernet_forward.8} parent=0 // loop_header
    %s9 = sphi 0, %s13
    %p10 = scmp.ge.s32.totalorder %s9, 6
    %s16 = sphi 0, %s35
    %s17 = sphi 0, %s31
    %s18 = sphi 0, %s27
    %s19 = sphi 0, %s16
    %s20 = sphi 0, %s17
    %s21 = sphi 0, %s18
    %s22 = sphi 0, %s19
    %s23 = sphi 0, %s20
    %s24 = sphi 0, %s21
    %s40 = sphi 0, %s42
    %s43 = sphi 0, %s40
    %s44 = sphi 0, %s43
    %s60 = sphi 0, %s44
    %s68 = sphi 0, %s70
    %s71 = sphi 0, %s68
    %s72 = sphi 0, %s71
    %s88 = sphi 0, %s72
    %s96 = sphi 0, %s98
    %s99 = sphi 0, %s96
    %s100 = sphi 0, %s99
    %s116 = sphi 0, %s100
    %s126 = sphi 0, %s128
    %s129 = sphi 0, %s126
    %s130 = sphi 0, %s129
    %s146 = sphi 0, %s130
  $region4: #{centernet_forward.8} parent=0 // loop_header_branch
    %12 = sbr.rel (%p10) target = $region8
  $region5: #{centernet_forward.8} parent=0 // loop_body
    %s14 = ssub.s32 %s9, 1
    %s15 = ssub.s32 %s9, 2
    %s25 = sadd.s32 1, %s18
    %p26 = scmp.ge.s32.totalorder %s25, 1
    %s27 = scalar_select %p26, 0, %s25
    %s28 = sadd.s32 1, %s17
    %s29 = scalar_select %p26, %s28, %s17
    %p30 = scmp.ge.s32.totalorder %s29, 1
    %s31 = scalar_select %p30, 0, %s29
    %s32 = sadd.s32 1, %s16
    %s33 = scalar_select %p30, %s32, %s16
    %p34 = scmp.ge.s32.totalorder %s33, 4
    %s35 = scalar_select %p34, 0, %s33
    %s36 = ssub.s32 %s16, %s35
    %s37 = ssub.s32 %s17, %s31
    %s38 = sor.u32 %s36, %s37
    %p39 = scmp.eq.s32.totalorder %s38, 0
    %s41 = sadd.s32 %s40, 1
    %s42 = scalar_select %p39, %s40, %s41
    %p45 = pneg %p39
    %p46 = scmp.eq.s32.totalorder %s9, 3
    %p47 = por %p45, %p46
    %p48 = scmp.ne.s32.totalorder %s40, %s43
    %p49 = scmp.eq.s32.totalorder %s9, 0
    %p50 = por %p48, %p49
    %p51 = scmp.ne.s32.totalorder %s40, %s43
    %p52 = scmp.eq.s32.totalorder %s14, 3
    %p53 = por %p51, %p52
    %p54 = scmp.ne.s32.totalorder %s43, %s44
    %p55 = scmp.eq.s32.totalorder %s14, 0
    %p56 = por %p54, %p55
    %p57 = scmp.ne.s32.totalorder %s43, %s44
    %p58 = scmp.eq.s32.totalorder %s15, 3
    %p59 = por %p57, %p58
    %p61 = scmp.ne.s32.totalorder %s44, %s60
    %p62 = scmp.eq.s32.totalorder %s15, 0
    %p63 = por %p61, %p62
    %s64 = ssub.s32 %s16, %s35
    %s65 = ssub.s32 %s18, %s27
    %s66 = sor.u32 %s64, %s65
    %p67 = scmp.eq.s32.totalorder %s66, 0
    %s69 = sadd.s32 %s68, 1
    %s70 = scalar_select %p67, %s68, %s69
    %p73 = pneg %p67
    %p74 = scmp.eq.s32.totalorder %s9, 3
    %p75 = por %p73, %p74
    %p76 = scmp.ne.s32.totalorder %s68, %s71
    %p77 = scmp.eq.s32.totalorder %s9, 0
    %p78 = por %p76, %p77
    %p79 = scmp.ne.s32.totalorder %s68, %s71
    %p80 = scmp.eq.s32.totalorder %s14, 3
    %p81 = por %p79, %p80
    %p82 = scmp.ne.s32.totalorder %s71, %s72
    %p83 = scmp.eq.s32.totalorder %s14, 0
    %p84 = por %p82, %p83
    %p85 = scmp.ne.s32.totalorder %s71, %s72
    %p86 = scmp.eq.s32.totalorder %s15, 3
    %p87 = por %p85, %p86
    %p89 = scmp.ne.s32.totalorder %s72, %s88
    %p90 = scmp.eq.s32.totalorder %s15, 0
    %p91 = por %p89, %p90
    %s92 = ssub.s32 %s16, %s35
    %s93 = ssub.s32 %s18, %s27
    %s94 = sor.u32 %s92, %s93
    %p95 = scmp.eq.s32.totalorder %s94, 0
    %s97 = sadd.s32 %s96, 1
    %s98 = scalar_select %p95, %s96, %s97
    %p101 = pneg %p95
    %p102 = scmp.eq.s32.totalorder %s9, 3
    %p103 = por %p101, %p102
    %p104 = scmp.ne.s32.totalorder %s96, %s99
    %p105 = scmp.eq.s32.totalorder %s9, 0
    %p106 = por %p104, %p105
    %p107 = scmp.ne.s32.totalorder %s96, %s99
    %p108 = scmp.eq.s32.totalorder %s14, 3
    %p109 = por %p107, %p108
    %p110 = scmp.ne.s32.totalorder %s99, %s100
    %p111 = scmp.eq.s32.totalorder %s14, 0
    %p112 = por %p110, %p111
    %p113 = scmp.ne.s32.totalorder %s99, %s100
    %p114 = scmp.eq.s32.totalorder %s15, 3
    %p115 = por %p113, %p114
    %p117 = scmp.ne.s32.totalorder %s100, %s116
    %p118 = scmp.eq.s32.totalorder %s15, 0
    %p119 = por %p117, %p118
    %s120 = ssub.s32 %s16, %s35
    %s121 = ssub.s32 %s17, %s31
    %s122 = sor.u32 %s120, %s121
    %s123 = ssub.s32 %s18, %s27
    %s124 = sor.u32 %s122, %s123
    %p125 = scmp.eq.s32.totalorder %s124, 0
    %s127 = sadd.s32 %s126, 1
    %s128 = scalar_select %p125, %s126, %s127
    %p131 = pneg %p125
    %p132 = scmp.eq.s32.totalorder %s9, 3
    %p133 = por %p131, %p132
    %p134 = scmp.ne.s32.totalorder %s126, %s129
    %p135 = scmp.eq.s32.totalorder %s9, 0
    %p136 = por %p134, %p135
    %p137 = scmp.ne.s32.totalorder %s126, %s129
    %p138 = scmp.eq.s32.totalorder %s14, 3
    %p139 = por %p137, %p138
    %p140 = scmp.ne.s32.totalorder %s129, %s130
    %p141 = scmp.eq.s32.totalorder %s14, 0
    %p142 = por %p140, %p141
    %p143 = scmp.ne.s32.totalorder %s129, %s130
    %p144 = scmp.eq.s32.totalorder %s15, 3
    %p145 = por %p143, %p144
    %p147 = scmp.ne.s32.totalorder %s130, %s146
    %p148 = scmp.eq.s32.totalorder %s15, 0
    %p149 = por %p147, %p148
    %p150 = scmp.le.s32.totalorder 1, %s9
    %p151 = scmp.lt.s32.totalorder %s9, 5
    %p152 = pnand %p150, %p151
    %p153 = pneg %p152
    // Predicated region
    $region9: #{centernet_forward.8} parent=5 // pred_check
      _
    $region10: #{centernet_forward.8} parent=5 // pred_check_branch
      %155 = sbr.rel (%p152) target = $region12
    $region11: #{centernet_forward.8} parent=5 // pred_region
      %s156 = ssub.s32 %s9, 1
    $region12: #{centernet_forward.8} parent=5 // pred_fallthru
      _
    %p157 = scmp.lt.s32.totalorder %s9, 4
    // Predicated region
    $region13: #{centernet_forward.8} parent=5 // pred_check
      %p158 = pneg %p157
    $region14: #{centernet_forward.8} parent=5 // pred_check_branch
      %160 = sbr.rel (%p158) target = $region16
    $region15: #{centernet_forward.8} parent=5 // pred_region
      // Predicated region
      $region17: #{centernet_forward.8} parent=15 // pred_check
        %p161 = pneg %p50
      $region18: #{centernet_forward.8} parent=15 // pred_check_branch
        %163 = sbr.rel (%p161) target = $region20
      $region19: #{centernet_forward.8} parent=15 // pred_region
        %s164 = smul.u32 2, %s17
        %p165 = scmp.lt.s32.totalorder %s16, 3
        %s166 = scalar_select %p165, %s16, 3
        %p167 = scmp.lt.s32.totalorder %s164, 1
        %s168 = scalar_select %p167, %s164, 1
        %s169 = smul.addr %s168, 8
        %s170 = smul.addr %s166, 16
        %s171 = sadd.s32 %s169, %s170
        %s172 = smul.addr %s171, 4
        %s173 = scalar_lea.vmem %s0, %s172
        %s174 = smul.u32 2, %s17
      $region20: #{centernet_forward.8} parent=15 // pred_fallthru
        _
      // Predicated region
      $region21: #{centernet_forward.8} parent=15 // pred_check
        %p175 = pneg %p78
      $region22: #{centernet_forward.8} parent=15 // pred_check_branch
        %177 = sbr.rel (%p175) target = $region24
      $region23: #{centernet_forward.8} parent=15 // pred_region
        %p178 = scmp.lt.s32.totalorder %s16, 3
        %s179 = scalar_select %p178, %s16, 3
        %p180 = scmp.lt.s32.totalorder %s18, 0
        %s181 = scalar_select %p180, %s18, 0
        %s182 = smul.addr %s179, 128
        %s183 = sadd.s32 %s181, %s182
        %s184 = smul.addr %s183, 4
        %s185 = scalar_lea.vmem %s1, %s184
      $region24: #{centernet_forward.8} parent=15 // pred_fallthru
        _
      // Predicated region
      $region25: #{centernet_forward.8} parent=15 // pred_check
        %p186 = pneg %p106
      $region26: #{centernet_forward.8} parent=15 // pred_check_branch
        %188 = sbr.rel (%p186) target = $region28
      $region27: #{centernet_forward.8} parent=15 // pred_region
        %p189 = scmp.lt.s32.totalorder %s16, 3
        %s190 = scalar_select %p189, %s16, 3
        %p191 = scmp.lt.s32.totalorder %s18, 0
        %s192 = scalar_select %p191, %s18, 0
        %s193 = sadd.s32 %s192, %s190
        %s194 = scalar_lea.vmem %s2, %s193
      $region28: #{centernet_forward.8} parent=15 // pred_fallthru
        _
    $region16: #{centernet_forward.8} parent=5 // pred_fallthru
      _
    %p195 = scmp.le.s32.totalorder 1, %s9
    %p196 = scmp.lt.s32.totalorder %s9, 5
    %p197 = pnand %p195, %p196
    %p198 = pneg %p197
    // Predicated region
    $region29: #{centernet_forward.8} parent=5 // pred_check
      _
    $region30: #{centernet_forward.8} parent=5 // pred_check_branch
      %200 = sbr.rel (%p197) target = $region32
    $region31: #{centernet_forward.8} parent=5 // pred_region
      %s201 = ssub.s32 %s9, 1
      %s202 = smul.u32 2, %s20
      %p203 = scmp.lt.s32.totalorder %s19, 3
      %s204 = scalar_select %p203, %s19, 3
      %p205 = scmp.lt.s32.totalorder %s202, 1
      %s206 = scalar_select %p205, %s202, 1
      %s207 = smul.addr %s206, 8
      %s208 = smul.addr %s204, 16
      %s209 = sadd.s32 %s207, %s208
      %s210 = smul.addr %s209, 4
      %s211 = scalar_lea.vmem %s0, %s210
      %p212 = pneg %p56
      %p213 = pneg %p53
      %p214 = scmp.lt.s32.totalorder %s19, 3
      %s215 = scalar_select %p214, %s19, 3
      %p216 = scmp.lt.s32.totalorder %s21, 0
      %s217 = scalar_select %p216, %s21, 0
      %s218 = smul.addr %s215, 128
      %s219 = sadd.s32 %s217, %s218
      %s220 = smul.addr %s219, 4
      %s221 = scalar_lea.vmem %s1, %s220
      %p222 = pneg %p84
      %p223 = pneg %p81
      %p224 = scmp.lt.s32.totalorder %s19, 3
      %s225 = scalar_select %p224, %s19, 3
      %p226 = scmp.lt.s32.totalorder %s21, 0
      %s227 = scalar_select %p226, %s21, 0
      %s228 = sadd.s32 %s227, %s225
      %s229 = scalar_lea.vmem %s2, %s228
      %p230 = pneg %p112
      %p231 = pneg %p109
      %p232 = pneg %p142
      %p233 = pneg %p139
      %s234 = smul.u32 2, %s20
      %p235 = scmp.lt.s32.totalorder %s19, 3
      %s236 = scalar_select %p235, %s19, 3
      %p237 = scmp.lt.s32.totalorder %s234, 1
      %s238 = scalar_select %p237, %s234, 1
      %p239 = scmp.lt.s32.totalorder %s21, 0
      %s240 = scalar_select %p239, %s21, 0
      %s241 = sadd.s32 %s240, %s238
      %s242 = smul.addr %s236, 2
      %s243 = sadd.s32 %s241, %s242
      %s244 = smul.addr %s243, 4
      %s245 = scalar_lea.vmem %s3, %s244
      %s246 = smul.u32 2, %s20
      %p247 = scmp.lt.s32.totalorder %s19, 3
      %s248 = scalar_select %p247, %s19, 3
      %p249 = scmp.lt.s32.totalorder %s246, 1
      %s250 = scalar_select %p249, %s246, 1
      %s251 = smul.addr %s250, 8
      %s252 = smul.addr %s248, 16
      %s253 = sadd.s32 %s251, %s252
      %s254 = smul.addr %s253, 4
      %s255 = scalar_lea.vmem %s0, %s254
      %s256 = smul.u32 2, %s20
      %p257 = scmp.lt.s32.totalorder %s19, 3
      %s258 = scalar_select %p257, %s19, 3
      %p259 = scmp.lt.s32.totalorder %s21, 0
      %s260 = scalar_select %p259, %s21, 0
      %s261 = smul.addr %s258, 128
      %s262 = sadd.s32 %s260, %s261
      %s263 = smul.addr %s262, 4
      %s264 = scalar_lea.vmem %s1, %s263
      %p265 = scmp.lt.s32.totalorder %s19, 3
      %s266 = scalar_select %p265, %s19, 3
      %p267 = scmp.lt.s32.totalorder %s21, 0
      %s268 = scalar_select %p267, %s21, 0
      %s269 = sadd.s32 %s268, %s266
      %s270 = scalar_lea.vmem %s2, %s269
      %s271 = smul.u32 2, %s20
      %p272 = scmp.lt.s32.totalorder %s19, 3
      %s273 = scalar_select %p272, %s19, 3
      %p274 = scmp.lt.s32.totalorder %s271, 1
      %s275 = scalar_select %p274, %s271, 1
      %p276 = scmp.lt.s32.totalorder %s21, 0
      %s277 = scalar_select %p276, %s21, 0
      %s278 = sadd.s32 %s277, %s275
      %s279 = smul.addr %s273, 2
      %s280 = sadd.s32 %s278, %s279
      %s281 = smul.addr %s280, 4
      %s282 = scalar_lea.vmem %s3, %s281
      %s283 = smul.u32 2, %s20
      %v285 = vld [vmem:[%s255] sm:$0xff]
      %v286 = vld [vmem:[%s255 + $0x8] sm:$0xff]
      %v287 = vld [vmem:[%s255 + $0x10] sm:$0xff]
      %v288 = vld [vmem:[%s255 + $0x18] sm:$0xff]
      %v289 = vld [vmem:[%s255 + $0x20] sm:$0xff]
      %v290 = vld [vmem:[%s255 + $0x28] sm:$0xff]
      %v291 = vld [vmem:[%s255 + $0x30] sm:$0xff]
      %v292 = vld [vmem:[%s255 + $0x38] sm:$0xff]
      %v293 = vld [vmem:[%s264] sm:$0xf]
      %v294 = vld [vmem:[%s264 + $0x4] sm:$0xf]
      %v295 = vld [vmem:[%s264 + $0x8] sm:$0xf]
      %v296 = vld [vmem:[%s264 + $0xc] sm:$0xf]
      %v297 = vld [vmem:[%s264 + $0x10] sm:$0xf]
      %v298 = vld [vmem:[%s264 + $0x14] sm:$0xf]
      %v299 = vld [vmem:[%s264 + $0x18] sm:$0xf]
      %v300 = vld [vmem:[%s264 + $0x1c] sm:$0xf]
      %v301 = vld [vmem:[%s264 + $0x20] sm:$0xf]
      %v302 = vld [vmem:[%s264 + $0x24] sm:$0xf]
      %v303 = vld [vmem:[%s264 + $0x28] sm:$0xf]
      %v304 = vld [vmem:[%s264 + $0x2c] sm:$0xf]
      %v305 = vld [vmem:[%s264 + $0x30] sm:$0xf]
      %v306 = vld [vmem:[%s264 + $0x34] sm:$0xf]
      %v307 = vld [vmem:[%s264 + $0x38] sm:$0xf]
      %v308 = vld [vmem:[%s264 + $0x3c] sm:$0xf]
      %v309 = vld [vmem:[%s264 + $0x40] sm:$0xf]
      %v310 = vld [vmem:[%s264 + $0x44] sm:$0xf]
      %v311 = vld [vmem:[%s264 + $0x48] sm:$0xf]
      %v312 = vld [vmem:[%s264 + $0x4c] sm:$0xf]
      %v313 = vld [vmem:[%s264 + $0x50] sm:$0xf]
      %v314 = vld [vmem:[%s264 + $0x54] sm:$0xf]
      %v315 = vld [vmem:[%s264 + $0x58] sm:$0xf]
      %v316 = vld [vmem:[%s264 + $0x5c] sm:$0xf]
      %v317 = vld [vmem:[%s264 + $0x60] sm:$0xf]
      %v318 = vld [vmem:[%s264 + $0x64] sm:$0xf]
      %v319 = vld [vmem:[%s264 + $0x68] sm:$0xf]
      %v320 = vld [vmem:[%s264 + $0x6c] sm:$0xf]
      %v321 = vld [vmem:[%s264 + $0x70] sm:$0xf]
      %v322 = vld [vmem:[%s264 + $0x74] sm:$0xf]
      %v323 = vld [vmem:[%s264 + $0x78] sm:$0xf]
      %v324 = vld [vmem:[%s264 + $0x7c] sm:$0xf]
      %v325 = vld [vmem:[%s264 + $0x80] sm:$0xf]
      %v326 = vld [vmem:[%s264 + $0x84] sm:$0xf]
      %v327 = vld [vmem:[%s264 + $0x88] sm:$0xf]
      %v328 = vld [vmem:[%s264 + $0x8c] sm:$0xf]
      %v329 = vld [vmem:[%s264 + $0x90] sm:$0xf]
      %v330 = vld [vmem:[%s264 + $0x94] sm:$0xf]
      %v331 = vld [vmem:[%s264 + $0x98] sm:$0xf]
      %v332 = vld [vmem:[%s264 + $0x9c] sm:$0xf]
      %v333 = vld [vmem:[%s264 + $0xa0] sm:$0xf]
      %v334 = vld [vmem:[%s264 + $0xa4] sm:$0xf]
      %v335 = vld [vmem:[%s264 + $0xa8] sm:$0xf]
      %v336 = vld [vmem:[%s264 + $0xac] sm:$0xf]
      %v337 = vld [vmem:[%s264 + $0xb0] sm:$0xf]
      %v338 = vld [vmem:[%s264 + $0xb4] sm:$0xf]
      %v339 = vld [vmem:[%s264 + $0xb8] sm:$0xf]
      %v340 = vld [vmem:[%s264 + $0xbc] sm:$0xf]
      %v341 = vld [vmem:[%s264 + $0xc0] sm:$0xf]
      %v342 = vld [vmem:[%s264 + $0xc4] sm:$0xf]
      %v343 = vld [vmem:[%s264 + $0xc8] sm:$0xf]
      %v344 = vld [vmem:[%s264 + $0xcc] sm:$0xf]
      %v345 = vld [vmem:[%s264 + $0xd0] sm:$0xf]
      %v346 = vld [vmem:[%s264 + $0xd4] sm:$0xf]
      %v347 = vld [vmem:[%s264 + $0xd8] sm:$0xf]
      %v348 = vld [vmem:[%s264 + $0xdc] sm:$0xf]
      %v349 = vld [vmem:[%s264 + $0xe0] sm:$0xf]
      %v350 = vld [vmem:[%s264 + $0xe4] sm:$0xf]
      %v351 = vld [vmem:[%s264 + $0xe8] sm:$0xf]
      %v352 = vld [vmem:[%s264 + $0xec] sm:$0xf]
      %v353 = vld [vmem:[%s264 + $0xf0] sm:$0xf]
      %v354 = vld [vmem:[%s264 + $0xf4] sm:$0xf]
      %v355 = vld [vmem:[%s264 + $0xf8] sm:$0xf]
      %v356 = vld [vmem:[%s264 + $0xfc] sm:$0xf]
      %v357 = vld [vmem:[%s264 + $0x100] sm:$0xf]
      %v358 = vld [vmem:[%s264 + $0x104] sm:$0xf]
      %v359 = vld [vmem:[%s264 + $0x108] sm:$0xf]
      %v360 = vld [vmem:[%s264 + $0x10c] sm:$0xf]
      %v361 = vld [vmem:[%s264 + $0x110] sm:$0xf]
      %v362 = vld [vmem:[%s264 + $0x114] sm:$0xf]
      %v363 = vld [vmem:[%s264 + $0x118] sm:$0xf]
      %v364 = vld [vmem:[%s264 + $0x11c] sm:$0xf]
      %v365 = vld [vmem:[%s264 + $0x120] sm:$0xf]
      %v366 = vld [vmem:[%s264 + $0x124] sm:$0xf]
      %v367 = vld [vmem:[%s264 + $0x128] sm:$0xf]
      %v368 = vld [vmem:[%s264 + $0x12c] sm:$0xf]
      %v369 = vld [vmem:[%s264 + $0x130] sm:$0xf]
      %v370 = vld [vmem:[%s264 + $0x134] sm:$0xf]
      %v371 = vld [vmem:[%s264 + $0x138] sm:$0xf]
      %v372 = vld [vmem:[%s264 + $0x13c] sm:$0xf]
      %v373 = vld [vmem:[%s264 + $0x140] sm:$0xf]
      %v374 = vld [vmem:[%s264 + $0x144] sm:$0xf]
      %v375 = vld [vmem:[%s264 + $0x148] sm:$0xf]
      %v376 = vld [vmem:[%s264 + $0x14c] sm:$0xf]
      %v377 = vld [vmem:[%s264 + $0x150] sm:$0xf]
      %v378 = vld [vmem:[%s264 + $0x154] sm:$0xf]
      %v379 = vld [vmem:[%s264 + $0x158] sm:$0xf]
      %v380 = vld [vmem:[%s264 + $0x15c] sm:$0xf]
      %v381 = vld [vmem:[%s264 + $0x160] sm:$0xf]
      %v382 = vld [vmem:[%s264 + $0x164] sm:$0xf]
      %v383 = vld [vmem:[%s264 + $0x168] sm:$0xf]
      %v384 = vld [vmem:[%s264 + $0x16c] sm:$0xf]
      %v385 = vld [vmem:[%s264 + $0x170] sm:$0xf]
      %v386 = vld [vmem:[%s264 + $0x174] sm:$0xf]
      %v387 = vld [vmem:[%s264 + $0x178] sm:$0xf]
      %v388 = vld [vmem:[%s264 + $0x17c] sm:$0xf]
      %v389 = vld [vmem:[%s264 + $0x180] sm:$0xf]
      %v390 = vld [vmem:[%s264 + $0x184] sm:$0xf]
      %v391 = vld [vmem:[%s264 + $0x188] sm:$0xf]
      %v392 = vld [vmem:[%s264 + $0x18c] sm:$0xf]
      %v393 = vld [vmem:[%s264 + $0x190] sm:$0xf]
      %v394 = vld [vmem:[%s264 + $0x194] sm:$0xf]
      %v395 = vld [vmem:[%s264 + $0x198] sm:$0xf]
      %v396 = vld [vmem:[%s264 + $0x19c] sm:$0xf]
      %v397 = vld [vmem:[%s264 + $0x1a0] sm:$0xf]
      %v398 = vld [vmem:[%s264 + $0x1a4] sm:$0xf]
      %v399 = vld [vmem:[%s264 + $0x1a8] sm:$0xf]
      %v400 = vld [vmem:[%s264 + $0x1ac] sm:$0xf]
      %v401 = vld [vmem:[%s264 + $0x1b0] sm:$0xf]
      %v402 = vld [vmem:[%s264 + $0x1b4] sm:$0xf]
      %v403 = vld [vmem:[%s264 + $0x1b8] sm:$0xf]
      %v404 = vld [vmem:[%s264 + $0x1bc] sm:$0xf]
      %v405 = vld [vmem:[%s264 + $0x1c0] sm:$0xf]
      %v406 = vld [vmem:[%s264 + $0x1c4] sm:$0xf]
      %v407 = vld [vmem:[%s264 + $0x1c8] sm:$0xf]
      %v408 = vld [vmem:[%s264 + $0x1cc] sm:$0xf]
      %v409 = vld [vmem:[%s264 + $0x1d0] sm:$0xf]
      %v410 = vld [vmem:[%s264 + $0x1d4] sm:$0xf]
      %v411 = vld [vmem:[%s264 + $0x1d8] sm:$0xf]
      %v412 = vld [vmem:[%s264 + $0x1dc] sm:$0xf]
      %v413 = vld [vmem:[%s264 + $0x1e0] sm:$0xf]
      %v414 = vld [vmem:[%s264 + $0x1e4] sm:$0xf]
      %v415 = vld [vmem:[%s264 + $0x1e8] sm:$0xf]
      %v416 = vld [vmem:[%s264 + $0x1ec] sm:$0xf]
      %v417 = vld [vmem:[%s264 + $0x1f0] sm:$0xf]
      %v418 = vld [vmem:[%s264 + $0x1f4] sm:$0xf]
      %v419 = vld [vmem:[%s264 + $0x1f8] sm:$0xf]
      %v420 = vld [vmem:[%s264 + $0x1fc] sm:$0xf]
      %v421 = vld [vmem:[%s270] sm:$0x1]
      %v423 = vlaneseq
      %v424 = vshrl.u32 %v423, 7
      %v425 = vsub.s32 0, %v424
      %v426 = vrot.slane %v421, %v425
      %v436 = vunpack.c.l.b16 %v285
      %v437 = vunpack.c.h.b16 %v285
      %v438 = vunpack.c.l.b16 %v286
      %v439 = vunpack.c.h.b16 %v286
      %v440 = vunpack.c.l.b16 %v287
      %v441 = vunpack.c.h.b16 %v287
      %v442 = vunpack.c.l.b16 %v288
      %v443 = vunpack.c.h.b16 %v288
      %v444 = vunpack.c.l.b16 %v289
      %v445 = vunpack.c.h.b16 %v289
      %v446 = vunpack.c.l.b16 %v290
      %v447 = vunpack.c.h.b16 %v290
      %v448 = vunpack.c.l.b16 %v291
      %v449 = vunpack.c.h.b16 %v291
      %v450 = vunpack.c.l.b16 %v292
      %v451 = vunpack.c.h.b16 %v292
      %v452 = vpack.c.b16 %v444, %v436
      %v453 = vpack.c.b16 %v445, %v437
      %v454 = vpack.c.b16 %v446, %v438
      %v455 = vpack.c.b16 %v447, %v439
      %v456 = vpack.c.b16 %v448, %v440
      %v457 = vpack.c.b16 %v449, %v441
      %v458 = vpack.c.b16 %v450, %v442
      %v459 = vpack.c.b16 %v451, %v443
      %v596 = vunpack.c.l.b16 %v293
      %v597 = vunpack.c.l.b16 %v294
      %v598 = vunpack.c.l.b16 %v295
      %v599 = vunpack.c.l.b16 %v296
      %v600 = vunpack.c.l.b16 %v297
      %v601 = vunpack.c.l.b16 %v298
      %v602 = vunpack.c.l.b16 %v299
      %v603 = vunpack.c.l.b16 %v300
      %v604 = vunpack.c.l.b16 %v301
      %v605 = vunpack.c.l.b16 %v302
      %v606 = vunpack.c.l.b16 %v303
      %v607 = vunpack.c.l.b16 %v304
      %v608 = vunpack.c.l.b16 %v305
      %v609 = vunpack.c.l.b16 %v306
      %v610 = vunpack.c.l.b16 %v307
      %v611 = vunpack.c.l.b16 %v308
      %v612 = vunpack.c.l.b16 %v309
      %v613 = vunpack.c.l.b16 %v310
      %v614 = vunpack.c.l.b16 %v311
      %v615 = vunpack.c.l.b16 %v312
      %v616 = vunpack.c.l.b16 %v313
      %v617 = vunpack.c.l.b16 %v314
      %v618 = vunpack.c.l.b16 %v315
      %v619 = vunpack.c.l.b16 %v316
      %v620 = vunpack.c.l.b16 %v317
      %v621 = vunpack.c.l.b16 %v318
      %v622 = vunpack.c.l.b16 %v319
      %v623 = vunpack.c.l.b16 %v320
      %v624 = vunpack.c.l.b16 %v321
      %v625 = vunpack.c.l.b16 %v322
      %v626 = vunpack.c.l.b16 %v323
      %v627 = vunpack.c.l.b16 %v324
      %v628 = vunpack.c.l.b16 %v325
      %v629 = vunpack.c.l.b16 %v326
      %v630 = vunpack.c.l.b16 %v327
      %v631 = vunpack.c.l.b16 %v328
      %v632 = vunpack.c.l.b16 %v329
      %v633 = vunpack.c.l.b16 %v330
      %v634 = vunpack.c.l.b16 %v331
      %v635 = vunpack.c.l.b16 %v332
      %v636 = vunpack.c.l.b16 %v333
      %v637 = vunpack.c.l.b16 %v334
      %v638 = vunpack.c.l.b16 %v335
      %v639 = vunpack.c.l.b16 %v336
      %v640 = vunpack.c.l.b16 %v337
      %v641 = vunpack.c.l.b16 %v338
      %v642 = vunpack.c.l.b16 %v339
      %v643 = vunpack.c.l.b16 %v340
      %v644 = vunpack.c.l.b16 %v341
      %v645 = vunpack.c.l.b16 %v342
      %v646 = vunpack.c.l.b16 %v343
      %v647 = vunpack.c.l.b16 %v344
      %v648 = vunpack.c.l.b16 %v345
      %v649 = vunpack.c.l.b16 %v346
      %v650 = vunpack.c.l.b16 %v347
      %v651 = vunpack.c.l.b16 %v348
      %v652 = vunpack.c.l.b16 %v349
      %v653 = vunpack.c.l.b16 %v350
      %v654 = vunpack.c.l.b16 %v351
      %v655 = vunpack.c.l.b16 %v352
      %v656 = vunpack.c.l.b16 %v353
      %v657 = vunpack.c.l.b16 %v354
      %v658 = vunpack.c.l.b16 %v355
      %v659 = vunpack.c.l.b16 %v356
      %v660 = vunpack.c.l.b16 %v357
      %v661 = vunpack.c.l.b16 %v358
      %v662 = vunpack.c.l.b16 %v359
      %v663 = vunpack.c.l.b16 %v360
      %v664 = vunpack.c.l.b16 %v361
      %v665 = vunpack.c.l.b16 %v362
      %v666 = vunpack.c.l.b16 %v363
      %v667 = vunpack.c.l.b16 %v364
      %v668 = vunpack.c.l.b16 %v365
      %v669 = vunpack.c.l.b16 %v366
      %v670 = vunpack.c.l.b16 %v367
      %v671 = vunpack.c.l.b16 %v368
      %v672 = vunpack.c.l.b16 %v369
      %v673 = vunpack.c.l.b16 %v370
      %v674 = vunpack.c.l.b16 %v371
      %v675 = vunpack.c.l.b16 %v372
      %v676 = vunpack.c.l.b16 %v373
      %v677 = vunpack.c.l.b16 %v374
      %v678 = vunpack.c.l.b16 %v375
      %v679 = vunpack.c.l.b16 %v376
      %v680 = vunpack.c.l.b16 %v377
      %v681 = vunpack.c.l.b16 %v378
      %v682 = vunpack.c.l.b16 %v379
      %v683 = vunpack.c.l.b16 %v380
      %v684 = vunpack.c.l.b16 %v381
      %v685 = vunpack.c.l.b16 %v382
      %v686 = vunpack.c.l.b16 %v383
      %v687 = vunpack.c.l.b16 %v384
      %v688 = vunpack.c.l.b16 %v385
      %v689 = vunpack.c.l.b16 %v386
      %v690 = vunpack.c.l.b16 %v387
      %v691 = vunpack.c.l.b16 %v388
      %v692 = vunpack.c.l.b16 %v389
      %v693 = vunpack.c.l.b16 %v390
      %v694 = vunpack.c.l.b16 %v391
      %v695 = vunpack.c.l.b16 %v392
      %v696 = vunpack.c.l.b16 %v393
      %v697 = vunpack.c.l.b16 %v394
      %v698 = vunpack.c.l.b16 %v395
      %v699 = vunpack.c.l.b16 %v396
      %v700 = vunpack.c.l.b16 %v397
      %v701 = vunpack.c.l.b16 %v398
      %v702 = vunpack.c.l.b16 %v399
      %v703 = vunpack.c.l.b16 %v400
      %v704 = vunpack.c.l.b16 %v401
      %v705 = vunpack.c.l.b16 %v402
      %v706 = vunpack.c.l.b16 %v403
      %v707 = vunpack.c.l.b16 %v404
      %v708 = vunpack.c.l.b16 %v405
      %v709 = vunpack.c.l.b16 %v406
      %v710 = vunpack.c.l.b16 %v407
      %v711 = vunpack.c.l.b16 %v408
      %v712 = vunpack.c.l.b16 %v409
      %v713 = vunpack.c.l.b16 %v410
      %v714 = vunpack.c.l.b16 %v411
      %v715 = vunpack.c.l.b16 %v412
      %v716 = vunpack.c.l.b16 %v413
      %v717 = vunpack.c.l.b16 %v414
      %v718 = vunpack.c.l.b16 %v415
      %v719 = vunpack.c.l.b16 %v416
      %v720 = vunpack.c.l.b16 %v417
      %v721 = vunpack.c.l.b16 %v418
      %v722 = vunpack.c.l.b16 %v419
      %v723 = vunpack.c.l.b16 %v420
      %v724 = vpack.c.b16 %v597, %v596
      %v725 = vpack.c.b16 %v599, %v598
      %v726 = vpack.c.b16 %v601, %v600
      %v727 = vpack.c.b16 %v603, %v602
      %v728 = vpack.c.b16 %v605, %v604
      %v729 = vpack.c.b16 %v607, %v606
      %v730 = vpack.c.b16 %v609, %v608
      %v731 = vpack.c.b16 %v611, %v610
      %v732 = vpack.c.b16 %v613, %v612
      %v733 = vpack.c.b16 %v615, %v614
      %v734 = vpack.c.b16 %v617, %v616
      %v735 = vpack.c.b16 %v619, %v618
      %v736 = vpack.c.b16 %v621, %v620
      %v737 = vpack.c.b16 %v623, %v622
      %v738 = vpack.c.b16 %v625, %v624
      %v739 = vpack.c.b16 %v627, %v626
      %v740 = vpack.c.b16 %v629, %v628
      %v741 = vpack.c.b16 %v631, %v630
      %v742 = vpack.c.b16 %v633, %v632
      %v743 = vpack.c.b16 %v635, %v634
      %v744 = vpack.c.b16 %v637, %v636
      %v745 = vpack.c.b16 %v639, %v638
      %v746 = vpack.c.b16 %v641, %v640
      %v747 = vpack.c.b16 %v643, %v642
      %v748 = vpack.c.b16 %v645, %v644
      %v749 = vpack.c.b16 %v647, %v646
      %v750 = vpack.c.b16 %v649, %v648
      %v751 = vpack.c.b16 %v651, %v650
      %v752 = vpack.c.b16 %v653, %v652
      %v753 = vpack.c.b16 %v655, %v654
      %v754 = vpack.c.b16 %v657, %v656
      %v755 = vpack.c.b16 %v659, %v658
      %v756 = vpack.c.b16 %v661, %v660
      %v757 = vpack.c.b16 %v663, %v662
      %v758 = vpack.c.b16 %v665, %v664
      %v759 = vpack.c.b16 %v667, %v666
      %v760 = vpack.c.b16 %v669, %v668
      %v761 = vpack.c.b16 %v671, %v670
      %v762 = vpack.c.b16 %v673, %v672
      %v763 = vpack.c.b16 %v675, %v674
      %v764 = vpack.c.b16 %v677, %v676
      %v765 = vpack.c.b16 %v679, %v678
      %v766 = vpack.c.b16 %v681, %v680
      %v767 = vpack.c.b16 %v683, %v682
      %v768 = vpack.c.b16 %v685, %v684
      %v769 = vpack.c.b16 %v687, %v686
      %v770 = vpack.c.b16 %v689, %v688
      %v771 = vpack.c.b16 %v691, %v690
      %v772 = vpack.c.b16 %v693, %v692
      %v773 = vpack.c.b16 %v695, %v694
      %v774 = vpack.c.b16 %v697, %v696
      %v775 = vpack.c.b16 %v699, %v698
      %v776 = vpack.c.b16 %v701, %v700
      %v777 = vpack.c.b16 %v703, %v702
      %v778 = vpack.c.b16 %v705, %v704
      %v779 = vpack.c.b16 %v707, %v706
      %v780 = vpack.c.b16 %v709, %v708
      %v781 = vpack.c.b16 %v711, %v710
      %v782 = vpack.c.b16 %v713, %v712
      %v783 = vpack.c.b16 %v715, %v714
      %v784 = vpack.c.b16 %v717, %v716
      %v785 = vpack.c.b16 %v719, %v718
      %v786 = vpack.c.b16 %v721, %v720
      %v787 = vpack.c.b16 %v723, %v722
      %852 = vmatprep.subr.bf16.mxu0 0
      %853 = vmatpush1.bf16.msra.mxu0 %v724
      %854 = vmatprep.subr.bf16.mxu0 0
      %855 = vmatpush1.bf16.msra.mxu0 %v725
      %856 = vmatprep.subr.bf16.mxu0 0
      %857 = vmatpush1.bf16.msra.mxu0 %v726
      %858 = vmatprep.subr.bf16.mxu0 0
      %859 = vmatpush1.bf16.msra.mxu0 %v727
      %860 = vmatprep.subr.bf16.mxu0 0
      %861 = vmatpush1.bf16.msra.mxu0 %v728
      %862 = vmatprep.subr.bf16.mxu0 0
      %863 = vmatpush1.bf16.msra.mxu0 %v729
      %864 = vmatprep.subr.bf16.mxu0 0
      %865 = vmatpush1.bf16.msra.mxu0 %v730
      %866 = vmatprep.subr.bf16.mxu0 0
      %867 = vmatpush1.bf16.msra.mxu0 %v731
      %868 = vmatprep.subr.bf16.mxu0 0
      %869 = vmatpush1.bf16.msra.mxu0 %v732
      %870 = vmatprep.subr.bf16.mxu0 0
      %871 = vmatpush1.bf16.msra.mxu0 %v733
      %872 = vmatprep.subr.bf16.mxu0 0
      %873 = vmatpush1.bf16.msra.mxu0 %v734
      %874 = vmatprep.subr.bf16.mxu0 0
      %875 = vmatpush1.bf16.msra.mxu0 %v735
      %876 = vmatprep.subr.bf16.mxu0 0
      %877 = vmatpush1.bf16.msra.mxu0 %v736
      %878 = vmatprep.subr.bf16.mxu0 0
      %879 = vmatpush1.bf16.msra.mxu0 %v737
      %880 = vmatprep.subr.bf16.mxu0 0
      %881 = vmatpush1.bf16.msra.mxu0 %v738
      %882 = vmatprep.subr.bf16.mxu0 0
      %883 = vmatpush1.bf16.msra.mxu0 %v739
      %884 = vmatprep.mubr.bf16.mxu0 %v453
      %885 = vmatmul.mubr.bf16.gmra.mrb[0].mxu0 %v452
      %v886 = vpop.f32.mrb[0].mxu0
      %v887 = vadd.f32 %v426, %v886
      %v888 = vpop.f32.mrb[0].mxu0
      %v889 = vpop.f32.mrb[0].mxu0
      %v890 = vadd.f32 %v426, %v889
      %v891 = vpop.f32.mrb[0].mxu0
      %892 = vdwg.mxu0
      %893 = vmatprep.subr.bf16.mxu0 0
      %894 = vmatpush1.bf16.msra.mxu0 %v740
      %895 = vmatprep.subr.bf16.mxu0 0
      %896 = vmatpush1.bf16.msra.mxu0 %v741
      %897 = vmatprep.subr.bf16.mxu0 0
      %898 = vmatpush1.bf16.msra.mxu0 %v742
      %899 = vmatprep.subr.bf16.mxu0 0
      %900 = vmatpush1.bf16.msra.mxu0 %v743
      %901 = vmatprep.subr.bf16.mxu0 0
      %902 = vmatpush1.bf16.msra.mxu0 %v744
      %903 = vmatprep.subr.bf16.mxu0 0
      %904 = vmatpush1.bf16.msra.mxu0 %v745
      %905 = vmatprep.subr.bf16.mxu0 0
      %906 = vmatpush1.bf16.msra.mxu0 %v746
      %907 = vmatprep.subr.bf16.mxu0 0
      %908 = vmatpush1.bf16.msra.mxu0 %v747
      %909 = vmatprep.subr.bf16.mxu0 0
      %910 = vmatpush1.bf16.msra.mxu0 %v748
      %911 = vmatprep.subr.bf16.mxu0 0
      %912 = vmatpush1.bf16.msra.mxu0 %v749
      %913 = vmatprep.subr.bf16.mxu0 0
      %914 = vmatpush1.bf16.msra.mxu0 %v750
      %915 = vmatprep.subr.bf16.mxu0 0
      %916 = vmatpush1.bf16.msra.mxu0 %v751
      %917 = vmatprep.subr.bf16.mxu0 0
      %918 = vmatpush1.bf16.msra.mxu0 %v752
      %919 = vmatprep.subr.bf16.mxu0 0
      %920 = vmatpush1.bf16.msra.mxu0 %v753
      %921 = vmatprep.subr.bf16.mxu0 0
      %922 = vmatpush1.bf16.msra.mxu0 %v754
      %923 = vmatprep.subr.bf16.mxu0 0
      %924 = vmatpush1.bf16.msra.mxu0 %v755
      %925 = vmatprep.mubr.bf16.mxu0 %v455
      %926 = vmatmul.mubr.bf16.gmra.mrb[0].mxu0 %v454
      %v927 = vpop.f32.mrb[0].mxu0
      %v928 = vadd.f32 %v887, %v927
      %v929 = vpop.f32.mrb[0].mxu0
      %v930 = vpop.f32.mrb[0].mxu0
      %v931 = vadd.f32 %v890, %v930
      %v932 = vpop.f32.mrb[0].mxu0
      %933 = vdwg.mxu0
      %934 = vmatprep.subr.bf16.mxu0 0
      %935 = vmatpush1.bf16.msra.mxu0 %v756
      %936 = vmatprep.subr.bf16.mxu0 0
      %937 = vmatpush1.bf16.msra.mxu0 %v757
      %938 = vmatprep.subr.bf16.mxu0 0
      %939 = vmatpush1.bf16.msra.mxu0 %v758
      %940 = vmatprep.subr.bf16.mxu0 0
      %941 = vmatpush1.bf16.msra.mxu0 %v759
      %942 = vmatprep.subr.bf16.mxu0 0
      %943 = vmatpush1.bf16.msra.mxu0 %v760
      %944 = vmatprep.subr.bf16.mxu0 0
      %945 = vmatpush1.bf16.msra.mxu0 %v761
      %946 = vmatprep.subr.bf16.mxu0 0
      %947 = vmatpush1.bf16.msra.mxu0 %v762
      %948 = vmatprep.subr.bf16.mxu0 0
      %949 = vmatpush1.bf16.msra.mxu0 %v763
      %950 = vmatprep.subr.bf16.mxu0 0
      %951 = vmatpush1.bf16.msra.mxu0 %v764
      %952 = vmatprep.subr.bf16.mxu0 0
      %953 = vmatpush1.bf16.msra.mxu0 %v765
      %954 = vmatprep.subr.bf16.mxu0 0
      %955 = vmatpush1.bf16.msra.mxu0 %v766
      %956 = vmatprep.subr.bf16.mxu0 0
      %957 = vmatpush1.bf16.msra.mxu0 %v767
      %958 = vmatprep.subr.bf16.mxu0 0
      %959 = vmatpush1.bf16.msra.mxu0 %v768
      %960 = vmatprep.subr.bf16.mxu0 0
      %961 = vmatpush1.bf16.msra.mxu0 %v769
      %962 = vmatprep.subr.bf16.mxu0 0
      %963 = vmatpush1.bf16.msra.mxu0 %v770
      %964 = vmatprep.subr.bf16.mxu0 0
      %965 = vmatpush1.bf16.msra.mxu0 %v771
      %966 = vmatprep.mubr.bf16.mxu0 %v457
      %967 = vmatmul.mubr.bf16.gmra.mrb[0].mxu0 %v456
      %v968 = vpop.f32.mrb[0].mxu0
      %v969 = vadd.f32 %v928, %v968
      %v970 = vpop.f32.mrb[0].mxu0
      %v971 = vpop.f32.mrb[0].mxu0
      %v972 = vadd.f32 %v931, %v971
      %v973 = vpop.f32.mrb[0].mxu0
      %974 = vdwg.mxu0
      %975 = vmatprep.subr.bf16.mxu0 0
      %976 = vmatpush1.bf16.msra.mxu0 %v772
      %977 = vmatprep.subr.bf16.mxu0 0
      %978 = vmatpush1.bf16.msra.mxu0 %v773
      %979 = vmatprep.subr.bf16.mxu0 0
      %980 = vmatpush1.bf16.msra.mxu0 %v774
      %981 = vmatprep.subr.bf16.mxu0 0
      %982 = vmatpush1.bf16.msra.mxu0 %v775
      %983 = vmatprep.subr.bf16.mxu0 0
      %984 = vmatpush1.bf16.msra.mxu0 %v776
      %985 = vmatprep.subr.bf16.mxu0 0
      %986 = vmatpush1.bf16.msra.mxu0 %v777
      %987 = vmatprep.subr.bf16.mxu0 0
      %988 = vmatpush1.bf16.msra.mxu0 %v778
      %989 = vmatprep.subr.bf16.mxu0 0
      %990 = vmatpush1.bf16.msra.mxu0 %v779
      %991 = vmatprep.subr.bf16.mxu0 0
      %992 = vmatpush1.bf16.msra.mxu0 %v780
      %993 = vmatprep.subr.bf16.mxu0 0
      %994 = vmatpush1.bf16.msra.mxu0 %v781
      %995 = vmatprep.subr.bf16.mxu0 0
      %996 = vmatpush1.bf16.msra.mxu0 %v782
      %997 = vmatprep.subr.bf16.mxu0 0
      %998 = vmatpush1.bf16.msra.mxu0 %v783
      %999 = vmatprep.subr.bf16.mxu0 0
      %1000 = vmatpush1.bf16.msra.mxu0 %v784
      %1001 = vmatprep.subr.bf16.mxu0 0
      %1002 = vmatpush1.bf16.msra.mxu0 %v785
      %1003 = vmatprep.subr.bf16.mxu0 0
      %1004 = vmatpush1.bf16.msra.mxu0 %v786
      %1005 = vmatprep.subr.bf16.mxu0 0
      %1006 = vmatpush1.bf16.msra.mxu0 %v787
      %1007 = vmatprep.mubr.bf16.mxu0 %v459
      %1008 = vmatmul.mubr.bf16.gmra.mrb[0].mxu0 %v458
      %v1009 = vpop.f32.mrb[0].mxu0
      %v1010 = vadd.f32 %v969, %v1009
      %v1011 = vpop.f32.mrb[0].mxu0
      %v1012 = vpop.f32.mrb[0].mxu0
      %v1013 = vadd.f32 %v972, %v1012
      %v1014 = vpop.f32.mrb[0].mxu0
      %1015 = vdwg.mxu0
      %v1016 = vmax.f32 %v1010, 0.0
      %v1017 = vmax.f32 %v1013, 0.0
      %v1018 = vpack.c.bf16 %v1017, %v1016
      %v1020 = vunpack.c.l.b16 %v1018
      %v1021 = vunpack.c.h.b16 %v1018
      %v1022 = vpack.c.b16 %v1020, %v1020
      %v1023 = vpack.c.b16 %v1021, %v1021
      %1026 = vst [vmem:[%s282] sm:$0xf] %v1022
      %1027 = vst [vmem:[%s282 + $0x4] sm:$0xf] %v1023
      %s1028 = smul.u32 2, %s20
      %p1029 = scmp.lt.s32.totalorder %s19, 3
      %s1030 = scalar_select %p1029, %s19, 3
      %p1031 = scmp.lt.s32.totalorder %s1028, 1
      %s1032 = scalar_select %p1031, %s1028, 1
      %p1033 = scmp.lt.s32.totalorder %s21, 0
      %s1034 = scalar_select %p1033, %s21, 0
      %s1035 = sadd.s32 %s1034, %s1032
      %s1036 = smul.addr %s1030, 2
      %s1037 = sadd.s32 %s1035, %s1036
      %s1038 = smul.addr %s1037, 4
      %s1039 = scalar_lea.vmem %s3, %s1038
      // Predicated region
      $region33: #{centernet_forward.8} parent=31 // pred_check
        %p1040 = pneg %p139
      $region34: #{centernet_forward.8} parent=31 // pred_check_branch
        %1042 = sbr.rel (%p1040) target = $region36
      $region35: #{centernet_forward.8} parent=31 // pred_region
        %s1043 = smul.u32 2, %s20
      $region36: #{centernet_forward.8} parent=31 // pred_fallthru
        _
    $region32: #{centernet_forward.8} parent=5 // pred_fallthru
      _
    %p1044 = scmp.le.s32.totalorder 2, %s9
    // Predicated region
    $region37: #{centernet_forward.8} parent=5 // pred_check
      %p1045 = pneg %p1044
    $region38: #{centernet_forward.8} parent=5 // pred_check_branch
      %1047 = sbr.rel (%p1045) target = $region40
    $region39: #{centernet_forward.8} parent=5 // pred_region
      %s1048 = ssub.s32 %s9, 2
      // Predicated region
      $region41: #{centernet_forward.8} parent=39 // pred_check
        %p1049 = pneg %p145
      $region42: #{centernet_forward.8} parent=39 // pred_check_branch
        %1051 = sbr.rel (%p1049) target = $region44
      $region43: #{centernet_forward.8} parent=39 // pred_region
        %s1052 = smul.u32 2, %s23
        %p1053 = scmp.lt.s32.totalorder %s22, 3
        %s1054 = scalar_select %p1053, %s22, 3
        %p1055 = scmp.lt.s32.totalorder %s1052, 1
        %s1056 = scalar_select %p1055, %s1052, 1
        %p1057 = scmp.lt.s32.totalorder %s24, 0
        %s1058 = scalar_select %p1057, %s24, 0
        %s1059 = sadd.s32 %s1058, %s1056
        %s1060 = smul.addr %s1054, 2
        %s1061 = sadd.s32 %s1059, %s1060
        %s1062 = smul.addr %s1061, 4
        %s1063 = scalar_lea.vmem %s3, %s1062
      $region44: #{centernet_forward.8} parent=39 // pred_fallthru
        _
    $region40: #{centernet_forward.8} parent=5 // pred_fallthru
      _
  $region6: #{centernet_forward.8} parent=0 // loop_footer
    %s13 = sadd.s32 1, %s9
  $region7: #{centernet_forward.8} parent=0 // loop_footer_branch
    %8 = sbr.rel target = $region3
  $region8: #{centernet_forward.8} parent=0 // loop_exit
    _

// kernel: centernet_forward.9
$region0: #{centernet_forward.9}
  #allocation0 [shape = 'u32[]', space=smem, size = 0x4, offset = 0x4, fixed_abs, tag = 'smem constant byte address 0x4 - core index']
  #allocation1 [shape = 'u32[144,128]{1,0:T(1,128)}', space=vmem, size = 0x12000, scoped, tag = 'internal scratch']
  #allocation2 [shape = 'f32[1]{0:T(128)S(6)}', space=smem, size = 0x200, scoped, tag = 'scoped memory for centernet_forward.9']
  %s0 = inlined_call_operand.vmem [shape: bf16[2,64,512], index: 0, kind: input, shape index: {}]
  %s1 = inlined_call_operand.vmem [shape: bf16[4,512,128], index: 1, kind: input, shape index: {}]
  %s2 = inlined_call_operand.vmem [shape: f32[1,128], index: 2, kind: input, shape index: {}]
  %s3 = inlined_call_operand.vmem [shape: bf16[128,16], index: 3, kind: input, shape index: {}]
  %s4 = inlined_call_operand.vmem [shape: bf16[4,16,16], index: 4, kind: input, shape index: {}]
  %s5 = inlined_call_operand.vmem [shape: f32[4,16,16], index: 5, kind: input, shape index: {}]
  %s6 = inlined_call_operand.<no memory space> [shape: f32[1], index: 6, kind: input, shape index: {}]
  %s7 = inlined_call_operand.hbm [shape: f32[2,16,16], index: 7, kind: output, shape index: {}]
  %s8 = sld [smem:[#allocation0]]
  $region61: #{centernet_forward.9} parent=0
    _
  %s10 = ssub.s32 1, %s8
  %s11 = scalar_select 0, %s10, %s8
  %12 = sst [smem:[#allocation2]] %s6
  $region1: #{centernet_forward.9} parent=0
    #allocation3 [shape = 'u8[16384]{0}', space=vmem, size = 0x4000, scoped, tag = 'output window, operand 0']
    #allocation4 [shape = 's32[2]{0}', space=sflag, size = 0x8, scoped, tag = 'scoped memory for centernet_forward.9']
    %13 = vsyncpa [#allocation4], 0
    %s14 = scalar_lea.sflag [#allocation4], 1
    %15 = vsyncpa %s14, 0
    loop: start=0, step=1, limit=4
    $region2: #{centernet_forward.9} parent=1 // loop_pre_header
      _
    $region3: #{centernet_forward.9} parent=1 // loop_header
      %s17 = sphi 0, %s21
      %p18 = scmp.ge.s32.totalorder %s17, 4
      %s27 = sphi 0, %s29
      %s30 = sphi 0, %s27
      %s31 = sphi 0, %s30
      %s47 = sphi 0, %s31
      %s51 = sphi 0, %s51
      %s53 = sphi 0, %s51
      %s54 = sphi 0, %s53
      %s68 = sphi 0, %s54
      %s72 = sphi 0, %s72
      %s74 = sphi 0, %s72
      %s75 = sphi 0, %s74
      %s89 = sphi 0, %s75
      %s93 = sphi 0, %s93
      %s95 = sphi 0, %s93
      %s96 = sphi 0, %s95
      %s110 = sphi 0, %s96
      %s114 = sphi 0, %s114
      %s116 = sphi 0, %s114
      %s117 = sphi 0, %s116
      %s131 = sphi 0, %s117
      %s135 = sphi 0, %s135
      %s137 = sphi 0, %s135
      %s138 = sphi 0, %s137
      %s152 = sphi 0, %s138
      %s156 = sphi 0, %s156
      %s158 = sphi 0, %s156
      %s159 = sphi 0, %s158
      %s173 = sphi 0, %s159
      %s179 = sphi 0, %s181
      %s182 = sphi 0, %s179
      %s183 = sphi 0, %s182
      %s199 = sphi 0, %s183
    $region4: #{centernet_forward.9} parent=1 // loop_header_branch
      %20 = sbr.rel (%p18) target = $region8
    $region5: #{centernet_forward.9} parent=1 // loop_body
      %s22 = ssub.s32 %s17, 1
      %s23 = ssub.s32 %s17, 2
      %s24 = sadd.s32 %s17, 1
      %s25 = ssub.s32 %s17, %s24
      %p26 = scmp.eq.s32.totalorder %s25, 0
      %s28 = sadd.s32 %s27, 1
      %s29 = scalar_select %p26, %s27, %s28
      %p32 = pneg %p26
      %p33 = scmp.eq.s32.totalorder %s17, 1
      %p34 = por %p32, %p33
      %p35 = scmp.ne.s32.totalorder %s27, %s30
      %p36 = scmp.eq.s32.totalorder %s17, 0
      %p37 = por %p35, %p36
      %p38 = scmp.ne.s32.totalorder %s27, %s30
      %p39 = scmp.eq.s32.totalorder %s22, 1
      %p40 = por %p38, %p39
      %p41 = scmp.ne.s32.totalorder %s30, %s31
      %p42 = scmp.eq.s32.totalorder %s22, 0
      %p43 = por %p41, %p42
      %p44 = scmp.ne.s32.totalorder %s30, %s31
      %p45 = scmp.eq.s32.totalorder %s23, 1
      %p46 = por %p44, %p45
      %p48 = scmp.ne.s32.totalorder %s31, %s47
      %p49 = scmp.eq.s32.totalorder %s23, 0
      %p50 = por %p48, %p49
      %s52 = sadd.s32 %s51, 1
      %p55 = scmp.eq.s32.totalorder %s17, 1
      %p56 = scmp.ne.s32.totalorder %s51, %s53
      %p57 = scmp.eq.s32.totalorder %s17, 0
      %p58 = por %p56, %p57
      %p59 = scmp.ne.s32.totalorder %s51, %s53
      %p60 = scmp.eq.s32.totalorder %s22, 1
      %p61 = por %p59, %p60
      %p62 = scmp.ne.s32.totalorder %s53, %s54
      %p63 = scmp.eq.s32.totalorder %s22, 0
      %p64 = por %p62, %p63
      %p65 = scmp.ne.s32.totalorder %s53, %s54
      %p66 = scmp.eq.s32.totalorder %s23, 1
      %p67 = por %p65, %p66
      %p69 = scmp.ne.s32.totalorder %s54, %s68
      %p70 = scmp.eq.s32.totalorder %s23, 0
      %p71 = por %p69, %p70
      %s73 = sadd.s32 %s72, 1
      %p76 = scmp.eq.s32.totalorder %s17, 1
      %p77 = scmp.ne.s32.totalorder %s72, %s74
      %p78 = scmp.eq.s32.totalorder %s17, 0
      %p79 = por %p77, %p78
      %p80 = scmp.ne.s32.totalorder %s72, %s74
      %p81 = scmp.eq.s32.totalorder %s22, 1
      %p82 = por %p80, %p81
      %p83 = scmp.ne.s32.totalorder %s74, %s75
      %p84 = scmp.eq.s32.totalorder %s22, 0
      %p85 = por %p83, %p84
      %p86 = scmp.ne.s32.totalorder %s74, %s75
      %p87 = scmp.eq.s32.totalorder %s23, 1
      %p88 = por %p86, %p87
      %p90 = scmp.ne.s32.totalorder %s75, %s89
      %p91 = scmp.eq.s32.totalorder %s23, 0
      %p92 = por %p90, %p91
      %s94 = sadd.s32 %s93, 1
      %p97 = scmp.eq.s32.totalorder %s17, 1
      %p98 = scmp.ne.s32.totalorder %s93, %s95
      %p99 = scmp.eq.s32.totalorder %s17, 0
      %p100 = por %p98, %p99
      %p101 = scmp.ne.s32.totalorder %s93, %s95
      %p102 = scmp.eq.s32.totalorder %s22, 1
      %p103 = por %p101, %p102
      %p104 = scmp.ne.s32.totalorder %s95, %s96
      %p105 = scmp.eq.s32.totalorder %s22, 0
      %p106 = por %p104, %p105
      %p107 = scmp.ne.s32.totalorder %s95, %s96
      %p108 = scmp.eq.s32.totalorder %s23, 1
      %p109 = por %p107, %p108
      %p111 = scmp.ne.s32.totalorder %s96, %s110
      %p112 = scmp.eq.s32.totalorder %s23, 0
      %p113 = por %p111, %p112
      %s115 = sadd.s32 %s114, 1
      %p118 = scmp.eq.s32.totalorder %s17, 1
      %p119 = scmp.ne.s32.totalorder %s114, %s116
      %p120 = scmp.eq.s32.totalorder %s17, 0
      %p121 = por %p119, %p120
      %p122 = scmp.ne.s32.totalorder %s114, %s116
      %p123 = scmp.eq.s32.totalorder %s22, 1
      %p124 = por %p122, %p123
      %p125 = scmp.ne.s32.totalorder %s116, %s117
      %p126 = scmp.eq.s32.totalorder %s22, 0
      %p127 = por %p125, %p126
      %p128 = scmp.ne.s32.totalorder %s116, %s117
      %p129 = scmp.eq.s32.totalorder %s23, 1
      %p130 = por %p128, %p129
      %p132 = scmp.ne.s32.totalorder %s117, %s131
      %p133 = scmp.eq.s32.totalorder %s23, 0
      %p134 = por %p132, %p133
      %s136 = sadd.s32 %s135, 1
      %p139 = scmp.eq.s32.totalorder %s17, 1
      %p140 = scmp.ne.s32.totalorder %s135, %s137
      %p141 = scmp.eq.s32.totalorder %s17, 0
      %p142 = por %p140, %p141
      %p143 = scmp.ne.s32.totalorder %s135, %s137
      %p144 = scmp.eq.s32.totalorder %s22, 1
      %p145 = por %p143, %p144
      %p146 = scmp.ne.s32.totalorder %s137, %s138
      %p147 = scmp.eq.s32.totalorder %s22, 0
      %p148 = por %p146, %p147
      %p149 = scmp.ne.s32.totalorder %s137, %s138
      %p150 = scmp.eq.s32.totalorder %s23, 1
      %p151 = por %p149, %p150
      %p153 = scmp.ne.s32.totalorder %s138, %s152
      %p154 = scmp.eq.s32.totalorder %s23, 0
      %p155 = por %p153, %p154
      %s157 = sadd.s32 %s156, 1
      %p160 = scmp.eq.s32.totalorder %s17, 1
      %p161 = scmp.ne.s32.totalorder %s156, %s158
      %p162 = scmp.eq.s32.totalorder %s17, 0
      %p163 = por %p161, %p162
      %p164 = scmp.ne.s32.totalorder %s156, %s158
      %p165 = scmp.eq.s32.totalorder %s22, 1
      %p166 = por %p164, %p165
      %p167 = scmp.ne.s32.totalorder %s158, %s159
      %p168 = scmp.eq.s32.totalorder %s22, 0
      %p169 = por %p167, %p168
      %p170 = scmp.ne.s32.totalorder %s158, %s159
      %p171 = scmp.eq.s32.totalorder %s23, 1
      %p172 = por %p170, %p171
      %p174 = scmp.ne.s32.totalorder %s159, %s173
      %p175 = scmp.eq.s32.totalorder %s23, 0
      %p176 = por %p174, %p175
      %s177 = ssub.s32 %s17, %s24
      %p178 = scmp.eq.s32.totalorder %s177, 0
      %s180 = sadd.s32 %s179, 1
      %s181 = scalar_select %p178, %s179, %s180
      %p184 = pneg %p178
      %p185 = scmp.eq.s32.totalorder %s17, 1
      %p186 = por %p184, %p185
      %p187 = scmp.ne.s32.totalorder %s179, %s182
      %p188 = scmp.eq.s32.totalorder %s17, 0
      %p189 = por %p187, %p188
      %p190 = scmp.ne.s32.totalorder %s179, %s182
      %p191 = scmp.eq.s32.totalorder %s22, 1
      %p192 = por %p190, %p191
      %p193 = scmp.ne.s32.totalorder %s182, %s183
      %p194 = scmp.eq.s32.totalorder %s22, 0
      %p195 = por %p193, %p194
      %p196 = scmp.ne.s32.totalorder %s182, %s183
      %p197 = scmp.eq.s32.totalorder %s23, 1
      %p198 = por %p196, %p197
      %p200 = scmp.ne.s32.totalorder %s183, %s199
      %p201 = scmp.eq.s32.totalorder %s23, 0
      %p202 = por %p200, %p201
      %p203 = scmp.le.s32.totalorder 1, %s17
      %p204 = scmp.lt.s32.totalorder %s17, 3
      %p205 = pnand %p203, %p204
      %p206 = pneg %p205
      // Predicated region
      $region9: #{centernet_forward.9} parent=5 // pred_check
        _
      $region10: #{centernet_forward.9} parent=5 // pred_check_branch
        %208 = sbr.rel (%p205) target = $region12
      $region11: #{centernet_forward.9} parent=5 // pred_region
        %s209 = ssub.s32 %s17, 1
        // Predicated region
        $region13: #{centernet_forward.9} parent=11 // pred_check
          %p210 = pneg %p64
        $region14: #{centernet_forward.9} parent=11 // pred_check_branch
          %212 = sbr.rel (%p210) target = $region16
        $region15: #{centernet_forward.9} parent=11 // pred_region
          _
        $region16: #{centernet_forward.9} parent=11 // pred_fallthru
          _
        // Predicated region
        $region17: #{centernet_forward.9} parent=11 // pred_check
          %p213 = pneg %p85
        $region18: #{centernet_forward.9} parent=11 // pred_check_branch
          %215 = sbr.rel (%p213) target = $region20
        $region19: #{centernet_forward.9} parent=11 // pred_region
          _
        $region20: #{centernet_forward.9} parent=11 // pred_fallthru
          _
        // Predicated region
        $region21: #{centernet_forward.9} parent=11 // pred_check
          %p216 = pneg %p106
        $region22: #{centernet_forward.9} parent=11 // pred_check_branch
          %218 = sbr.rel (%p216) target = $region24
        $region23: #{centernet_forward.9} parent=11 // pred_region
          _
        $region24: #{centernet_forward.9} parent=11 // pred_fallthru
          _
        // Predicated region
        $region25: #{centernet_forward.9} parent=11 // pred_check
          %p219 = pneg %p127
        $region26: #{centernet_forward.9} parent=11 // pred_check_branch
          %221 = sbr.rel (%p219) target = $region28
        $region27: #{centernet_forward.9} parent=11 // pred_region
          _
        $region28: #{centernet_forward.9} parent=11 // pred_fallthru
          _
        // Predicated region
        $region29: #{centernet_forward.9} parent=11 // pred_check
          %p222 = pneg %p148
        $region30: #{centernet_forward.9} parent=11 // pred_check_branch
          %224 = sbr.rel (%p222) target = $region32
        $region31: #{centernet_forward.9} parent=11 // pred_region
          _
        $region32: #{centernet_forward.9} parent=11 // pred_fallthru
          _
        // Predicated region
        $region33: #{centernet_forward.9} parent=11 // pred_check
          %p225 = pneg %p169
        $region34: #{centernet_forward.9} parent=11 // pred_check_branch
          %227 = sbr.rel (%p225) target = $region36
        $region35: #{centernet_forward.9} parent=11 // pred_region
          _
        $region36: #{centernet_forward.9} parent=11 // pred_fallthru
          _
      $region12: #{centernet_forward.9} parent=5 // pred_fallthru
        _
      %p228 = scmp.lt.s32.totalorder %s17, 2
      // Predicated region
      $region37: #{centernet_forward.9} parent=5 // pred_check
        %p229 = pneg %p228
      $region38: #{centernet_forward.9} parent=5 // pred_check_branch
        %231 = sbr.rel (%p229) target = $region40
      $region39: #{centernet_forward.9} parent=5 // pred_region
        // Predicated region
        $region41: #{centernet_forward.9} parent=39 // pred_check
          %p232 = pneg %p37
        $region42: #{centernet_forward.9} parent=39 // pred_check_branch
          %234 = sbr.rel (%p232) target = $region44
        $region43: #{centernet_forward.9} parent=39 // pred_region
          %p235 = scmp.lt.s32.totalorder %s17, 1
          %s236 = scalar_select %p235, %s17, 1
          %s237 = smul.addr %s236, 32
          %s238 = smul.addr %s237, 4
          %s239 = scalar_lea.vmem %s0, %s238
        $region44: #{centernet_forward.9} parent=39 // pred_fallthru
          _
      $region40: #{centernet_forward.9} parent=5 // pred_fallthru
        _
      %p240 = scmp.le.s32.totalorder 1, %s17
      %p241 = scmp.lt.s32.totalorder %s17, 3
      %p242 = pnand %p240, %p241
      %p243 = pneg %p242
      // Predicated region
      $region45: #{centernet_forward.9} parent=5 // pred_check
        _
      $region46: #{centernet_forward.9} parent=5 // pred_check_branch
        %245 = sbr.rel (%p242) target = $region48
      $region47: #{centernet_forward.9} parent=5 // pred_region
        %s246 = ssub.s32 %s17, 1
        %p247 = scmp.lt.s32.totalorder %s22, 1
        %s248 = scalar_select %p247, %s22, 1
        %s249 = smul.addr %s248, 32
        %s250 = smul.addr %s249, 4
        %s251 = scalar_lea.vmem %s0, %s250
        %p252 = pneg %p43
        %p253 = pneg %p40
        %p254 = pneg %p64
        %p255 = pneg %p61
        %p256 = pneg %p85
        %p257 = pneg %p82
        %p258 = pneg %p106
        %p259 = pneg %p103
        %p260 = pneg %p127
        %p261 = pneg %p124
        %p262 = pneg %p148
        %p263 = pneg %p145
        %p264 = pneg %p169
        %p265 = pneg %p166
        %p266 = pneg %p195
        %p267 = pneg %p192
        %s268 = sand.u32 %s182, 1
        %s269 = scalar_lea.sflag [#allocation4], %s268
        %s270 = sand.u32 %s182, 1
        %s271 = smul.addr %s270, 16
        %s272 = scalar_lea.vmem [#allocation3], %s271
        %p273 = scmp.lt.s32.totalorder %s22, 1
        %s274 = scalar_select %p273, %s22, 1
        %s275 = smul.addr %s274, 32
        %s276 = smul.addr %s275, 4
        %s277 = scalar_lea.vmem %s0, %s276
        %v279 = vld [vmem:[%s277] sm:$0xff]
        %v280 = vld [vmem:[%s277 + $0x8] sm:$0xff]
        %v281 = vld [vmem:[%s277 + $0x10] sm:$0xff]
        %v282 = vld [vmem:[%s277 + $0x18] sm:$0xff]
        %v283 = vld [vmem:[%s277 + $0x20] sm:$0xff]
        %v284 = vld [vmem:[%s277 + $0x28] sm:$0xff]
        %v285 = vld [vmem:[%s277 + $0x30] sm:$0xff]
        %v286 = vld [vmem:[%s277 + $0x38] sm:$0xff]
        %v287 = vld [vmem:[%s277 + $0x40] sm:$0xff]
        %v288 = vld [vmem:[%s277 + $0x48] sm:$0xff]
        %v289 = vld [vmem:[%s277 + $0x50] sm:$0xff]
        %v290 = vld [vmem:[%s277 + $0x58] sm:$0xff]
        %v291 = vld [vmem:[%s277 + $0x60] sm:$0xff]
        %v292 = vld [vmem:[%s277 + $0x68] sm:$0xff]
        %v293 = vld [vmem:[%s277 + $0x70] sm:$0xff]
        %v294 = vld [vmem:[%s277 + $0x78] sm:$0xff]
        %v295 = vld [vmem:[%s1] sm:$0xf]
        %v296 = vld [vmem:[%s1 + $0x4] sm:$0xf]
        %v297 = vld [vmem:[%s1 + $0x8] sm:$0xf]
        %v298 = vld [vmem:[%s1 + $0xc] sm:$0xf]
        %v299 = vld [vmem:[%s1 + $0x10] sm:$0xf]
        %v300 = vld [vmem:[%s1 + $0x14] sm:$0xf]
        %v301 = vld [vmem:[%s1 + $0x18] sm:$0xf]
        %v302 = vld [vmem:[%s1 + $0x1c] sm:$0xf]
        %v303 = vld [vmem:[%s1 + $0x20] sm:$0xf]
        %v304 = vld [vmem:[%s1 + $0x24] sm:$0xf]
        %v305 = vld [vmem:[%s1 + $0x28] sm:$0xf]
        %v306 = vld [vmem:[%s1 + $0x2c] sm:$0xf]
        %v307 = vld [vmem:[%s1 + $0x30] sm:$0xf]
        %v308 = vld [vmem:[%s1 + $0x34] sm:$0xf]
        %v309 = vld [vmem:[%s1 + $0x38] sm:$0xf]
        %v310 = vld [vmem:[%s1 + $0x3c] sm:$0xf]
        %v311 = vld [vmem:[%s1 + $0x40] sm:$0xf]
        %v312 = vld [vmem:[%s1 + $0x44] sm:$0xf]
        %v313 = vld [vmem:[%s1 + $0x48] sm:$0xf]
        %v314 = vld [vmem:[%s1 + $0x4c] sm:$0xf]
        %v315 = vld [vmem:[%s1 + $0x50] sm:$0xf]
        %v316 = vld [vmem:[%s1 + $0x54] sm:$0xf]
        %v317 = vld [vmem:[%s1 + $0x58] sm:$0xf]
        %v318 = vld [vmem:[%s1 + $0x5c] sm:$0xf]
        %v319 = vld [vmem:[%s1 + $0x60] sm:$0xf]
        %v320 = vld [vmem:[%s1 + $0x64] sm:$0xf]
        %v321 = vld [vmem:[%s1 + $0x68] sm:$0xf]
        %v322 = vld [vmem:[%s1 + $0x6c] sm:$0xf]
        %v323 = vld [vmem:[%s1 + $0x70] sm:$0xf]
        %v324 = vld [vmem:[%s1 + $0x74] sm:$0xf]
        %v325 = vld [vmem:[%s1 + $0x78] sm:$0xf]
        %v326 = vld [vmem:[%s1 + $0x7c] sm:$0xf]
        %v327 = vld [vmem:[%s1 + $0x80] sm:$0xf]
        %v328 = vld [vmem:[%s1 + $0x84] sm:$0xf]
        %v329 = vld [vmem:[%s1 + $0x88] sm:$0xf]
        %v330 = vld [vmem:[%s1 + $0x8c] sm:$0xf]
        %v331 = vld [vmem:[%s1 + $0x90] sm:$0xf]
        %v332 = vld [vmem:[%s1 + $0x94] sm:$0xf]
        %v333 = vld [vmem:[%s1 + $0x98] sm:$0xf]
        %v334 = vld [vmem:[%s1 + $0x9c] sm:$0xf]
        %v335 = vld [vmem:[%s1 + $0xa0] sm:$0xf]
        %v336 = vld [vmem:[%s1 + $0xa4] sm:$0xf]
        %v337 = vld [vmem:[%s1 + $0xa8] sm:$0xf]
        %v338 = vld [vmem:[%s1 + $0xac] sm:$0xf]
        %v339 = vld [vmem:[%s1 + $0xb0] sm:$0xf]
        %v340 = vld [vmem:[%s1 + $0xb4] sm:$0xf]
        %v341 = vld [vmem:[%s1 + $0xb8] sm:$0xf]
        %v342 = vld [vmem:[%s1 + $0xbc] sm:$0xf]
        %v343 = vld [vmem:[%s1 + $0xc0] sm:$0xf]
        %v344 = vld [vmem:[%s1 + $0xc4] sm:$0xf]
        %v345 = vld [vmem:[%s1 + $0xc8] sm:$0xf]
        %v346 = vld [vmem:[%s1 + $0xcc] sm:$0xf]
        %v347 = vld [vmem:[%s1 + $0xd0] sm:$0xf]
        %v348 = vld [vmem:[%s1 + $0xd4] sm:$0xf]
        %v349 = vld [vmem:[%s1 + $0xd8] sm:$0xf]
        %v350 = vld [vmem:[%s1 + $0xdc] sm:$0xf]
        %v351 = vld [vmem:[%s1 + $0xe0] sm:$0xf]
        %v352 = vld [vmem:[%s1 + $0xe4] sm:$0xf]
        %v353 = vld [vmem:[%s1 + $0xe8] sm:$0xf]
        %v354 = vld [vmem:[%s1 + $0xec] sm:$0xf]
        %v355 = vld [vmem:[%s1 + $0xf0] sm:$0xf]
        %v356 = vld [vmem:[%s1 + $0xf4] sm:$0xf]
        %v357 = vld [vmem:[%s1 + $0xf8] sm:$0xf]
        %v358 = vld [vmem:[%s1 + $0xfc] sm:$0xf]
        %v359 = vld [vmem:[%s2] sm:$0x1]
        %v361 = vlaneseq
        %v362 = vshrl.u32 %v361, 7
        %v363 = vsub.s32 0, %v362
        %v364 = vrot.slane %v359, %v363
        %v370 = vunpack.c.l.b16 %v279
        %v371 = vunpack.c.h.b16 %v279
        %v372 = vunpack.c.l.b16 %v280
        %v373 = vunpack.c.h.b16 %v280
        %v374 = vunpack.c.l.b16 %v281
        %v375 = vunpack.c.h.b16 %v281
        %v376 = vunpack.c.l.b16 %v282
        %v377 = vunpack.c.h.b16 %v282
        %v378 = vpack.c.b16 %v374, %v370
        %v379 = vpack.c.b16 %v375, %v371
        %v380 = vpack.c.b16 %v376, %v372
        %v381 = vpack.c.b16 %v377, %v373
        %v450 = vunpack.c.l.b16 %v295
        %v451 = vunpack.c.l.b16 %v296
        %v452 = vunpack.c.l.b16 %v297
        %v453 = vunpack.c.l.b16 %v298
        %v454 = vunpack.c.l.b16 %v299
        %v455 = vunpack.c.l.b16 %v300
        %v456 = vunpack.c.l.b16 %v301
        %v457 = vunpack.c.l.b16 %v302
        %v458 = vunpack.c.l.b16 %v303
        %v459 = vunpack.c.l.b16 %v304
        %v460 = vunpack.c.l.b16 %v305
        %v461 = vunpack.c.l.b16 %v306
        %v462 = vunpack.c.l.b16 %v307
        %v463 = vunpack.c.l.b16 %v308
        %v464 = vunpack.c.l.b16 %v309
        %v465 = vunpack.c.l.b16 %v310
        %v466 = vunpack.c.l.b16 %v311
        %v467 = vunpack.c.l.b16 %v312
        %v468 = vunpack.c.l.b16 %v313
        %v469 = vunpack.c.l.b16 %v314
        %v470 = vunpack.c.l.b16 %v315
        %v471 = vunpack.c.l.b16 %v316
        %v472 = vunpack.c.l.b16 %v317
        %v473 = vunpack.c.l.b16 %v318
        %v474 = vunpack.c.l.b16 %v319
        %v475 = vunpack.c.l.b16 %v320
        %v476 = vunpack.c.l.b16 %v321
        %v477 = vunpack.c.l.b16 %v322
        %v478 = vunpack.c.l.b16 %v323
        %v479 = vunpack.c.l.b16 %v324
        %v480 = vunpack.c.l.b16 %v325
        %v481 = vunpack.c.l.b16 %v326
        %v482 = vunpack.c.l.b16 %v327
        %v483 = vunpack.c.l.b16 %v328
        %v484 = vunpack.c.l.b16 %v329
        %v485 = vunpack.c.l.b16 %v330
        %v486 = vunpack.c.l.b16 %v331
        %v487 = vunpack.c.l.b16 %v332
        %v488 = vunpack.c.l.b16 %v333
        %v489 = vunpack.c.l.b16 %v334
        %v490 = vunpack.c.l.b16 %v335
        %v491 = vunpack.c.l.b16 %v336
        %v492 = vunpack.c.l.b16 %v337
        %v493 = vunpack.c.l.b16 %v338
        %v494 = vunpack.c.l.b16 %v339
        %v495 = vunpack.c.l.b16 %v340
        %v496 = vunpack.c.l.b16 %v341
        %v497 = vunpack.c.l.b16 %v342
        %v498 = vunpack.c.l.b16 %v343
        %v499 = vunpack.c.l.b16 %v344
        %v500 = vunpack.c.l.b16 %v345
        %v501 = vunpack.c.l.b16 %v346
        %v502 = vunpack.c.l.b16 %v347
        %v503 = vunpack.c.l.b16 %v348
        %v504 = vunpack.c.l.b16 %v349
        %v505 = vunpack.c.l.b16 %v350
        %v506 = vunpack.c.l.b16 %v351
        %v507 = vunpack.c.l.b16 %v352
        %v508 = vunpack.c.l.b16 %v353
        %v509 = vunpack.c.l.b16 %v354
        %v510 = vunpack.c.l.b16 %v355
        %v511 = vunpack.c.l.b16 %v356
        %v512 = vunpack.c.l.b16 %v357
        %v513 = vunpack.c.l.b16 %v358
        %v514 = vpack.c.b16 %v451, %v450
        %v515 = vpack.c.b16 %v453, %v452
        %v516 = vpack.c.b16 %v455, %v454
        %v517 = vpack.c.b16 %v457, %v456
        %v518 = vpack.c.b16 %v459, %v458
        %v519 = vpack.c.b16 %v461, %v460
        %v520 = vpack.c.b16 %v463, %v462
        %v521 = vpack.c.b16 %v465, %v464
        %v522 = vpack.c.b16 %v467, %v466
        %v523 = vpack.c.b16 %v469, %v468
        %v524 = vpack.c.b16 %v471, %v470
        %v525 = vpack.c.b16 %v473, %v472
        %v526 = vpack.c.b16 %v475, %v474
        %v527 = vpack.c.b16 %v477, %v476
        %v528 = vpack.c.b16 %v479, %v478
        %v529 = vpack.c.b16 %v481, %v480
        %v530 = vpack.c.b16 %v483, %v482
        %v531 = vpack.c.b16 %v485, %v484
        %v532 = vpack.c.b16 %v487, %v486
        %v533 = vpack.c.b16 %v489, %v488
        %v534 = vpack.c.b16 %v491, %v490
        %v535 = vpack.c.b16 %v493, %v492
        %v536 = vpack.c.b16 %v495, %v494
        %v537 = vpack.c.b16 %v497, %v496
        %v538 = vpack.c.b16 %v499, %v498
        %v539 = vpack.c.b16 %v501, %v500
        %v540 = vpack.c.b16 %v503, %v502
        %v541 = vpack.c.b16 %v505, %v504
        %v542 = vpack.c.b16 %v507, %v506
        %v543 = vpack.c.b16 %v509, %v508
        %v544 = vpack.c.b16 %v511, %v510
        %v545 = vpack.c.b16 %v513, %v512
        %578 = vmatprep.subr.bf16.mxu0 0
        %579 = vmatpush1.bf16.msra.mxu0 %v514
        %580 = vmatprep.subr.bf16.mxu0 0
        %581 = vmatpush1.bf16.msra.mxu0 %v515
        %582 = vmatprep.subr.bf16.mxu0 0
        %583 = vmatpush1.bf16.msra.mxu0 %v516
        %584 = vmatprep.subr.bf16.mxu0 0
        %585 = vmatpush1.bf16.msra.mxu0 %v517
        %586 = vmatprep.subr.bf16.mxu0 0
        %587 = vmatpush1.bf16.msra.mxu0 %v518
        %588 = vmatprep.subr.bf16.mxu0 0
        %589 = vmatpush1.bf16.msra.mxu0 %v519
        %590 = vmatprep.subr.bf16.mxu0 0
        %591 = vmatpush1.bf16.msra.mxu0 %v520
        %592 = vmatprep.subr.bf16.mxu0 0
        %593 = vmatpush1.bf16.msra.mxu0 %v521
        %594 = vmatprep.subr.bf16.mxu0 0
        %595 = vmatpush1.bf16.msra.mxu0 %v522
        %596 = vmatprep.subr.bf16.mxu0 0
        %597 = vmatpush1.bf16.msra.mxu0 %v523
        %598 = vmatprep.subr.bf16.mxu0 0
        %599 = vmatpush1.bf16.msra.mxu0 %v524
        %600 = vmatprep.subr.bf16.mxu0 0
        %601 = vmatpush1.bf16.msra.mxu0 %v525
        %602 = vmatprep.subr.bf16.mxu0 0
        %603 = vmatpush1.bf16.msra.mxu0 %v526
        %604 = vmatprep.subr.bf16.mxu0 0
        %605 = vmatpush1.bf16.msra.mxu0 %v527
        %606 = vmatprep.subr.bf16.mxu0 0
        %607 = vmatpush1.bf16.msra.mxu0 %v528
        %608 = vmatprep.subr.bf16.mxu0 0
        %609 = vmatpush1.bf16.msra.mxu0 %v529
        %610 = vmatprep.mubr.bf16.mxu0 %v379
        %611 = vmatmul.mubr.bf16.gmra.mrb[0].mxu0 %v378
        %v612 = vpop.f32.mrb[0].mxu0
        %v613 = vadd.f32 %v364, %v612
        %v614 = vpop.f32.mrb[0].mxu0
        %v615 = vpop.f32.mrb[0].mxu0
        %v616 = vadd.f32 %v364, %v615
        %v617 = vpop.f32.mrb[0].mxu0
        %618 = vdwg.mxu0
        %619 = vmatprep.subr.bf16.mxu0 0
        %620 = vmatpush1.bf16.msra.mxu0 %v530
        %621 = vmatprep.subr.bf16.mxu0 0
        %622 = vmatpush1.bf16.msra.mxu0 %v531
        %623 = vmatprep.subr.bf16.mxu0 0
        %624 = vmatpush1.bf16.msra.mxu0 %v532
        %625 = vmatprep.subr.bf16.mxu0 0
        %626 = vmatpush1.bf16.msra.mxu0 %v533
        %627 = vmatprep.subr.bf16.mxu0 0
        %628 = vmatpush1.bf16.msra.mxu0 %v534
        %629 = vmatprep.subr.bf16.mxu0 0
        %630 = vmatpush1.bf16.msra.mxu0 %v535
        %631 = vmatprep.subr.bf16.mxu0 0
        %632 = vmatpush1.bf16.msra.mxu0 %v536
        %633 = vmatprep.subr.bf16.mxu0 0
        %634 = vmatpush1.bf16.msra.mxu0 %v537
        %635 = vmatprep.subr.bf16.mxu0 0
        %636 = vmatpush1.bf16.msra.mxu0 %v538
        %637 = vmatprep.subr.bf16.mxu0 0
        %638 = vmatpush1.bf16.msra.mxu0 %v539
        %639 = vmatprep.subr.bf16.mxu0 0
        %640 = vmatpush1.bf16.msra.mxu0 %v540
        %641 = vmatprep.subr.bf16.mxu0 0
        %642 = vmatpush1.bf16.msra.mxu0 %v541
        %643 = vmatprep.subr.bf16.mxu0 0
        %644 = vmatpush1.bf16.msra.mxu0 %v542
        %645 = vmatprep.subr.bf16.mxu0 0
        %646 = vmatpush1.bf16.msra.mxu0 %v543
        %647 = vmatprep.subr.bf16.mxu0 0
        %648 = vmatpush1.bf16.msra.mxu0 %v544
        %649 = vmatprep.subr.bf16.mxu0 0
        %650 = vmatpush1.bf16.msra.mxu0 %v545
        %651 = vmatprep.mubr.bf16.mxu0 %v381
        %652 = vmatmul.mubr.bf16.gmra.mrb[0].mxu0 %v380
        %v653 = vpop.f32.mrb[0].mxu0
        %v654 = vadd.f32 %v613, %v653
        %v655 = vpop.f32.mrb[0].mxu0
        %v656 = vpop.f32.mrb[0].mxu0
        %v657 = vadd.f32 %v616, %v656
        %v658 = vpop.f32.mrb[0].mxu0
        %659 = vdwg.mxu0
        %v660 = vmax.f32 %v654, 0.0
        %v661 = vmax.f32 %v657, 0.0
        %v662 = vpack.c.bf16 %v661, %v660
        %v663 = vld [vmem:[%s3] sm:$0xf]
        %v664 = vld [vmem:[%s3 + $0x4] sm:$0xf]
        %v665 = vld [vmem:[%s3 + $0x8] sm:$0xf]
        %v666 = vld [vmem:[%s3 + $0xc] sm:$0xf]
        %v667 = vld [vmem:[%s3 + $0x10] sm:$0xf]
        %v668 = vld [vmem:[%s3 + $0x14] sm:$0xf]
        %v669 = vld [vmem:[%s3 + $0x18] sm:$0xf]
        %v670 = vld [vmem:[%s3 + $0x1c] sm:$0xf]
        %v671 = vld [vmem:[%s3 + $0x20] sm:$0xf]
        %v672 = vld [vmem:[%s3 + $0x24] sm:$0xf]
        %v673 = vld [vmem:[%s3 + $0x28] sm:$0xf]
        %v674 = vld [vmem:[%s3 + $0x2c] sm:$0xf]
        %v675 = vld [vmem:[%s3 + $0x30] sm:$0xf]
        %v676 = vld [vmem:[%s3 + $0x34] sm:$0xf]
        %v677 = vld [vmem:[%s3 + $0x38] sm:$0xf]
        %v678 = vld [vmem:[%s3 + $0x3c] sm:$0xf]
        %v695 = vunpack.c.l.b16 %v663
        %v696 = vunpack.c.l.b16 %v664
        %v697 = vunpack.c.l.b16 %v665
        %v698 = vunpack.c.l.b16 %v666
        %v699 = vunpack.c.l.b16 %v667
        %v700 = vunpack.c.l.b16 %v668
        %v701 = vunpack.c.l.b16 %v669
        %v702 = vunpack.c.l.b16 %v670
        %v703 = vunpack.c.l.b16 %v671
        %v704 = vunpack.c.l.b16 %v672
        %v705 = vunpack.c.l.b16 %v673
        %v706 = vunpack.c.l.b16 %v674
        %v707 = vunpack.c.l.b16 %v675
        %v708 = vunpack.c.l.b16 %v676
        %v709 = vunpack.c.l.b16 %v677
        %v710 = vunpack.c.l.b16 %v678
        %v711 = vpack.c.b16 %v696, %v695
        %v712 = vpack.c.b16 %v698, %v697
        %v713 = vpack.c.b16 %v700, %v699
        %v714 = vpack.c.b16 %v702, %v701
        %v715 = vpack.c.b16 %v704, %v703
        %v716 = vpack.c.b16 %v706, %v705
        %v717 = vpack.c.b16 %v708, %v707
        %v718 = vpack.c.b16 %v710, %v709
        %727 = vmatprep.subr.bf16.mxu0 0
        %728 = vmatpush1.bf16.msra.mxu0 %v711
        %729 = vmatprep.subr.bf16.mxu0 0
        %730 = vmatpush1.bf16.msra.mxu0 %v712
        %731 = vmatprep.subr.bf16.mxu0 0
        %732 = vmatpush1.bf16.msra.mxu0 %v713
        %733 = vmatprep.subr.bf16.mxu0 0
        %734 = vmatpush1.bf16.msra.mxu0 %v714
        %735 = vmatprep.subr.bf16.mxu0 0
        %736 = vmatpush1.bf16.msra.mxu0 %v715
        %737 = vmatprep.subr.bf16.mxu0 0
        %738 = vmatpush1.bf16.msra.mxu0 %v716
        %739 = vmatprep.subr.bf16.mxu0 0
        %740 = vmatpush1.bf16.msra.mxu0 %v717
        %741 = vmatprep.subr.bf16.mxu0 0
        %742 = vmatpush1.bf16.msra.mxu0 %v718
        %743 = vmatprep.subr.bf16.mxu0 0
        %744 = vmatpush1.bf16.msra.mxu0 0
        %745 = vmatprep.subr.bf16.mxu0 0
        %746 = vmatpush1.bf16.msra.mxu0 0
        %747 = vmatprep.subr.bf16.mxu0 0
        %748 = vmatpush1.bf16.msra.mxu0 0
        %749 = vmatprep.subr.bf16.mxu0 0
        %750 = vmatpush1.bf16.msra.mxu0 0
        %751 = vmatprep.subr.bf16.mxu0 0
        %752 = vmatpush1.bf16.msra.mxu0 0
        %753 = vmatprep.subr.bf16.mxu0 0
        %754 = vmatpush1.bf16.msra.mxu0 0
        %755 = vmatprep.subr.bf16.mxu0 0
        %756 = vmatpush1.bf16.msra.mxu0 0
        %757 = vmatprep.subr.bf16.mxu0 0
        %758 = vmatpush1.bf16.msra.mxu0 0
        %759 = vmatprep.mubr.bf16.mxu0 0
        %760 = vmatmul.mubr.bf16.gmra.mrb[0].mxu0 %v662
        %v761 = vpop.f32.mrb[0].mxu0
        %v762 = vadd.f32 0.0, %v761
        %v763 = vpop.f32.mrb[0].mxu0
        %v764 = vpop.f32.mrb[0].mxu0
        %v765 = vadd.f32 0.0, %v764
        %v766 = vpop.f32.mrb[0].mxu0
        %767 = vdwg.mxu0
        %v768 = vld [vmem:[%s5] sm:$0xff]
        %v769 = vld [vmem:[%s5 + $0x8] sm:$0xff]
        %v770 = vmul.f32 %v762, %v768
        %v771 = vmul.f32 %v765, %v769
        %v772 = vpack.c.bf16 %v771, %v770
        %v773 = vld [vmem:[%s4] sm:$0xf]
        %v774 = vld [vmem:[%s4 + $0x4] sm:$0xf]
        %s775 = scalar_lea.vmem %s1, 256
        %v776 = vld [vmem:[%s775] sm:$0xf]
        %v777 = vld [vmem:[%s775 + $0x4] sm:$0xf]
        %v778 = vld [vmem:[%s775 + $0x8] sm:$0xf]
        %v779 = vld [vmem:[%s775 + $0xc] sm:$0xf]
        %v780 = vld [vmem:[%s775 + $0x10] sm:$0xf]
        %v781 = vld [vmem:[%s775 + $0x14] sm:$0xf]
        %v782 = vld [vmem:[%s775 + $0x18] sm:$0xf]
        %v783 = vld [vmem:[%s775 + $0x1c] sm:$0xf]
        %v784 = vld [vmem:[%s775 + $0x20] sm:$0xf]
        %v785 = vld [vmem:[%s775 + $0x24] sm:$0xf]
        %v786 = vld [vmem:[%s775 + $0x28] sm:$0xf]
        %v787 = vld [vmem:[%s775 + $0x2c] sm:$0xf]
        %v788 = vld [vmem:[%s775 + $0x30] sm:$0xf]
        %v789 = vld [vmem:[%s775 + $0x34] sm:$0xf]
        %v790 = vld [vmem:[%s775 + $0x38] sm:$0xf]
        %v791 = vld [vmem:[%s775 + $0x3c] sm:$0xf]
        %v792 = vld [vmem:[%s775 + $0x40] sm:$0xf]
        %v793 = vld [vmem:[%s775 + $0x44] sm:$0xf]
        %v794 = vld [vmem:[%s775 + $0x48] sm:$0xf]
        %v795 = vld [vmem:[%s775 + $0x4c] sm:$0xf]
        %v796 = vld [vmem:[%s775 + $0x50] sm:$0xf]
        %v797 = vld [vmem:[%s775 + $0x54] sm:$0xf]
        %v798 = vld [vmem:[%s775 + $0x58] sm:$0xf]
        %v799 = vld [vmem:[%s775 + $0x5c] sm:$0xf]
        %v800 = vld [vmem:[%s775 + $0x60] sm:$0xf]
        %v801 = vld [vmem:[%s775 + $0x64] sm:$0xf]
        %v802 = vld [vmem:[%s775 + $0x68] sm:$0xf]
        %v803 = vld [vmem:[%s775 + $0x6c] sm:$0xf]
        %v804 = vld [vmem:[%s775 + $0x70] sm:$0xf]
        %v805 = vld [vmem:[%s775 + $0x74] sm:$0xf]
        %v806 = vld [vmem:[%s775 + $0x78] sm:$0xf]
        %v807 = vld [vmem:[%s775 + $0x7c] sm:$0xf]
        %v808 = vld [vmem:[%s775 + $0x80] sm:$0xf]
        %v809 = vld [vmem:[%s775 + $0x84] sm:$0xf]
        %v810 = vld [vmem:[%s775 + $0x88] sm:$0xf]
        %v811 = vld [vmem:[%s775 + $0x8c] sm:$0xf]
        %v812 = vld [vmem:[%s775 + $0x90] sm:$0xf]
        %v813 = vld [vmem:[%s775 + $0x94] sm:$0xf]
        %v814 = vld [vmem:[%s775 + $0x98] sm:$0xf]
        %v815 = vld [vmem:[%s775 + $0x9c] sm:$0xf]
        %v816 = vld [vmem:[%s775 + $0xa0] sm:$0xf]
        %v817 = vld [vmem:[%s775 + $0xa4] sm:$0xf]
        %v818 = vld [vmem:[%s775 + $0xa8] sm:$0xf]
        %v819 = vld [vmem:[%s775 + $0xac] sm:$0xf]
        %v820 = vld [vmem:[%s775 + $0xb0] sm:$0xf]
        %v821 = vld [vmem:[%s775 + $0xb4] sm:$0xf]
        %v822 = vld [vmem:[%s775 + $0xb8] sm:$0xf]
        %v823 = vld [vmem:[%s775 + $0xbc] sm:$0xf]
        %v824 = vld [vmem:[%s775 + $0xc0] sm:$0xf]
        %v825 = vld [vmem:[%s775 + $0xc4] sm:$0xf]
        %v826 = vld [vmem:[%s775 + $0xc8] sm:$0xf]
        %v827 = vld [vmem:[%s775 + $0xcc] sm:$0xf]
        %v828 = vld [vmem:[%s775 + $0xd0] sm:$0xf]
        %v829 = vld [vmem:[%s775 + $0xd4] sm:$0xf]
        %v830 = vld [vmem:[%s775 + $0xd8] sm:$0xf]
        %v831 = vld [vmem:[%s775 + $0xdc] sm:$0xf]
        %v832 = vld [vmem:[%s775 + $0xe0] sm:$0xf]
        %v833 = vld [vmem:[%s775 + $0xe4] sm:$0xf]
        %v834 = vld [vmem:[%s775 + $0xe8] sm:$0xf]
        %v835 = vld [vmem:[%s775 + $0xec] sm:$0xf]
        %v836 = vld [vmem:[%s775 + $0xf0] sm:$0xf]
        %v837 = vld [vmem:[%s775 + $0xf4] sm:$0xf]
        %v838 = vld [vmem:[%s775 + $0xf8] sm:$0xf]
        %v839 = vld [vmem:[%s775 + $0xfc] sm:$0xf]
        %v844 = vunpack.c.l.b16 %v283
        %v845 = vunpack.c.h.b16 %v283
        %v846 = vunpack.c.l.b16 %v284
        %v847 = vunpack.c.h.b16 %v284
        %v848 = vunpack.c.l.b16 %v285
        %v849 = vunpack.c.h.b16 %v285
        %v850 = vunpack.c.l.b16 %v286
        %v851 = vunpack.c.h.b16 %v286
        %v852 = vpack.c.b16 %v848, %v844
        %v853 = vpack.c.b16 %v849, %v845
        %v854 = vpack.c.b16 %v850, %v846
        %v855 = vpack.c.b16 %v851, %v847
        %v924 = vunpack.c.l.b16 %v776
        %v925 = vunpack.c.l.b16 %v777
        %v926 = vunpack.c.l.b16 %v778
        %v927 = vunpack.c.l.b16 %v779
        %v928 = vunpack.c.l.b16 %v780
        %v929 = vunpack.c.l.b16 %v781
        %v930 = vunpack.c.l.b16 %v782
        %v931 = vunpack.c.l.b16 %v783
        %v932 = vunpack.c.l.b16 %v784
        %v933 = vunpack.c.l.b16 %v785
        %v934 = vunpack.c.l.b16 %v786
        %v935 = vunpack.c.l.b16 %v787
        %v936 = vunpack.c.l.b16 %v788
        %v937 = vunpack.c.l.b16 %v789
        %v938 = vunpack.c.l.b16 %v790
        %v939 = vunpack.c.l.b16 %v791
        %v940 = vunpack.c.l.b16 %v792
        %v941 = vunpack.c.l.b16 %v793
        %v942 = vunpack.c.l.b16 %v794
        %v943 = vunpack.c.l.b16 %v795
        %v944 = vunpack.c.l.b16 %v796
        %v945 = vunpack.c.l.b16 %v797
        %v946 = vunpack.c.l.b16 %v798
        %v947 = vunpack.c.l.b16 %v799
        %v948 = vunpack.c.l.b16 %v800
        %v949 = vunpack.c.l.b16 %v801
        %v950 = vunpack.c.l.b16 %v802
        %v951 = vunpack.c.l.b16 %v803
        %v952 = vunpack.c.l.b16 %v804
        %v953 = vunpack.c.l.b16 %v805
        %v954 = vunpack.c.l.b16 %v806
        %v955 = vunpack.c.l.b16 %v807
        %v956 = vunpack.c.l.b16 %v808
        %v957 = vunpack.c.l.b16 %v809
        %v958 = vunpack.c.l.b16 %v810
        %v959 = vunpack.c.l.b16 %v811
        %v960 = vunpack.c.l.b16 %v812
        %v961 = vunpack.c.l.b16 %v813
        %v962 = vunpack.c.l.b16 %v814
        %v963 = vunpack.c.l.b16 %v815
        %v964 = vunpack.c.l.b16 %v816
        %v965 = vunpack.c.l.b16 %v817
        %v966 = vunpack.c.l.b16 %v818
        %v967 = vunpack.c.l.b16 %v819
        %v968 = vunpack.c.l.b16 %v820
        %v969 = vunpack.c.l.b16 %v821
        %v970 = vunpack.c.l.b16 %v822
        %v971 = vunpack.c.l.b16 %v823
        %v972 = vunpack.c.l.b16 %v824
        %v973 = vunpack.c.l.b16 %v825
        %v974 = vunpack.c.l.b16 %v826
        %v975 = vunpack.c.l.b16 %v827
        %v976 = vunpack.c.l.b16 %v828
        %v977 = vunpack.c.l.b16 %v829
        %v978 = vunpack.c.l.b16 %v830
        %v979 = vunpack.c.l.b16 %v831
        %v980 = vunpack.c.l.b16 %v832
        %v981 = vunpack.c.l.b16 %v833
        %v982 = vunpack.c.l.b16 %v834
        %v983 = vunpack.c.l.b16 %v835
        %v984 = vunpack.c.l.b16 %v836
        %v985 = vunpack.c.l.b16 %v837
        %v986 = vunpack.c.l.b16 %v838
        %v987 = vunpack.c.l.b16 %v839
        %v988 = vpack.c.b16 %v925, %v924
        %v989 = vpack.c.b16 %v927, %v926
        %v990 = vpack.c.b16 %v929, %v928
        %v991 = vpack.c.b16 %v931, %v930
        %v992 = vpack.c.b16 %v933, %v932
        %v993 = vpack.c.b16 %v935, %v934
        %v994 = vpack.c.b16 %v937, %v936
        %v995 = vpack.c.b16 %v939, %v938
        %v996 = vpack.c.b16 %v941, %v940
        %v997 = vpack.c.b16 %v943, %v942
        %v998 = vpack.c.b16 %v945, %v944
        %v999 = vpack.c.b16 %v947, %v946
        %v1000 = vpack.c.b16 %v949, %v948
        %v1001 = vpack.c.b16 %v951, %v950
        %v1002 = vpack.c.b16 %v953, %v952
        %v1003 = vpack.c.b16 %v955, %v954
        %v1004 = vpack.c.b16 %v957, %v956
        %v1005 = vpack.c.b16 %v959, %v958
        %v1006 = vpack.c.b16 %v961, %v960
        %v1007 = vpack.c.b16 %v963, %v962
        %v1008 = vpack.c.b16 %v965, %v964
        %v1009 = vpack.c.b16 %v967, %v966
        %v1010 = vpack.c.b16 %v969, %v968
        %v1011 = vpack.c.b16 %v971, %v970
        %v1012 = vpack.c.b16 %v973, %v972
        %v1013 = vpack.c.b16 %v975, %v974
        %v1014 = vpack.c.b16 %v977, %v976
        %v1015 = vpack.c.b16 %v979, %v978
        %v1016 = vpack.c.b16 %v981, %v980
        %v1017 = vpack.c.b16 %v983, %v982
        %v1018 = vpack.c.b16 %v985, %v984
        %v1019 = vpack.c.b16 %v987, %v986
        %1052 = vmatprep.subr.bf16.mxu0 0
        %1053 = vmatpush1.bf16.msra.mxu0 %v988
        %1054 = vmatprep.subr.bf16.mxu0 0
        %1055 = vmatpush1.bf16.msra.mxu0 %v989
        %1056 = vmatprep.subr.bf16.mxu0 0
        %1057 = vmatpush1.bf16.msra.mxu0 %v990
        %1058 = vmatprep.subr.bf16.mxu0 0
        %1059 = vmatpush1.bf16.msra.mxu0 %v991
        %1060 = vmatprep.subr.bf16.mxu0 0
        %1061 = vmatpush1.bf16.msra.mxu0 %v992
        %1062 = vmatprep.subr.bf16.mxu0 0
        %1063 = vmatpush1.bf16.msra.mxu0 %v993
        %1064 = vmatprep.subr.bf16.mxu0 0
        %1065 = vmatpush1.bf16.msra.mxu0 %v994
        %1066 = vmatprep.subr.bf16.mxu0 0
        %1067 = vmatpush1.bf16.msra.mxu0 %v995
        %1068 = vmatprep.subr.bf16.mxu0 0
        %1069 = vmatpush1.bf16.msra.mxu0 %v996
        %1070 = vmatprep.subr.bf16.mxu0 0
        %1071 = vmatpush1.bf16.msra.mxu0 %v997
        %1072 = vmatprep.subr.bf16.mxu0 0
        %1073 = vmatpush1.bf16.msra.mxu0 %v998
        %1074 = vmatprep.subr.bf16.mxu0 0
        %1075 = vmatpush1.bf16.msra.mxu0 %v999
        %1076 = vmatprep.subr.bf16.mxu0 0
        %1077 = vmatpush1.bf16.msra.mxu0 %v1000
        %1078 = vmatprep.subr.bf16.mxu0 0
        %1079 = vmatpush1.bf16.msra.mxu0 %v1001
        %1080 = vmatprep.subr.bf16.mxu0 0
        %1081 = vmatpush1.bf16.msra.mxu0 %v1002
        %1082 = vmatprep.subr.bf16.mxu0 0
        %1083 = vmatpush1.bf16.msra.mxu0 %v1003
        %1084 = vmatprep.mubr.bf16.mxu0 %v853
        %1085 = vmatmul.mubr.bf16.gmra.mrb[0].mxu0 %v852
        %v1086 = vpop.f32.mrb[0].mxu0
        %v1087 = vadd.f32 %v364, %v1086
        %v1088 = vpop.f32.mrb[0].mxu0
        %v1089 = vpop.f32.mrb[0].mxu0
        %v1090 = vadd.f32 %v364, %v1089
        %v1091 = vpop.f32.mrb[0].mxu0
        %1092 = vdwg.mxu0
        %1093 = vmatprep.subr.bf16.mxu0 0
        %1094 = vmatpush1.bf16.msra.mxu0 %v1004
        %1095 = vmatprep.subr.bf16.mxu0 0
        %1096 = vmatpush1.bf16.msra.mxu0 %v1005
        %1097 = vmatprep.subr.bf16.mxu0 0
        %1098 = vmatpush1.bf16.msra.mxu0 %v1006
        %1099 = vmatprep.subr.bf16.mxu0 0
        %1100 = vmatpush1.bf16.msra.mxu0 %v1007
        %1101 = vmatprep.subr.bf16.mxu0 0
        %1102 = vmatpush1.bf16.msra.mxu0 %v1008
        %1103 = vmatprep.subr.bf16.mxu0 0
        %1104 = vmatpush1.bf16.msra.mxu0 %v1009
        %1105 = vmatprep.subr.bf16.mxu0 0
        %1106 = vmatpush1.bf16.msra.mxu0 %v1010
        %1107 = vmatprep.subr.bf16.mxu0 0
        %1108 = vmatpush1.bf16.msra.mxu0 %v1011
        %1109 = vmatprep.subr.bf16.mxu0 0
        %1110 = vmatpush1.bf16.msra.mxu0 %v1012
        %1111 = vmatprep.subr.bf16.mxu0 0
        %1112 = vmatpush1.bf16.msra.mxu0 %v1013
        %1113 = vmatprep.subr.bf16.mxu0 0
        %1114 = vmatpush1.bf16.msra.mxu0 %v1014
        %1115 = vmatprep.subr.bf16.mxu0 0
        %1116 = vmatpush1.bf16.msra.mxu0 %v1015
        %1117 = vmatprep.subr.bf16.mxu0 0
        %1118 = vmatpush1.bf16.msra.mxu0 %v1016
        %1119 = vmatprep.subr.bf16.mxu0 0
        %1120 = vmatpush1.bf16.msra.mxu0 %v1017
        %1121 = vmatprep.subr.bf16.mxu0 0
        %1122 = vmatpush1.bf16.msra.mxu0 %v1018
        %1123 = vmatprep.subr.bf16.mxu0 0
        %1124 = vmatpush1.bf16.msra.mxu0 %v1019
        %1125 = vmatprep.mubr.bf16.mxu0 %v855
        %1126 = vmatmul.mubr.bf16.gmra.mrb[0].mxu0 %v854
        %v1127 = vpop.f32.mrb[0].mxu0
        %v1128 = vadd.f32 %v1087, %v1127
        %v1129 = vpop.f32.mrb[0].mxu0
        %v1130 = vpop.f32.mrb[0].mxu0
        %v1131 = vadd.f32 %v1090, %v1130
        %v1132 = vpop.f32.mrb[0].mxu0
        %1133 = vdwg.mxu0
        %v1134 = vmax.f32 %v1128, 0.0
        %v1135 = vmax.f32 %v1131, 0.0
        %v1136 = vpack.c.bf16 %v1135, %v1134
        %1137 = vmatprep.subr.bf16.mxu0 0
        %1138 = vmatpush1.bf16.msra.mxu0 %v711
        %1139 = vmatprep.subr.bf16.mxu0 0
        %1140 = vmatpush1.bf16.msra.mxu0 %v712
        %1141 = vmatprep.subr.bf16.mxu0 0
        %1142 = vmatpush1.bf16.msra.mxu0 %v713
        %1143 = vmatprep.subr.bf16.mxu0 0
        %1144 = vmatpush1.bf16.msra.mxu0 %v714
        %1145 = vmatprep.subr.bf16.mxu0 0
        %1146 = vmatpush1.bf16.msra.mxu0 %v715
        %1147 = vmatprep.subr.bf16.mxu0 0
        %1148 = vmatpush1.bf16.msra.mxu0 %v716
        %1149 = vmatprep.subr.bf16.mxu0 0
        %1150 = vmatpush1.bf16.msra.mxu0 %v717
        %1151 = vmatprep.subr.bf16.mxu0 0
        %1152 = vmatpush1.bf16.msra.mxu0 %v718
        %1153 = vmatprep.subr.bf16.mxu0 0
        %1154 = vmatpush1.bf16.msra.mxu0 0
        %1155 = vmatprep.subr.bf16.mxu0 0
        %1156 = vmatpush1.bf16.msra.mxu0 0
        %1157 = vmatprep.subr.bf16.mxu0 0
        %1158 = vmatpush1.bf16.msra.mxu0 0
        %1159 = vmatprep.subr.bf16.mxu0 0
        %1160 = vmatpush1.bf16.msra.mxu0 0
        %1161 = vmatprep.subr.bf16.mxu0 0
        %1162 = vmatpush1.bf16.msra.mxu0 0
        %1163 = vmatprep.subr.bf16.mxu0 0
        %1164 = vmatpush1.bf16.msra.mxu0 0
        %1165 = vmatprep.subr.bf16.mxu0 0
        %1166 = vmatpush1.bf16.msra.mxu0 0
        %1167 = vmatprep.subr.bf16.mxu0 0
        %1168 = vmatpush1.bf16.msra.mxu0 0
        %1169 = vmatprep.mubr.bf16.mxu0 0
        %1170 = vmatmul.mubr.bf16.gmra.mrb[0].mxu0 %v1136
        %v1171 = vpop.f32.mrb[0].mxu0
        %v1172 = vadd.f32 0.0, %v1171
        %v1173 = vpop.f32.mrb[0].mxu0
        %v1174 = vpop.f32.mrb[0].mxu0
        %v1175 = vadd.f32 0.0, %v1174
        %v1176 = vpop.f32.mrb[0].mxu0
        %1177 = vdwg.mxu0
        %s1178 = scalar_lea.vmem %s5, 16
        %v1179 = vld [vmem:[%s1178] sm:$0xff]
        %v1180 = vld [vmem:[%s1178 + $0x8] sm:$0xff]
        %v1181 = vmul.f32 %v1172, %v1179
        %v1182 = vmul.f32 %v1175, %v1180
        %v1183 = vpack.c.bf16 %v1182, %v1181
        %s1184 = scalar_lea.vmem %s4, 8
        %v1185 = vld [vmem:[%s1184] sm:$0xf]
        %v1186 = vld [vmem:[%s1184 + $0x4] sm:$0xf]
        %v1189 = vunpack.c.l.b16 %v1185
        %v1190 = vunpack.c.l.b16 %v1186
        %v1191 = vpack.c.b16 %v1190, %v1189
        %vm1192 = vcmask 130048
        %v1194 = vsel %vm1192, %v1191, 0
        %1196 = vmatprep.subr.bf16.mxu0 0
        %1197 = vmatpush1.bf16.msra.mxu0 %v1183
        %1198 = vmatprep.subr.bf16.mxu0 0
        %1199 = vmatpush1.bf16.msra.mxu0 0
        %1200 = vmatprep.subr.bf16.mxu0 0
        %1201 = vmatpush1.bf16.msra.mxu0 0
        %1202 = vmatprep.subr.bf16.mxu0 0
        %1203 = vmatpush1.bf16.msra.mxu0 0
        %1204 = vmatprep.subr.bf16.mxu0 0
        %1205 = vmatpush1.bf16.msra.mxu0 0
        %1206 = vmatprep.subr.bf16.mxu0 0
        %1207 = vmatpush1.bf16.msra.mxu0 0
        %1208 = vmatprep.subr.bf16.mxu0 0
        %1209 = vmatpush1.bf16.msra.mxu0 0
        %1210 = vmatprep.subr.bf16.mxu0 0
        %1211 = vmatpush1.bf16.msra.mxu0 0
        %1212 = vmatprep.subr.bf16.mxu0 0
        %1213 = vmatpush1.bf16.msra.mxu0 0
        %1214 = vmatprep.subr.bf16.mxu0 0
        %1215 = vmatpush1.bf16.msra.mxu0 0
        %1216 = vmatprep.subr.bf16.mxu0 0
        %1217 = vmatpush1.bf16.msra.mxu0 0
        %1218 = vmatprep.subr.bf16.mxu0 0
        %1219 = vmatpush1.bf16.msra.mxu0 0
        %1220 = vmatprep.subr.bf16.mxu0 0
        %1221 = vmatpush1.bf16.msra.mxu0 0
        %1222 = vmatprep.subr.bf16.mxu0 0
        %1223 = vmatpush1.bf16.msra.mxu0 0
        %1224 = vmatprep.subr.bf16.mxu0 0
        %1225 = vmatpush1.bf16.msra.mxu0 0
        %1226 = vmatprep.subr.bf16.mxu0 0
        %1227 = vmatpush1.bf16.msra.mxu0 0
        %1228 = vmatprep.mubr.bf16.mxu0 0
        %1229 = vmatmul.mubr.bf16.gmra.mrb[0].mxu0 %v1194
        %v1230 = vpop.f32.mrb[0].mxu0
        %v1231 = vadd.f32 0.0, %v1230
        %v1232 = vpop.f32.mrb[0].mxu0
        %v1233 = vpop.f32.mrb[0].mxu0
        %v1234 = vadd.f32 0.0, %v1233
        %v1235 = vpop.f32.mrb[0].mxu0
        %1236 = vdwg.mxu0
        %v1239 = vunpack.c.l.b16 %v773
        %v1240 = vunpack.c.l.b16 %v774
        %v1241 = vpack.c.b16 %v1240, %v1239
        %v1243 = vsel %vm1192, %v1241, 0
        %1245 = vmatprep.subr.bf16.mxu0 0
        %1246 = vmatpush1.bf16.msra.mxu0 %v772
        %1247 = vmatprep.subr.bf16.mxu0 0
        %1248 = vmatpush1.bf16.msra.mxu0 0
        %1249 = vmatprep.subr.bf16.mxu0 0
        %1250 = vmatpush1.bf16.msra.mxu0 0
        %1251 = vmatprep.subr.bf16.mxu0 0
        %1252 = vmatpush1.bf16.msra.mxu0 0
        %1253 = vmatprep.subr.bf16.mxu0 0
        %1254 = vmatpush1.bf16.msra.mxu0 0
        %1255 = vmatprep.subr.bf16.mxu0 0
        %1256 = vmatpush1.bf16.msra.mxu0 0
        %1257 = vmatprep.subr.bf16.mxu0 0
        %1258 = vmatpush1.bf16.msra.mxu0 0
        %1259 = vmatprep.subr.bf16.mxu0 0
        %1260 = vmatpush1.bf16.msra.mxu0 0
        %1261 = vmatprep.subr.bf16.mxu0 0
        %1262 = vmatpush1.bf16.msra.mxu0 0
        %1263 = vmatprep.subr.bf16.mxu0 0
        %1264 = vmatpush1.bf16.msra.mxu0 0
        %1265 = vmatprep.subr.bf16.mxu0 0
        %1266 = vmatpush1.bf16.msra.mxu0 0
        %1267 = vmatprep.subr.bf16.mxu0 0
        %1268 = vmatpush1.bf16.msra.mxu0 0
        %1269 = vmatprep.subr.bf16.mxu0 0
        %1270 = vmatpush1.bf16.msra.mxu0 0
        %1271 = vmatprep.subr.bf16.mxu0 0
        %1272 = vmatpush1.bf16.msra.mxu0 0
        %1273 = vmatprep.subr.bf16.mxu0 0
        %1274 = vmatpush1.bf16.msra.mxu0 0
        %1275 = vmatprep.subr.bf16.mxu0 0
        %1276 = vmatpush1.bf16.msra.mxu0 0
        %1277 = vmatprep.mubr.bf16.mxu0 0
        %1278 = vmatmul.mubr.bf16.gmra.mrb[0].mxu0 %v1243
        %v1279 = vpop.f32.mrb[0].mxu0
        %v1280 = vadd.f32 %v1231, %v1279
        %v1281 = vpop.f32.mrb[0].mxu0
        %v1282 = vpop.f32.mrb[0].mxu0
        %v1283 = vadd.f32 %v1234, %v1282
        %v1284 = vpop.f32.mrb[0].mxu0
        %1285 = vdwg.mxu0
        %s1286 = scalar_lea.vmem %s1, 512
        %v1287 = vld [vmem:[%s1286] sm:$0xf]
        %v1288 = vld [vmem:[%s1286 + $0x4] sm:$0xf]
        %v1289 = vld [vmem:[%s1286 + $0x8] sm:$0xf]
        %v1290 = vld [vmem:[%s1286 + $0xc] sm:$0xf]
        %v1291 = vld [vmem:[%s1286 + $0x10] sm:$0xf]
        %v1292 = vld [vmem:[%s1286 + $0x14] sm:$0xf]
        %v1293 = vld [vmem:[%s1286 + $0x18] sm:$0xf]
        %v1294 = vld [vmem:[%s1286 + $0x1c] sm:$0xf]
        %v1295 = vld [vmem:[%s1286 + $0x20] sm:$0xf]
        %v1296 = vld [vmem:[%s1286 + $0x24] sm:$0xf]
        %v1297 = vld [vmem:[%s1286 + $0x28] sm:$0xf]
        %v1298 = vld [vmem:[%s1286 + $0x2c] sm:$0xf]
        %v1299 = vld [vmem:[%s1286 + $0x30] sm:$0xf]
        %v1300 = vld [vmem:[%s1286 + $0x34] sm:$0xf]
        %v1301 = vld [vmem:[%s1286 + $0x38] sm:$0xf]
        %v1302 = vld [vmem:[%s1286 + $0x3c] sm:$0xf]
        %v1303 = vld [vmem:[%s1286 + $0x40] sm:$0xf]
        %v1304 = vld [vmem:[%s1286 + $0x44] sm:$0xf]
        %v1305 = vld [vmem:[%s1286 + $0x48] sm:$0xf]
        %v1306 = vld [vmem:[%s1286 + $0x4c] sm:$0xf]
        %v1307 = vld [vmem:[%s1286 + $0x50] sm:$0xf]
        %v1308 = vld [vmem:[%s1286 + $0x54] sm:$0xf]
        %v1309 = vld [vmem:[%s1286 + $0x58] sm:$0xf]
        %v1310 = vld [vmem:[%s1286 + $0x5c] sm:$0xf]
        %v1311 = vld [vmem:[%s1286 + $0x60] sm:$0xf]
        %v1312 = vld [vmem:[%s1286 + $0x64] sm:$0xf]
        %v1313 = vld [vmem:[%s1286 + $0x68] sm:$0xf]
        %v1314 = vld [vmem:[%s1286 + $0x6c] sm:$0xf]
        %v1315 = vld [vmem:[%s1286 + $0x70] sm:$0xf]
        %v1316 = vld [vmem:[%s1286 + $0x74] sm:$0xf]
        %v1317 = vld [vmem:[%s1286 + $0x78] sm:$0xf]
        %v1318 = vld [vmem:[%s1286 + $0x7c] sm:$0xf]
        %v1319 = vld [vmem:[%s1286 + $0x80] sm:$0xf]
        %v1320 = vld [vmem:[%s1286 + $0x84] sm:$0xf]
        %v1321 = vld [vmem:[%s1286 + $0x88] sm:$0xf]
        %v1322 = vld [vmem:[%s1286 + $0x8c] sm:$0xf]
        %v1323 = vld [vmem:[%s1286 + $0x90] sm:$0xf]
        %v1324 = vld [vmem:[%s1286 + $0x94] sm:$0xf]
        %v1325 = vld [vmem:[%s1286 + $0x98] sm:$0xf]
        %v1326 = vld [vmem:[%s1286 + $0x9c] sm:$0xf]
        %v1327 = vld [vmem:[%s1286 + $0xa0] sm:$0xf]
        %v1328 = vld [vmem:[%s1286 + $0xa4] sm:$0xf]
        %v1329 = vld [vmem:[%s1286 + $0xa8] sm:$0xf]
        %v1330 = vld [vmem:[%s1286 + $0xac] sm:$0xf]
        %v1331 = vld [vmem:[%s1286 + $0xb0] sm:$0xf]
        %v1332 = vld [vmem:[%s1286 + $0xb4] sm:$0xf]
        %v1333 = vld [vmem:[%s1286 + $0xb8] sm:$0xf]
        %v1334 = vld [vmem:[%s1286 + $0xbc] sm:$0xf]
        %v1335 = vld [vmem:[%s1286 + $0xc0] sm:$0xf]
        %v1336 = vld [vmem:[%s1286 + $0xc4] sm:$0xf]
        %v1337 = vld [vmem:[%s1286 + $0xc8] sm:$0xf]
        %v1338 = vld [vmem:[%s1286 + $0xcc] sm:$0xf]
        %v1339 = vld [vmem:[%s1286 + $0xd0] sm:$0xf]
        %v1340 = vld [vmem:[%s1286 + $0xd4] sm:$0xf]
        %v1341 = vld [vmem:[%s1286 + $0xd8] sm:$0xf]
        %v1342 = vld [vmem:[%s1286 + $0xdc] sm:$0xf]
        %v1343 = vld [vmem:[%s1286 + $0xe0] sm:$0xf]
        %v1344 = vld [vmem:[%s1286 + $0xe4] sm:$0xf]
        %v1345 = vld [vmem:[%s1286 + $0xe8] sm:$0xf]
        %v1346 = vld [vmem:[%s1286 + $0xec] sm:$0xf]
        %v1347 = vld [vmem:[%s1286 + $0xf0] sm:$0xf]
        %v1348 = vld [vmem:[%s1286 + $0xf4] sm:$0xf]
        %v1349 = vld [vmem:[%s1286 + $0xf8] sm:$0xf]
        %v1350 = vld [vmem:[%s1286 + $0xfc] sm:$0xf]
        %v1355 = vunpack.c.l.b16 %v287
        %v1356 = vunpack.c.h.b16 %v287
        %v1357 = vunpack.c.l.b16 %v288
        %v1358 = vunpack.c.h.b16 %v288
        %v1359 = vunpack.c.l.b16 %v289
        %v1360 = vunpack.c.h.b16 %v289
        %v1361 = vunpack.c.l.b16 %v290
        %v1362 = vunpack.c.h.b16 %v290
        %v1363 = vpack.c.b16 %v1359, %v1355
        %v1364 = vpack.c.b16 %v1360, %v1356
        %v1365 = vpack.c.b16 %v1361, %v1357
        %v1366 = vpack.c.b16 %v1362, %v1358
        %v1435 = vunpack.c.l.b16 %v1287
        %v1436 = vunpack.c.l.b16 %v1288
        %v1437 = vunpack.c.l.b16 %v1289
        %v1438 = vunpack.c.l.b16 %v1290
        %v1439 = vunpack.c.l.b16 %v1291
        %v1440 = vunpack.c.l.b16 %v1292
        %v1441 = vunpack.c.l.b16 %v1293
        %v1442 = vunpack.c.l.b16 %v1294
        %v1443 = vunpack.c.l.b16 %v1295
        %v1444 = vunpack.c.l.b16 %v1296
        %v1445 = vunpack.c.l.b16 %v1297
        %v1446 = vunpack.c.l.b16 %v1298
        %v1447 = vunpack.c.l.b16 %v1299
        %v1448 = vunpack.c.l.b16 %v1300
        %v1449 = vunpack.c.l.b16 %v1301
        %v1450 = vunpack.c.l.b16 %v1302
        %v1451 = vunpack.c.l.b16 %v1303
        %v1452 = vunpack.c.l.b16 %v1304
        %v1453 = vunpack.c.l.b16 %v1305
        %v1454 = vunpack.c.l.b16 %v1306
        %v1455 = vunpack.c.l.b16 %v1307
        %v1456 = vunpack.c.l.b16 %v1308
        %v1457 = vunpack.c.l.b16 %v1309
        %v1458 = vunpack.c.l.b16 %v1310
        %v1459 = vunpack.c.l.b16 %v1311
        %v1460 = vunpack.c.l.b16 %v1312
        %v1461 = vunpack.c.l.b16 %v1313
        %v1462 = vunpack.c.l.b16 %v1314
        %v1463 = vunpack.c.l.b16 %v1315
        %v1464 = vunpack.c.l.b16 %v1316
        %v1465 = vunpack.c.l.b16 %v1317
        %v1466 = vunpack.c.l.b16 %v1318
        %v1467 = vunpack.c.l.b16 %v1319
        %v1468 = vunpack.c.l.b16 %v1320
        %v1469 = vunpack.c.l.b16 %v1321
        %v1470 = vunpack.c.l.b16 %v1322
        %v1471 = vunpack.c.l.b16 %v1323
        %v1472 = vunpack.c.l.b16 %v1324
        %v1473 = vunpack.c.l.b16 %v1325
        %v1474 = vunpack.c.l.b16 %v1326
        %v1475 = vunpack.c.l.b16 %v1327
        %v1476 = vunpack.c.l.b16 %v1328
        %v1477 = vunpack.c.l.b16 %v1329
        %v1478 = vunpack.c.l.b16 %v1330
        %v1479 = vunpack.c.l.b16 %v1331
        %v1480 = vunpack.c.l.b16 %v1332
        %v1481 = vunpack.c.l.b16 %v1333
        %v1482 = vunpack.c.l.b16 %v1334
        %v1483 = vunpack.c.l.b16 %v1335
        %v1484 = vunpack.c.l.b16 %v1336
        %v1485 = vunpack.c.l.b16 %v1337
        %v1486 = vunpack.c.l.b16 %v1338
        %v1487 = vunpack.c.l.b16 %v1339
        %v1488 = vunpack.c.l.b16 %v1340
        %v1489 = vunpack.c.l.b16 %v1341
        %v1490 = vunpack.c.l.b16 %v1342
        %v1491 = vunpack.c.l.b16 %v1343
        %v1492 = vunpack.c.l.b16 %v1344
        %v1493 = vunpack.c.l.b16 %v1345
        %v1494 = vunpack.c.l.b16 %v1346
        %v1495 = vunpack.c.l.b16 %v1347
        %v1496 = vunpack.c.l.b16 %v1348
        %v1497 = vunpack.c.l.b16 %v1349
        %v1498 = vunpack.c.l.b16 %v1350
        %v1499 = vpack.c.b16 %v1436, %v1435
        %v1500 = vpack.c.b16 %v1438, %v1437
        %v1501 = vpack.c.b16 %v1440, %v1439
        %v1502 = vpack.c.b16 %v1442, %v1441
        %v1503 = vpack.c.b16 %v1444, %v1443
        %v1504 = vpack.c.b16 %v1446, %v1445
        %v1505 = vpack.c.b16 %v1448, %v1447
        %v1506 = vpack.c.b16 %v1450, %v1449
        %v1507 = vpack.c.b16 %v1452, %v1451
        %v1508 = vpack.c.b16 %v1454, %v1453
        %v1509 = vpack.c.b16 %v1456, %v1455
        %v1510 = vpack.c.b16 %v1458, %v1457
        %v1511 = vpack.c.b16 %v1460, %v1459
        %v1512 = vpack.c.b16 %v1462, %v1461
        %v1513 = vpack.c.b16 %v1464, %v1463
        %v1514 = vpack.c.b16 %v1466, %v1465
        %v1515 = vpack.c.b16 %v1468, %v1467
        %v1516 = vpack.c.b16 %v1470, %v1469
        %v1517 = vpack.c.b16 %v1472, %v1471
        %v1518 = vpack.c.b16 %v1474, %v1473
        %v1519 = vpack.c.b16 %v1476, %v1475
        %v1520 = vpack.c.b16 %v1478, %v1477
        %v1521 = vpack.c.b16 %v1480, %v1479
        %v1522 = vpack.c.b16 %v1482, %v1481
        %v1523 = vpack.c.b16 %v1484, %v1483
        %v1524 = vpack.c.b16 %v1486, %v1485
        %v1525 = vpack.c.b16 %v1488, %v1487
        %v1526 = vpack.c.b16 %v1490, %v1489
        %v1527 = vpack.c.b16 %v1492, %v1491
        %v1528 = vpack.c.b16 %v1494, %v1493
        %v1529 = vpack.c.b16 %v1496, %v1495
        %v1530 = vpack.c.b16 %v1498, %v1497
        %1563 = vmatprep.subr.bf16.mxu0 0
        %1564 = vmatpush1.bf16.msra.mxu0 %v1499
        %1565 = vmatprep.subr.bf16.mxu0 0
        %1566 = vmatpush1.bf16.msra.mxu0 %v1500
        %1567 = vmatprep.subr.bf16.mxu0 0
        %1568 = vmatpush1.bf16.msra.mxu0 %v1501
        %1569 = vmatprep.subr.bf16.mxu0 0
        %1570 = vmatpush1.bf16.msra.mxu0 %v1502
        %1571 = vmatprep.subr.bf16.mxu0 0
        %1572 = vmatpush1.bf16.msra.mxu0 %v1503
        %1573 = vmatprep.subr.bf16.mxu0 0
        %1574 = vmatpush1.bf16.msra.mxu0 %v1504
        %1575 = vmatprep.subr.bf16.mxu0 0
        %1576 = vmatpush1.bf16.msra.mxu0 %v1505
        %1577 = vmatprep.subr.bf16.mxu0 0
        %1578 = vmatpush1.bf16.msra.mxu0 %v1506
        %1579 = vmatprep.subr.bf16.mxu0 0
        %1580 = vmatpush1.bf16.msra.mxu0 %v1507
        %1581 = vmatprep.subr.bf16.mxu0 0
        %1582 = vmatpush1.bf16.msra.mxu0 %v1508
        %1583 = vmatprep.subr.bf16.mxu0 0
        %1584 = vmatpush1.bf16.msra.mxu0 %v1509
        %1585 = vmatprep.subr.bf16.mxu0 0
        %1586 = vmatpush1.bf16.msra.mxu0 %v1510
        %1587 = vmatprep.subr.bf16.mxu0 0
        %1588 = vmatpush1.bf16.msra.mxu0 %v1511
        %1589 = vmatprep.subr.bf16.mxu0 0
        %1590 = vmatpush1.bf16.msra.mxu0 %v1512
        %1591 = vmatprep.subr.bf16.mxu0 0
        %1592 = vmatpush1.bf16.msra.mxu0 %v1513
        %1593 = vmatprep.subr.bf16.mxu0 0
        %1594 = vmatpush1.bf16.msra.mxu0 %v1514
        %1595 = vmatprep.mubr.bf16.mxu0 %v1364
        %1596 = vmatmul.mubr.bf16.gmra.mrb[0].mxu0 %v1363
        %v1597 = vpop.f32.mrb[0].mxu0
        %v1598 = vadd.f32 %v364, %v1597
        %v1599 = vpop.f32.mrb[0].mxu0
        %v1600 = vpop.f32.mrb[0].mxu0
        %v1601 = vadd.f32 %v364, %v1600
        %v1602 = vpop.f32.mrb[0].mxu0
        %1603 = vdwg.mxu0
        %1604 = vmatprep.subr.bf16.mxu0 0
        %1605 = vmatpush1.bf16.msra.mxu0 %v1515
        %1606 = vmatprep.subr.bf16.mxu0 0
        %1607 = vmatpush1.bf16.msra.mxu0 %v1516
        %1608 = vmatprep.subr.bf16.mxu0 0
        %1609 = vmatpush1.bf16.msra.mxu0 %v1517
        %1610 = vmatprep.subr.bf16.mxu0 0
        %1611 = vmatpush1.bf16.msra.mxu0 %v1518
        %1612 = vmatprep.subr.bf16.mxu0 0
        %1613 = vmatpush1.bf16.msra.mxu0 %v1519
        %1614 = vmatprep.subr.bf16.mxu0 0
        %1615 = vmatpush1.bf16.msra.mxu0 %v1520
        %1616 = vmatprep.subr.bf16.mxu0 0
        %1617 = vmatpush1.bf16.msra.mxu0 %v1521
        %1618 = vmatprep.subr.bf16.mxu0 0
        %1619 = vmatpush1.bf16.msra.mxu0 %v1522
        %1620 = vmatprep.subr.bf16.mxu0 0
        %1621 = vmatpush1.bf16.msra.mxu0 %v1523
        %1622 = vmatprep.subr.bf16.mxu0 0
        %1623 = vmatpush1.bf16.msra.mxu0 %v1524
        %1624 = vmatprep.subr.bf16.mxu0 0
        %1625 = vmatpush1.bf16.msra.mxu0 %v1525
        %1626 = vmatprep.subr.bf16.mxu0 0
        %1627 = vmatpush1.bf16.msra.mxu0 %v1526
        %1628 = vmatprep.subr.bf16.mxu0 0
        %1629 = vmatpush1.bf16.msra.mxu0 %v1527
        %1630 = vmatprep.subr.bf16.mxu0 0
        %1631 = vmatpush1.bf16.msra.mxu0 %v1528
        %1632 = vmatprep.subr.bf16.mxu0 0
        %1633 = vmatpush1.bf16.msra.mxu0 %v1529
        %1634 = vmatprep.subr.bf16.mxu0 0
        %1635 = vmatpush1.bf16.msra.mxu0 %v1530
        %1636 = vmatprep.mubr.bf16.mxu0 %v1366
        %1637 = vmatmul.mubr.bf16.gmra.mrb[0].mxu0 %v1365
        %v1638 = vpop.f32.mrb[0].mxu0
        %v1639 = vadd.f32 %v1598, %v1638
        %v1640 = vpop.f32.mrb[0].mxu0
        %v1641 = vpop.f32.mrb[0].mxu0
        %v1642 = vadd.f32 %v1601, %v1641
        %v1643 = vpop.f32.mrb[0].mxu0
        %1644 = vdwg.mxu0
        %v1645 = vmax.f32 %v1639, 0.0
        %v1646 = vmax.f32 %v1642, 0.0
        %v1647 = vpack.c.bf16 %v1646, %v1645
        %1648 = vmatprep.subr.bf16.mxu0 0
        %1649 = vmatpush1.bf16.msra.mxu0 %v711
        %1650 = vmatprep.subr.bf16.mxu0 0
        %1651 = vmatpush1.bf16.msra.mxu0 %v712
        %1652 = vmatprep.subr.bf16.mxu0 0
        %1653 = vmatpush1.bf16.msra.mxu0 %v713
        %1654 = vmatprep.subr.bf16.mxu0 0
        %1655 = vmatpush1.bf16.msra.mxu0 %v714
        %1656 = vmatprep.subr.bf16.mxu0 0
        %1657 = vmatpush1.bf16.msra.mxu0 %v715
        %1658 = vmatprep.subr.bf16.mxu0 0
        %1659 = vmatpush1.bf16.msra.mxu0 %v716
        %1660 = vmatprep.subr.bf16.mxu0 0
        %1661 = vmatpush1.bf16.msra.mxu0 %v717
        %1662 = vmatprep.subr.bf16.mxu0 0
        %1663 = vmatpush1.bf16.msra.mxu0 %v718
        %1664 = vmatprep.subr.bf16.mxu0 0
        %1665 = vmatpush1.bf16.msra.mxu0 0
        %1666 = vmatprep.subr.bf16.mxu0 0
        %1667 = vmatpush1.bf16.msra.mxu0 0
        %1668 = vmatprep.subr.bf16.mxu0 0
        %1669 = vmatpush1.bf16.msra.mxu0 0
        %1670 = vmatprep.subr.bf16.mxu0 0
        %1671 = vmatpush1.bf16.msra.mxu0 0
        %1672 = vmatprep.subr.bf16.mxu0 0
        %1673 = vmatpush1.bf16.msra.mxu0 0
        %1674 = vmatprep.subr.bf16.mxu0 0
        %1675 = vmatpush1.bf16.msra.mxu0 0
        %1676 = vmatprep.subr.bf16.mxu0 0
        %1677 = vmatpush1.bf16.msra.mxu0 0
        %1678 = vmatprep.subr.bf16.mxu0 0
        %1679 = vmatpush1.bf16.msra.mxu0 0
        %1680 = vmatprep.mubr.bf16.mxu0 0
        %1681 = vmatmul.mubr.bf16.gmra.mrb[0].mxu0 %v1647
        %v1682 = vpop.f32.mrb[0].mxu0
        %v1683 = vadd.f32 0.0, %v1682
        %v1684 = vpop.f32.mrb[0].mxu0
        %v1685 = vpop.f32.mrb[0].mxu0
        %v1686 = vadd.f32 0.0, %v1685
        %v1687 = vpop.f32.mrb[0].mxu0
        %1688 = vdwg.mxu0
        %s1689 = scalar_lea.vmem %s5, 32
        %v1690 = vld [vmem:[%s1689] sm:$0xff]
        %v1691 = vld [vmem:[%s1689 + $0x8] sm:$0xff]
        %v1692 = vmul.f32 %v1683, %v1690
        %v1693 = vmul.f32 %v1686, %v1691
        %v1694 = vpack.c.bf16 %v1693, %v1692
        %s1695 = scalar_lea.vmem %s4, 16
        %v1696 = vld [vmem:[%s1695] sm:$0xf]
        %v1697 = vld [vmem:[%s1695 + $0x4] sm:$0xf]
        %v1700 = vunpack.c.l.b16 %v1696
        %v1701 = vunpack.c.l.b16 %v1697
        %v1702 = vpack.c.b16 %v1701, %v1700
        %v1704 = vsel %vm1192, %v1702, 0
        %1706 = vmatprep.subr.bf16.mxu0 0
        %1707 = vmatpush1.bf16.msra.mxu0 %v1694
        %1708 = vmatprep.subr.bf16.mxu0 0
        %1709 = vmatpush1.bf16.msra.mxu0 0
        %1710 = vmatprep.subr.bf16.mxu0 0
        %1711 = vmatpush1.bf16.msra.mxu0 0
        %1712 = vmatprep.subr.bf16.mxu0 0
        %1713 = vmatpush1.bf16.msra.mxu0 0
        %1714 = vmatprep.subr.bf16.mxu0 0
        %1715 = vmatpush1.bf16.msra.mxu0 0
        %1716 = vmatprep.subr.bf16.mxu0 0
        %1717 = vmatpush1.bf16.msra.mxu0 0
        %1718 = vmatprep.subr.bf16.mxu0 0
        %1719 = vmatpush1.bf16.msra.mxu0 0
        %1720 = vmatprep.subr.bf16.mxu0 0
        %1721 = vmatpush1.bf16.msra.mxu0 0
        %1722 = vmatprep.subr.bf16.mxu0 0
        %1723 = vmatpush1.bf16.msra.mxu0 0
        %1724 = vmatprep.subr.bf16.mxu0 0
        %1725 = vmatpush1.bf16.msra.mxu0 0
        %1726 = vmatprep.subr.bf16.mxu0 0
        %1727 = vmatpush1.bf16.msra.mxu0 0
        %1728 = vmatprep.subr.bf16.mxu0 0
        %1729 = vmatpush1.bf16.msra.mxu0 0
        %1730 = vmatprep.subr.bf16.mxu0 0
        %1731 = vmatpush1.bf16.msra.mxu0 0
        %1732 = vmatprep.subr.bf16.mxu0 0
        %1733 = vmatpush1.bf16.msra.mxu0 0
        %1734 = vmatprep.subr.bf16.mxu0 0
        %1735 = vmatpush1.bf16.msra.mxu0 0
        %1736 = vmatprep.subr.bf16.mxu0 0
        %1737 = vmatpush1.bf16.msra.mxu0 0
        %1738 = vmatprep.mubr.bf16.mxu0 0
        %1739 = vmatmul.mubr.bf16.gmra.mrb[0].mxu0 %v1704
        %v1740 = vpop.f32.mrb[0].mxu0
        %v1741 = vadd.f32 0.0, %v1740
        %v1742 = vpop.f32.mrb[0].mxu0
        %v1743 = vpop.f32.mrb[0].mxu0
        %v1744 = vadd.f32 0.0, %v1743
        %v1745 = vpop.f32.mrb[0].mxu0
        %1746 = vdwg.mxu0
        %v1747 = vadd.f32 %v1280, %v1741
        %v1748 = vadd.f32 %v1283, %v1744
        %s1749 = scalar_lea.vmem %s1, 768
        %v1750 = vld [vmem:[%s1749] sm:$0xf]
        %v1751 = vld [vmem:[%s1749 + $0x4] sm:$0xf]
        %v1752 = vld [vmem:[%s1749 + $0x8] sm:$0xf]
        %v1753 = vld [vmem:[%s1749 + $0xc] sm:$0xf]
        %v1754 = vld [vmem:[%s1749 + $0x10] sm:$0xf]
        %v1755 = vld [vmem:[%s1749 + $0x14] sm:$0xf]
        %v1756 = vld [vmem:[%s1749 + $0x18] sm:$0xf]
        %v1757 = vld [vmem:[%s1749 + $0x1c] sm:$0xf]
        %v1758 = vld [vmem:[%s1749 + $0x20] sm:$0xf]
        %v1759 = vld [vmem:[%s1749 + $0x24] sm:$0xf]
        %v1760 = vld [vmem:[%s1749 + $0x28] sm:$0xf]
        %v1761 = vld [vmem:[%s1749 + $0x2c] sm:$0xf]
        %v1762 = vld [vmem:[%s1749 + $0x30] sm:$0xf]
        %v1763 = vld [vmem:[%s1749 + $0x34] sm:$0xf]
        %v1764 = vld [vmem:[%s1749 + $0x38] sm:$0xf]
        %v1765 = vld [vmem:[%s1749 + $0x3c] sm:$0xf]
        %v1766 = vld [vmem:[%s1749 + $0x40] sm:$0xf]
        %v1767 = vld [vmem:[%s1749 + $0x44] sm:$0xf]
        %v1768 = vld [vmem:[%s1749 + $0x48] sm:$0xf]
        %v1769 = vld [vmem:[%s1749 + $0x4c] sm:$0xf]
        %v1770 = vld [vmem:[%s1749 + $0x50] sm:$0xf]
        %v1771 = vld [vmem:[%s1749 + $0x54] sm:$0xf]
        %v1772 = vld [vmem:[%s1749 + $0x58] sm:$0xf]
        %v1773 = vld [vmem:[%s1749 + $0x5c] sm:$0xf]
        %v1774 = vld [vmem:[%s1749 + $0x60] sm:$0xf]
        %v1775 = vld [vmem:[%s1749 + $0x64] sm:$0xf]
        %v1776 = vld [vmem:[%s1749 + $0x68] sm:$0xf]
        %v1777 = vld [vmem:[%s1749 + $0x6c] sm:$0xf]
        %v1778 = vld [vmem:[%s1749 + $0x70] sm:$0xf]
        %v1779 = vld [vmem:[%s1749 + $0x74] sm:$0xf]
        %v1780 = vld [vmem:[%s1749 + $0x78] sm:$0xf]
        %v1781 = vld [vmem:[%s1749 + $0x7c] sm:$0xf]
        %v1782 = vld [vmem:[%s1749 + $0x80] sm:$0xf]
        %v1783 = vld [vmem:[%s1749 + $0x84] sm:$0xf]
        %v1784 = vld [vmem:[%s1749 + $0x88] sm:$0xf]
        %v1785 = vld [vmem:[%s1749 + $0x8c] sm:$0xf]
        %v1786 = vld [vmem:[%s1749 + $0x90] sm:$0xf]
        %v1787 = vld [vmem:[%s1749 + $0x94] sm:$0xf]
        %v1788 = vld [vmem:[%s1749 + $0x98] sm:$0xf]
        %v1789 = vld [vmem:[%s1749 + $0x9c] sm:$0xf]
        %v1790 = vld [vmem:[%s1749 + $0xa0] sm:$0xf]
        %v1791 = vld [vmem:[%s1749 + $0xa4] sm:$0xf]
        %v1792 = vld [vmem:[%s1749 + $0xa8] sm:$0xf]
        %v1793 = vld [vmem:[%s1749 + $0xac] sm:$0xf]
        %v1794 = vld [vmem:[%s1749 + $0xb0] sm:$0xf]
        %v1795 = vld [vmem:[%s1749 + $0xb4] sm:$0xf]
        %v1796 = vld [vmem:[%s1749 + $0xb8] sm:$0xf]
        %v1797 = vld [vmem:[%s1749 + $0xbc] sm:$0xf]
        %v1798 = vld [vmem:[%s1749 + $0xc0] sm:$0xf]
        %v1799 = vld [vmem:[%s1749 + $0xc4] sm:$0xf]
        %v1800 = vld [vmem:[%s1749 + $0xc8] sm:$0xf]
        %v1801 = vld [vmem:[%s1749 + $0xcc] sm:$0xf]
        %v1802 = vld [vmem:[%s1749 + $0xd0] sm:$0xf]
        %v1803 = vld [vmem:[%s1749 + $0xd4] sm:$0xf]
        %v1804 = vld [vmem:[%s1749 + $0xd8] sm:$0xf]
        %v1805 = vld [vmem:[%s1749 + $0xdc] sm:$0xf]
        %v1806 = vld [vmem:[%s1749 + $0xe0] sm:$0xf]
        %v1807 = vld [vmem:[%s1749 + $0xe4] sm:$0xf]
        %v1808 = vld [vmem:[%s1749 + $0xe8] sm:$0xf]
        %v1809 = vld [vmem:[%s1749 + $0xec] sm:$0xf]
        %v1810 = vld [vmem:[%s1749 + $0xf0] sm:$0xf]
        %v1811 = vld [vmem:[%s1749 + $0xf4] sm:$0xf]
        %v1812 = vld [vmem:[%s1749 + $0xf8] sm:$0xf]
        %v1813 = vld [vmem:[%s1749 + $0xfc] sm:$0xf]
        %v1818 = vunpack.c.l.b16 %v291
        %v1819 = vunpack.c.h.b16 %v291
        %v1820 = vunpack.c.l.b16 %v292
        %v1821 = vunpack.c.h.b16 %v292
        %v1822 = vunpack.c.l.b16 %v293
        %v1823 = vunpack.c.h.b16 %v293
        %v1824 = vunpack.c.l.b16 %v294
        %v1825 = vunpack.c.h.b16 %v294
        %v1826 = vpack.c.b16 %v1822, %v1818
        %v1827 = vpack.c.b16 %v1823, %v1819
        %v1828 = vpack.c.b16 %v1824, %v1820
        %v1829 = vpack.c.b16 %v1825, %v1821
        %v1898 = vunpack.c.l.b16 %v1750
        %v1899 = vunpack.c.l.b16 %v1751
        %v1900 = vunpack.c.l.b16 %v1752
        %v1901 = vunpack.c.l.b16 %v1753
        %v1902 = vunpack.c.l.b16 %v1754
        %v1903 = vunpack.c.l.b16 %v1755
        %v1904 = vunpack.c.l.b16 %v1756
        %v1905 = vunpack.c.l.b16 %v1757
        %v1906 = vunpack.c.l.b16 %v1758
        %v1907 = vunpack.c.l.b16 %v1759
        %v1908 = vunpack.c.l.b16 %v1760
        %v1909 = vunpack.c.l.b16 %v1761
        %v1910 = vunpack.c.l.b16 %v1762
        %v1911 = vunpack.c.l.b16 %v1763
        %v1912 = vunpack.c.l.b16 %v1764
        %v1913 = vunpack.c.l.b16 %v1765
        %v1914 = vunpack.c.l.b16 %v1766
        %v1915 = vunpack.c.l.b16 %v1767
        %v1916 = vunpack.c.l.b16 %v1768
        %v1917 = vunpack.c.l.b16 %v1769
        %v1918 = vunpack.c.l.b16 %v1770
        %v1919 = vunpack.c.l.b16 %v1771
        %v1920 = vunpack.c.l.b16 %v1772
        %v1921 = vunpack.c.l.b16 %v1773
        %v1922 = vunpack.c.l.b16 %v1774
        %v1923 = vunpack.c.l.b16 %v1775
        %v1924 = vunpack.c.l.b16 %v1776
        %v1925 = vunpack.c.l.b16 %v1777
        %v1926 = vunpack.c.l.b16 %v1778
        %v1927 = vunpack.c.l.b16 %v1779
        %v1928 = vunpack.c.l.b16 %v1780
        %v1929 = vunpack.c.l.b16 %v1781
        %v1930 = vunpack.c.l.b16 %v1782
        %v1931 = vunpack.c.l.b16 %v1783
        %v1932 = vunpack.c.l.b16 %v1784
        %v1933 = vunpack.c.l.b16 %v1785
        %v1934 = vunpack.c.l.b16 %v1786
        %v1935 = vunpack.c.l.b16 %v1787
        %v1936 = vunpack.c.l.b16 %v1788
        %v1937 = vunpack.c.l.b16 %v1789
        %v1938 = vunpack.c.l.b16 %v1790
        %v1939 = vunpack.c.l.b16 %v1791
        %v1940 = vunpack.c.l.b16 %v1792
        %v1941 = vunpack.c.l.b16 %v1793
        %v1942 = vunpack.c.l.b16 %v1794
        %v1943 = vunpack.c.l.b16 %v1795
        %v1944 = vunpack.c.l.b16 %v1796
        %v1945 = vunpack.c.l.b16 %v1797
        %v1946 = vunpack.c.l.b16 %v1798
        %v1947 = vunpack.c.l.b16 %v1799
        %v1948 = vunpack.c.l.b16 %v1800
        %v1949 = vunpack.c.l.b16 %v1801
        %v1950 = vunpack.c.l.b16 %v1802
        %v1951 = vunpack.c.l.b16 %v1803
        %v1952 = vunpack.c.l.b16 %v1804
        %v1953 = vunpack.c.l.b16 %v1805
        %v1954 = vunpack.c.l.b16 %v1806
        %v1955 = vunpack.c.l.b16 %v1807
        %v1956 = vunpack.c.l.b16 %v1808
        %v1957 = vunpack.c.l.b16 %v1809
        %v1958 = vunpack.c.l.b16 %v1810
        %v1959 = vunpack.c.l.b16 %v1811
        %v1960 = vunpack.c.l.b16 %v1812
        %v1961 = vunpack.c.l.b16 %v1813
        %v1962 = vpack.c.b16 %v1899, %v1898
        %v1963 = vpack.c.b16 %v1901, %v1900
        %v1964 = vpack.c.b16 %v1903, %v1902
        %v1965 = vpack.c.b16 %v1905, %v1904
        %v1966 = vpack.c.b16 %v1907, %v1906
        %v1967 = vpack.c.b16 %v1909, %v1908
        %v1968 = vpack.c.b16 %v1911, %v1910
        %v1969 = vpack.c.b16 %v1913, %v1912
        %v1970 = vpack.c.b16 %v1915, %v1914
        %v1971 = vpack.c.b16 %v1917, %v1916
        %v1972 = vpack.c.b16 %v1919, %v1918
        %v1973 = vpack.c.b16 %v1921, %v1920
        %v1974 = vpack.c.b16 %v1923, %v1922
        %v1975 = vpack.c.b16 %v1925, %v1924
        %v1976 = vpack.c.b16 %v1927, %v1926
        %v1977 = vpack.c.b16 %v1929, %v1928
        %v1978 = vpack.c.b16 %v1931, %v1930
        %v1979 = vpack.c.b16 %v1933, %v1932
        %v1980 = vpack.c.b16 %v1935, %v1934
        %v1981 = vpack.c.b16 %v1937, %v1936
        %v1982 = vpack.c.b16 %v1939, %v1938
        %v1983 = vpack.c.b16 %v1941, %v1940
        %v1984 = vpack.c.b16 %v1943, %v1942
        %v1985 = vpack.c.b16 %v1945, %v1944
        %v1986 = vpack.c.b16 %v1947, %v1946
        %v1987 = vpack.c.b16 %v1949, %v1948
        %v1988 = vpack.c.b16 %v1951, %v1950
        %v1989 = vpack.c.b16 %v1953, %v1952
        %v1990 = vpack.c.b16 %v1955, %v1954
        %v1991 = vpack.c.b16 %v1957, %v1956
        %v1992 = vpack.c.b16 %v1959, %v1958
        %v1993 = vpack.c.b16 %v1961, %v1960
        %2026 = vmatprep.subr.bf16.mxu0 0
        %2027 = vmatpush1.bf16.msra.mxu0 %v1962
        %2028 = vmatprep.subr.bf16.mxu0 0
        %2029 = vmatpush1.bf16.msra.mxu0 %v1963
        %2030 = vmatprep.subr.bf16.mxu0 0
        %2031 = vmatpush1.bf16.msra.mxu0 %v1964
        %2032 = vmatprep.subr.bf16.mxu0 0
        %2033 = vmatpush1.bf16.msra.mxu0 %v1965
        %2034 = vmatprep.subr.bf16.mxu0 0
        %2035 = vmatpush1.bf16.msra.mxu0 %v1966
        %2036 = vmatprep.subr.bf16.mxu0 0
        %2037 = vmatpush1.bf16.msra.mxu0 %v1967
        %2038 = vmatprep.subr.bf16.mxu0 0
        %2039 = vmatpush1.bf16.msra.mxu0 %v1968
        %2040 = vmatprep.subr.bf16.mxu0 0
        %2041 = vmatpush1.bf16.msra.mxu0 %v1969
        %2042 = vmatprep.subr.bf16.mxu0 0
        %2043 = vmatpush1.bf16.msra.mxu0 %v1970
        %2044 = vmatprep.subr.bf16.mxu0 0
        %2045 = vmatpush1.bf16.msra.mxu0 %v1971
        %2046 = vmatprep.subr.bf16.mxu0 0
        %2047 = vmatpush1.bf16.msra.mxu0 %v1972
        %2048 = vmatprep.subr.bf16.mxu0 0
        %2049 = vmatpush1.bf16.msra.mxu0 %v1973
        %2050 = vmatprep.subr.bf16.mxu0 0
        %2051 = vmatpush1.bf16.msra.mxu0 %v1974
        %2052 = vmatprep.subr.bf16.mxu0 0
        %2053 = vmatpush1.bf16.msra.mxu0 %v1975
        %2054 = vmatprep.subr.bf16.mxu0 0
        %2055 = vmatpush1.bf16.msra.mxu0 %v1976
        %2056 = vmatprep.subr.bf16.mxu0 0
        %2057 = vmatpush1.bf16.msra.mxu0 %v1977
        %2058 = vmatprep.mubr.bf16.mxu0 %v1827
        %2059 = vmatmul.mubr.bf16.gmra.mrb[0].mxu0 %v1826
        %v2060 = vpop.f32.mrb[0].mxu0
        %v2061 = vadd.f32 %v364, %v2060
        %v2062 = vpop.f32.mrb[0].mxu0
        %v2063 = vpop.f32.mrb[0].mxu0
        %v2064 = vadd.f32 %v364, %v2063
        %v2065 = vpop.f32.mrb[0].mxu0
        %2066 = vdwg.mxu0
        %2067 = vmatprep.subr.bf16.mxu0 0
        %2068 = vmatpush1.bf16.msra.mxu0 %v1978
        %2069 = vmatprep.subr.bf16.mxu0 0
        %2070 = vmatpush1.bf16.msra.mxu0 %v1979
        %2071 = vmatprep.subr.bf16.mxu0 0
        %2072 = vmatpush1.bf16.msra.mxu0 %v1980
        %2073 = vmatprep.subr.bf16.mxu0 0
        %2074 = vmatpush1.bf16.msra.mxu0 %v1981
        %2075 = vmatprep.subr.bf16.mxu0 0
        %2076 = vmatpush1.bf16.msra.mxu0 %v1982
        %2077 = vmatprep.subr.bf16.mxu0 0
        %2078 = vmatpush1.bf16.msra.mxu0 %v1983
        %2079 = vmatprep.subr.bf16.mxu0 0
        %2080 = vmatpush1.bf16.msra.mxu0 %v1984
        %2081 = vmatprep.subr.bf16.mxu0 0
        %2082 = vmatpush1.bf16.msra.mxu0 %v1985
        %2083 = vmatprep.subr.bf16.mxu0 0
        %2084 = vmatpush1.bf16.msra.mxu0 %v1986
        %2085 = vmatprep.subr.bf16.mxu0 0
        %2086 = vmatpush1.bf16.msra.mxu0 %v1987
        %2087 = vmatprep.subr.bf16.mxu0 0
        %2088 = vmatpush1.bf16.msra.mxu0 %v1988
        %2089 = vmatprep.subr.bf16.mxu0 0
        %2090 = vmatpush1.bf16.msra.mxu0 %v1989
        %2091 = vmatprep.subr.bf16.mxu0 0
        %2092 = vmatpush1.bf16.msra.mxu0 %v1990
        %2093 = vmatprep.subr.bf16.mxu0 0
        %2094 = vmatpush1.bf16.msra.mxu0 %v1991
        %2095 = vmatprep.subr.bf16.mxu0 0
        %2096 = vmatpush1.bf16.msra.mxu0 %v1992
        %2097 = vmatprep.subr.bf16.mxu0 0
        %2098 = vmatpush1.bf16.msra.mxu0 %v1993
        %2099 = vmatprep.mubr.bf16.mxu0 %v1829
        %2100 = vmatmul.mubr.bf16.gmra.mrb[0].mxu0 %v1828
        %v2101 = vpop.f32.mrb[0].mxu0
        %v2102 = vadd.f32 %v2061, %v2101
        %v2103 = vpop.f32.mrb[0].mxu0
        %v2104 = vpop.f32.mrb[0].mxu0
        %v2105 = vadd.f32 %v2064, %v2104
        %v2106 = vpop.f32.mrb[0].mxu0
        %2107 = vdwg.mxu0
        %v2108 = vmax.f32 %v2102, 0.0
        %v2109 = vmax.f32 %v2105, 0.0
        %v2110 = vpack.c.bf16 %v2109, %v2108
        %2111 = vmatprep.subr.bf16.mxu0 0
        %2112 = vmatpush1.bf16.msra.mxu0 %v711
        %2113 = vmatprep.subr.bf16.mxu0 0
        %2114 = vmatpush1.bf16.msra.mxu0 %v712
        %2115 = vmatprep.subr.bf16.mxu0 0
        %2116 = vmatpush1.bf16.msra.mxu0 %v713
        %2117 = vmatprep.subr.bf16.mxu0 0
        %2118 = vmatpush1.bf16.msra.mxu0 %v714
        %2119 = vmatprep.subr.bf16.mxu0 0
        %2120 = vmatpush1.bf16.msra.mxu0 %v715
        %2121 = vmatprep.subr.bf16.mxu0 0
        %2122 = vmatpush1.bf16.msra.mxu0 %v716
        %2123 = vmatprep.subr.bf16.mxu0 0
        %2124 = vmatpush1.bf16.msra.mxu0 %v717
        %2125 = vmatprep.subr.bf16.mxu0 0
        %2126 = vmatpush1.bf16.msra.mxu0 %v718
        %2127 = vmatprep.subr.bf16.mxu0 0
        %2128 = vmatpush1.bf16.msra.mxu0 0
        %2129 = vmatprep.subr.bf16.mxu0 0
        %2130 = vmatpush1.bf16.msra.mxu0 0
        %2131 = vmatprep.subr.bf16.mxu0 0
        %2132 = vmatpush1.bf16.msra.mxu0 0
        %2133 = vmatprep.subr.bf16.mxu0 0
        %2134 = vmatpush1.bf16.msra.mxu0 0
        %2135 = vmatprep.subr.bf16.mxu0 0
        %2136 = vmatpush1.bf16.msra.mxu0 0
        %2137 = vmatprep.subr.bf16.mxu0 0
        %2138 = vmatpush1.bf16.msra.mxu0 0
        %2139 = vmatprep.subr.bf16.mxu0 0
        %2140 = vmatpush1.bf16.msra.mxu0 0
        %2141 = vmatprep.subr.bf16.mxu0 0
        %2142 = vmatpush1.bf16.msra.mxu0 0
        %2143 = vmatprep.mubr.bf16.mxu0 0
        %2144 = vmatmul.mubr.bf16.gmra.mrb[0].mxu0 %v2110
        %v2145 = vpop.f32.mrb[0].mxu0
        %v2146 = vadd.f32 0.0, %v2145
        %v2147 = vpop.f32.mrb[0].mxu0
        %v2148 = vpop.f32.mrb[0].mxu0
        %v2149 = vadd.f32 0.0, %v2148
        %v2150 = vpop.f32.mrb[0].mxu0
        %2151 = vdwg.mxu0
        %s2152 = scalar_lea.vmem %s5, 48
        %v2153 = vld [vmem:[%s2152] sm:$0xff]
        %v2154 = vld [vmem:[%s2152 + $0x8] sm:$0xff]
        %v2155 = vmul.f32 %v2146, %v2153
        %v2156 = vmul.f32 %v2149, %v2154
        %v2157 = vpack.c.bf16 %v2156, %v2155
        %s2158 = scalar_lea.vmem %s4, 24
        %v2159 = vld [vmem:[%s2158] sm:$0xf]
        %v2160 = vld [vmem:[%s2158 + $0x4] sm:$0xf]
        %v2163 = vunpack.c.l.b16 %v2159
        %v2164 = vunpack.c.l.b16 %v2160
        %v2165 = vpack.c.b16 %v2164, %v2163
        %v2167 = vsel %vm1192, %v2165, 0
        %2169 = vmatprep.subr.bf16.mxu0 0
        %2170 = vmatpush1.bf16.msra.mxu0 %v2157
        %2171 = vmatprep.subr.bf16.mxu0 0
        %2172 = vmatpush1.bf16.msra.mxu0 0
        %2173 = vmatprep.subr.bf16.mxu0 0
        %2174 = vmatpush1.bf16.msra.mxu0 0
        %2175 = vmatprep.subr.bf16.mxu0 0
        %2176 = vmatpush1.bf16.msra.mxu0 0
        %2177 = vmatprep.subr.bf16.mxu0 0
        %2178 = vmatpush1.bf16.msra.mxu0 0
        %2179 = vmatprep.subr.bf16.mxu0 0
        %2180 = vmatpush1.bf16.msra.mxu0 0
        %2181 = vmatprep.subr.bf16.mxu0 0
        %2182 = vmatpush1.bf16.msra.mxu0 0
        %2183 = vmatprep.subr.bf16.mxu0 0
        %2184 = vmatpush1.bf16.msra.mxu0 0
        %2185 = vmatprep.subr.bf16.mxu0 0
        %2186 = vmatpush1.bf16.msra.mxu0 0
        %2187 = vmatprep.subr.bf16.mxu0 0
        %2188 = vmatpush1.bf16.msra.mxu0 0
        %2189 = vmatprep.subr.bf16.mxu0 0
        %2190 = vmatpush1.bf16.msra.mxu0 0
        %2191 = vmatprep.subr.bf16.mxu0 0
        %2192 = vmatpush1.bf16.msra.mxu0 0
        %2193 = vmatprep.subr.bf16.mxu0 0
        %2194 = vmatpush1.bf16.msra.mxu0 0
        %2195 = vmatprep.subr.bf16.mxu0 0
        %2196 = vmatpush1.bf16.msra.mxu0 0
        %2197 = vmatprep.subr.bf16.mxu0 0
        %2198 = vmatpush1.bf16.msra.mxu0 0
        %2199 = vmatprep.subr.bf16.mxu0 0
        %2200 = vmatpush1.bf16.msra.mxu0 0
        %2201 = vmatprep.mubr.bf16.mxu0 0
        %2202 = vmatmul.mubr.bf16.gmra.mrb[0].mxu0 %v2167
        %v2203 = vpop.f32.mrb[0].mxu0
        %v2204 = vadd.f32 0.0, %v2203
        %v2205 = vpop.f32.mrb[0].mxu0
        %v2206 = vpop.f32.mrb[0].mxu0
        %v2207 = vadd.f32 0.0, %v2206
        %v2208 = vpop.f32.mrb[0].mxu0
        %2209 = vdwg.mxu0
        %v2210 = vadd.f32 %v1747, %v2204
        %v2211 = vadd.f32 %v1748, %v2207
        %s2212 = sld [smem:[#allocation2]]
        %v2213 = vstv %s2212
        %v2214 = vadd.f32 %v2210, %v2213
        %v2215 = vadd.f32 %v2211, %v2213
        %v2216 = vand.u32 2147483647, %v2214
        %v2217 = vand.u32 2147483647, %v2215
        %v2218 = vsub.f32 0.0, %v2216
        %v2219 = vsub.f32 0.0, %v2217
        %v2220 = vmul.f32 %v2218, 1.442695
        %v2221 = vpow.pop %v2220
        %v2222 = vmul.f32 %v2219, 1.442695
        %v2223 = vpow.pop %v2222
        %v2224 = vadd.f32 %v2221, 1.0
        %v2225 = vadd.f32 %v2223, 1.0
        %v2226 = vrcp.pop %v2224
        %v2227 = vrcp.pop %v2225
        %vm2228 = vcmp.ge.f32.partialorder %v2214, 0.0
        %vm2229 = vcmp.ge.f32.partialorder %v2215, 0.0
        %v2230 = vsub.f32 1.0, %v2226
        %v2231 = vsub.f32 1.0, %v2227
        %v2232 = vsel %vm2228, %v2226, %v2230
        %v2233 = vsel %vm2229, %v2227, %v2231
        %2234 = vst.msk [vmem:[%s272] sm:$0xff] %vm1192, %v2232
        %2235 = vst.msk [vmem:[%s272 + $0x8] sm:$0xff] %vm1192, %v2233
        %s2236 = sand.u32 %s182, 1
        %s2237 = scalar_lea.sflag [#allocation4], %s2236
        %s2238 = sand.u32 %s182, 1
        %s2239 = smul.addr %s2238, 16
        %s2240 = scalar_lea.vmem [#allocation3], %s2239
        // Predicated region
        $region49: #{centernet_forward.9} parent=47 // pred_check
          %p2241 = pneg %p192
        $region50: #{centernet_forward.9} parent=47 // pred_check_branch
          %2243 = sbr.rel (%p2241) target = $region52
        $region51: #{centernet_forward.9} parent=47 // pred_region
          %s2245 = ssub.s32 256, 256
          %2246 = vsyncadd %s2237, %s2245
          %s2247 = smul.addr %s22, 2
          %s2248 = smul.addr %s2247, 128
          %s2249 = scalar_lea.hbm %s7, %s2248
          %s2250 = sshll.u32 %s2240, 4
          %s2251 = int_to_ptr.vmem [resolvable:$true] %s2250
          %2256 = dma.vmem_to_hbm [thread:$0]  %s2251, 256, %s2249, %s2237, 128, 128, 8
        $region52: #{centernet_forward.9} parent=47 // pred_fallthru
          _
      $region48: #{centernet_forward.9} parent=5 // pred_fallthru
        _
      %p2257 = scmp.le.s32.totalorder 2, %s17
      // Predicated region
      $region53: #{centernet_forward.9} parent=5 // pred_check
        %p2258 = pneg %p2257
      $region54: #{centernet_forward.9} parent=5 // pred_check_branch
        %2260 = sbr.rel (%p2258) target = $region56
      $region55: #{centernet_forward.9} parent=5 // pred_region
        %s2261 = ssub.s32 %s17, 2
        // Predicated region
        $region57: #{centernet_forward.9} parent=55 // pred_check
          %p2262 = pneg %p198
        $region58: #{centernet_forward.9} parent=55 // pred_check_branch
          %2264 = sbr.rel (%p2262) target = $region60
        $region59: #{centernet_forward.9} parent=55 // pred_region
          %s2265 = sand.u32 %s183, 1
          %s2266 = scalar_lea.sflag [#allocation4], %s2265
          %s2267 = sand.u32 %s183, 1
          %s2268 = smul.addr %s2267, 16
          %s2269 = scalar_lea.vmem [#allocation3], %s2268
          %2270 = dma.done %s2266, 256
        $region60: #{centernet_forward.9} parent=55 // pred_fallthru
          _
      $region56: #{centernet_forward.9} parent=5 // pred_fallthru
        _
    $region6: #{centernet_forward.9} parent=1 // loop_footer
      %s21 = sadd.s32 1, %s17
    $region7: #{centernet_forward.9} parent=1 // loop_footer_branch
      %16 = sbr.rel target = $region3
    $region8: #{centernet_forward.9} parent=1 // loop_exit
      _
    %2271 = vsyncpa [#allocation4], 1
    %s2272 = scalar_lea.sflag [#allocation4], 1
    %2273 = vsyncpa %s2272, 1

</llo_original>
